<compile_context>
chip_gen: v5e
topology: v5e:2x2
jax: 0.10.0
libtpu: 0.0.40
codegen_flags: <defaults>
</compile_context>

<pallas_src>
import functools

import jax
import jax.numpy as jnp
from jax import lax
from jax.experimental import pallas as pl
from jax.experimental.pallas import tpu as pltpu


def _round_up(a: int, b: int) -> int:
    return (a + b - 1) // b * b


def _round_down(a: int, b: int) -> int:
    return (a // b) * b


def _vmem_capacity_bytes() -> int:
    """Per-core VMEM capacity; conservative v7x fallback if the query fails."""
    try:
        return int(pltpu.get_tpu_info().vmem_capacity_bytes)
    except Exception:
        return 64 * 1024 * 1024


def _auto_tiles(n_rows, d, h, x_itemsize, z_itemsize, decode, vmem_cap):
    """Pick (tm, strip, vmem_limit_bytes) from a per-generation VMEM budget."""
    tile_min = 16 if z_itemsize < 4 else 8      # bf16 blocks want (16,128)-aligned sublanes
    # Single-buffered resident operands (weights + bias stay in VMEM for the whole grid).
    resident = 2 * d * h + 4 * h + (2 * h * d if decode else 0)
    # Per-row VMEM: pipelined x in + x_recon out (double-buffered), z / z_bar output
    # tiles (double-buffered each) and the single-buffered f32 z scratch.
    per_row = (2 * x_itemsize * d) * 2 + (2 * z_itemsize * h) * 2 + 4 * h
    headroom = 16 * 1024 * 1024                 # Mosaic internal scratch / spill slack
    budget = max(vmem_cap - headroom - resident, per_row * tile_min)
    tm = min(budget // per_row, 256)
    # v7x megacore: keep at least 2 row tiles for small N so both TensorCores get
    # work, and avoid padding tiny batches up to 256 rows.
    tm = min(tm, _round_up(pl.cdiv(n_rows, 2), tile_min))
    tm = max(_round_down(tm, tile_min), tile_min)
    # Strip size for the top-k passes: smaller strips keep the per-pass working set
    # closer to the vreg file at large H; bf16 outputs keep strip 16 so the strided
    # z_bar stores stay on native (16,128) bf16 tile boundaries.
    strip = 8 if (z_itemsize == 4 and h >= 8192) else 16
    strip = min(strip, tm)
    if tm % strip:
        strip = tile_min
    vmem_limit = min(max(resident + tm * per_row + headroom, 32 * 1024 * 1024),
                     max(vmem_cap - headroom, 32 * 1024 * 1024))
    return int(tm), int(strip), int(vmem_limit)


def _topk_mask(z_scr, zb_ref, *, k, strip):
    """Per-row exact top-k mask.

    The k max-removal passes run in row strips so the working set stays small;
    the threshold search always reads the f32 scratch copy, so the mask is
    identical regardless of the z / z_bar output dtype.
    """
    tm = z_scr.shape[0]
    n_strips = tm // strip
    neg_inf = jnp.float32(-jnp.inf)

    @pl.loop(0, n_strips)
    def _(s):
        r0 = pl.multiple_of(s * strip, strip)
        zs = z_scr[pl.ds(r0, strip), :]                        # (strip, H) f32

        def body(_, carry):
            work, _ = carry
            m = jnp.max(work, axis=1, keepdims=True)           # row-wise max (XLU)
            return jnp.where(work >= m, neg_inf, work), m      # knock out current max

        init = (zs, jnp.full((strip, 1), jnp.inf, dtype=jnp.float32))
        # k is a small static constant -> fully unroll so the XLU max of pass i+1
        # co-issues with the VPU selects of pass i.
        _, kth = lax.fori_loop(0, k, body, init, unroll=True)
        # TODO(synk): exact duplicates above the k-th value are all removed in one
        # pass, so the mask can keep >k entries (torch.topk keeps exactly k);
        # measure-zero for continuous activations.
        # TODO(synk): for H >~ 16k replace the O(k) exact passes with a
        # bisection-on-threshold + cross-lane count (VALU is the binding slot there).
        zb_ref[pl.ds(r0, strip), :] = jnp.where(
            zs >= kth, zs, jnp.float32(0.0)).astype(zb_ref.dtype)


def _sae_kernel(*refs, k, strip, decode):
    if decode:
        x_ref, we_ref, be_ref, wd_ref, xr_ref, z_ref, zb_ref, zf_scr = refs
    else:
        x_ref, we_ref, be_ref, xr_ref, z_ref, zb_ref, zf_scr = refs

    x = x_ref[...]                                             # (tm, D)

    # ---- encoder matmul (MXU, bf16 operands, f32 accumulation) ----
    z = jnp.dot(x.astype(jnp.bfloat16), we_ref[...],
                preferred_element_type=jnp.float32) + be_ref[...]
    zf_scr[...] = z                      # f32 copy for the exact threshold search
    z_ref[...] = z.astype(z_ref.dtype)   # streamed back to HBM (bf16 by default)

    # ---- per-row top-k masking ----
    _topk_mask(zf_scr, zb_ref, k=k, strip=strip)

    if decode:
        # Faithful decoder matmul + residual add (forward value still equals x up
        # to fp rounding; only useful if the pre-residual x_rec is needed, e.g. VJP).
        x_rec = jnp.dot(zb_ref[...].astype(jnp.bfloat16), wd_ref[...],
                        preferred_element_type=jnp.float32)
        x_rec = x_rec + (x.astype(jnp.float32) - x_rec)   # add_residual (.detach() fwd no-op)
        xr_ref[...] = x_rec.astype(xr_ref.dtype)
    else:
        # Default fast path: x_rec + (x - x_rec) == x, so the decoder matmul and
        # its resident (H, D) weight contribute nothing to the forward outputs.
        xr_ref[...] = x.astype(xr_ref.dtype)


def prepare_topk_sae_params(w_enc_v, g_enc, b_enc, w_dec_v=None):
    """Resolve weight_norm, transpose and cast ONCE per weight update (hoisted
    out of the per-call path: these are full HBM passes over the weights)."""
    h = w_enc_v.shape[0]
    # encoder Linear weight (H, D), weight_norm dim=0 -> per-output-row norm, scale g.
    w_enc = (g_enc / jnp.linalg.norm(w_enc_v, axis=1, keepdims=True)) * w_enc_v   # (H, D)
    we_t = w_enc.T.astype(jnp.bfloat16)             # (D, H) row-major bf16 MXU operand
    be = b_enc.reshape(1, h).astype(jnp.float32)    # (1, H)
    wd_t = None
    if w_dec_v is not None:
        # decoder Linear weight (D, H), weight_norm dim=1, g fixed to 1 -> unit columns.
        w_dec = w_dec_v / jnp.linalg.norm(w_dec_v, axis=0, keepdims=True)          # (D, H)
        wd_t = w_dec.T.astype(jnp.bfloat16)          # (H, D)
    return we_t, be, wd_t


def topk_sae_forward(x, params, k, *, run_decoder=False, z_dtype=jnp.bfloat16,
                     tm=None, strip=None, vmem_limit_bytes=None):
    """TopKSAE forward. Returns (x_recon, z, z_bar) with the PyTorch module's shapes.

    run_decoder=False (default) skips the decoder matmul: with add_residual the
    forward output equals x, so the decoder contributes nothing to the returned
    values.  z / z_bar default to bf16 (halves the dominant (N, H) HBM writeback);
    pass z_dtype=jnp.float32 for f32 outputs matching the torch dtypes.
    """
    we_t, be, wd_t = params
    orig_shape = x.shape
    x2d = x if x.ndim == 2 else x.reshape(-1, x.shape[-1])
    N, D = x2d.shape
    Dw, H = we_t.shape
    assert D == Dw, (D, Dw)
    assert 0 < k <= H
    if run_decoder and wd_t is None:
        raise ValueError("run_decoder=True requires the decoder weight in params")

    z_itemsize = jnp.dtype(z_dtype).itemsize
    auto_tm, auto_strip, auto_vmem = _auto_tiles(
        N, D, H, jnp.dtype(x2d.dtype).itemsize, z_itemsize, run_decoder,
        _vmem_capacity_bytes())
    tm = auto_tm if tm is None else int(tm)
    strip = auto_strip if strip is None else int(strip)
    vmem_limit_bytes = auto_vmem if vmem_limit_bytes is None else int(vmem_limit_bytes)
    assert tm % strip == 0 and strip % 8 == 0 and tm % 8 == 0, (tm, strip)

    # Pad rows so the grid divides evenly; padded rows run a bias-only encoder +
    # top-k and are sliced off afterwards.
    n_pad = _round_up(N, tm)
    if n_pad != N:
        x2d = jnp.pad(x2d, ((0, n_pad - N), (0, 0)))
    grid = (n_pad // tm,)

    # Weights / bias are whole-array VMEM-resident operands: one copy for the whole
    # grid instead of per-step pipelined (double-buffered) blocks.
    # TODO(synk): for production widths (H ~ 30k) the resident bf16 encoder weight
    # alone is ~2*D*H bytes; on v7x (64 MiB/TC) this needs an H-tiled grid that
    # streams we_t in (D, tH) chunks with a streaming top-k threshold.
    resident = pl.BlockSpec(memory_space=pltpu.MemorySpace.VMEM)
    in_specs = [pl.BlockSpec((tm, D), lambda i: (i, 0)), resident, resident]
    inputs = [x2d, we_t, be]
    if run_decoder:
        in_specs.append(resident)
        inputs.append(wd_t)

    kernel = functools.partial(_sae_kernel, k=int(k), strip=strip, decode=run_decoder)
    xr2d, z2d, zb2d = pl.pallas_call(
        kernel,
        out_shape=(
            jax.ShapeDtypeStruct((n_pad, D), x.dtype),
            jax.ShapeDtypeStruct((n_pad, H), z_dtype),
            jax.ShapeDtypeStruct((n_pad, H), z_dtype),
        ),
        grid_spec=pltpu.PrefetchScalarGridSpec(
            num_scalar_prefetch=0,
            grid=grid,
            in_specs=in_specs,
            out_specs=(
                pl.BlockSpec((tm, D), lambda i: (i, 0)),   # x_recon
                pl.BlockSpec((tm, H), lambda i: (i, 0)),   # z
                pl.BlockSpec((tm, H), lambda i: (i, 0)),   # z_bar
            ),
            scratch_shapes=[pltpu.VMEM((tm, H), jnp.float32)],  # f32 z for exact top-k
        ),
        compiler_params=pltpu.CompilerParams(
            dimension_semantics=("parallel",),
            vmem_limit_bytes=vmem_limit_bytes,
        ),
    )(*inputs)

    xr2d, z2d, zb2d = xr2d[:N], z2d[:N], zb2d[:N]
    if x.ndim == 2:
        return xr2d, z2d, zb2d
    B, T = orig_shape[0], orig_shape[1]
    # PyTorch returns z un-reshaped (B*T, H); x_recon and z_bar reshaped back.
    return xr2d.reshape(B, T, D), z2d, zb2d.reshape(B, T, H)


if __name__ == "__main__":
    # Small shapes consistent with the module (input_dim -> D, hidden_dim -> H).
    B, T, D, H, K = 2, 8, 256, 1024, 32

    key = jax.random.PRNGKey(0)
    k1, k2, k3, k4 = jax.random.split(key, 4)
    x = jax.random.normal(k1, (B, T, D), dtype=jnp.float32)
    w_enc_v = jax.random.normal(k2, (H, D), dtype=jnp.float32) * 0.02   # Linear(D->H).weight_v
    b_enc   = jax.random.normal(k3, (H,),   dtype=jnp.float32) * 0.01   # Linear(D->H).bias
    w_dec_v = jax.random.normal(k4, (D, H), dtype=jnp.float32) * 0.02   # Linear(H->D).weight_v
    # torch weight_norm initializes g to the per-row norm of v (so W_eff == v at init).
    g_enc = jnp.linalg.norm(w_enc_v, axis=1, keepdims=True)             # (H, 1)

    # Weight prep hoisted out of the forward path (reruns only on weight updates).
    params = jax.block_until_ready(
        prepare_topk_sae_params(w_enc_v, g_enc, b_enc, w_dec_v))

    # Default fast path: decoder matmul skipped (add_residual makes it dead work),
    # z / z_bar streamed out as bf16.
    x_recon, z, z_bar = topk_sae_forward(x, params, K)
    jax.block_until_ready((x_recon, z, z_bar))

    # Faithful path: decoder matmul + residual add, f32 activations.
    x_recon_f, z_f, z_bar_f = topk_sae_forward(
        x, params, K, run_decoder=True, z_dtype=jnp.float32)
    jax.block_until_ready((x_recon_f, z_f, z_bar_f))

    # light sanity checks
    assert x_recon.shape == (B, T, D) and x_recon.dtype == x.dtype
    assert z.shape == (B * T, H)
    assert z_bar.shape == (B, T, H)
    nnz = jnp.sum(z_bar.reshape(B * T, H) != 0.0, axis=1)
    assert bool(jnp.all(nnz == K)), nnz
    nnz_f = jnp.sum(z_bar_f.reshape(B * T, H) != 0.0, axis=1)
    assert bool(jnp.all(nnz_f == K)), nnz_f
    # add_residual: x_recon equals x (exact on the fast path, fp rounding on the full path)
    assert bool(jnp.allclose(x_recon, x))
    assert bool(jnp.all(jnp.abs(x_recon_f - x) < 1e-4))
    # bf16 outputs agree with the f32 path to bf16 precision, identical sparsity pattern
    assert bool(jnp.allclose(z_f, z.astype(jnp.float32), rtol=2e-2, atol=2e-2))
    assert bool(jnp.array_equal(z_bar_f != 0.0, z_bar != 0.0))
    assert bool(jnp.all(jnp.isfinite(x_recon_f)))

    print("KERNEL_OK")
</pallas_src>

<mosaic_0001>
module attributes {stable_mosaic.version = 11 : i64} {
  func.func @_sae_kernel(%arg0: i32, %arg1: memref<16x256xf32, #tpu.memory_space<vmem>>, %arg2: memref<256x1024xbf16, #tpu.memory_space<vmem>>, %arg3: memref<1x1024xf32, #tpu.memory_space<vmem>>, %arg4: memref<16x256xf32, #tpu.memory_space<vmem>>, %arg5: memref<16x1024xbf16, #tpu.memory_space<vmem>>, %arg6: memref<16x1024xbf16, #tpu.memory_space<vmem>>, %arg7: memref<16x1024xf32, #tpu.memory_space<vmem>>) attributes {dimension_semantics = [#tpu.dimension_semantics<parallel>], iteration_bounds = array<i64: 1>, scalar_prefetch = 0 : i64, scratch_operands = 1 : i64, tpu.core_type = #tpu.core_type<tc>, window_params = [{transform_indices = @transform_0, window_bounds = array<i64: 16, 256>}, {pipeline_mode = #tpu.pipeline_mode<synchronous>, transform_indices = @transform_1, window_bounds = array<i64: 256, 1024>}, {pipeline_mode = #tpu.pipeline_mode<synchronous>, transform_indices = @transform_2, window_bounds = array<i64: 1, 1024>}, {transform_indices = @transform_3, window_bounds = array<i64: 16, 256>}, {transform_indices = @transform_4, window_bounds = array<i64: 16, 1024>}, {transform_indices = @transform_5, window_bounds = array<i64: 16, 1024>}]} {
    %c0 = arith.constant 0 : index
    %c0_0 = arith.constant 0 : index
    %0 = vector.load %arg1[%c0, %c0_0] : memref<16x256xf32, #tpu.memory_space<vmem>>, vector<16x256xf32>
    %1 = arith.truncf %0 : vector<16x256xf32> to vector<16x256xbf16>
    %c0_1 = arith.constant 0 : index
    %c0_2 = arith.constant 0 : index
    %2 = vector.load %arg2[%c0_1, %c0_2] : memref<256x1024xbf16, #tpu.memory_space<vmem>>, vector<256x1024xbf16>
    %cst = arith.constant dense<0.000000e+00> : vector<16x1024xf32>
    %3 = tpu.matmul %1, %2, %cst {dimension_numbers = #tpu.dot_dimension_numbers<[1], [0], [0], [1], [0, 0, 1, 1], [], []>} : vector<16x256xbf16>, vector<256x1024xbf16>, vector<16x1024xf32> -> vector<16x1024xf32>
    %c0_3 = arith.constant 0 : index
    %c0_4 = arith.constant 0 : index
    %4 = vector.load %arg3[%c0_3, %c0_4] : memref<1x1024xf32, #tpu.memory_space<vmem>>, vector<1x1024xf32>
    %5 = vector.broadcast %4 : vector<1x1024xf32> to vector<16x1024xf32>
    %6 = arith.addf %3, %5 : vector<16x1024xf32>
    %c0_5 = arith.constant 0 : index
    %c0_6 = arith.constant 0 : index
    %7 = vector.load %arg7[%c0_5, %c0_6] : memref<16x1024xf32, #tpu.memory_space<vmem>>, vector<16x1024xf32>
    tpu.vector_store %arg7[%c0_5, %c0_6], %6 {strides = array<i32>} : memref<16x1024xf32, #tpu.memory_space<vmem>>, vector<16x1024xf32>,
    %8 = arith.truncf %6 : vector<16x1024xf32> to vector<16x1024xbf16>
    %c0_7 = arith.constant 0 : index
    %c0_8 = arith.constant 0 : index
    %9 = vector.load %arg5[%c0_7, %c0_8] : memref<16x1024xbf16, #tpu.memory_space<vmem>>, vector<16x1024xbf16>
    tpu.vector_store %arg5[%c0_7, %c0_8], %8 {strides = array<i32>} : memref<16x1024xbf16, #tpu.memory_space<vmem>>, vector<16x1024xbf16>,
    %cst_9 = arith.constant 0xFF800000 : f32
    %c0_i32 = arith.constant 0 : i32
    %c1_i32 = arith.constant 1 : i32
    %10 = arith.muli %c0_i32, %c1_i32 : i32
    %c0_i32_10 = arith.constant 0 : i32
    %11 = arith.addi %c0_i32_10, %10 : i32
    %c16_i32 = arith.constant 16 : i32
    %12 = arith.muli %11, %c16_i32 : i32
    %13 = tpu.assume_multiple %12, 16 : i32
    %14 = arith.index_cast %13 : i32 to index
    %c0_11 = arith.constant 0 : index
    %15 = vector.load %arg7[%14, %c0_11] : memref<16x1024xf32, #tpu.memory_space<vmem>>, vector<16x1024xf32>
    %cst_12 = arith.constant 0x7F800000 : f32
    %16 = vector.broadcast %cst_12 : f32 to vector<16x1xf32>
    %c0_i32_13 = arith.constant 0 : i32
    %cst_14 = arith.constant dense<0xFF800000> : vector<16xf32>
    %17 = vector.multi_reduction <maximumf>, %15, %cst_14 [1] : vector<16x1024xf32> to vector<16xf32>
    %18 = vector.shape_cast %17 : vector<16xf32> to vector<16x1xf32>
    %19 = vector.broadcast %18 : vector<16x1xf32> to vector<16x1024xf32>
    %20 = arith.cmpf oge, %15, %19 : vector<16x1024xf32>
    %21 = vector.broadcast %cst_9 : f32 to vector<16x1024xf32>
    %22 = arith.select %20, %21, %15 : vector<16x1024xi1>, vector<16x1024xf32>
    %c1_i32_15 = arith.constant 1 : i32
    %cst_16 = arith.constant dense<0xFF800000> : vector<16xf32>
    %23 = vector.multi_reduction <maximumf>, %22, %cst_16 [1] : vector<16x1024xf32> to vector<16xf32>
    %24 = vector.shape_cast %23 : vector<16xf32> to vector<16x1xf32>
    %25 = vector.broadcast %24 : vector<16x1xf32> to vector<16x1024xf32>
    %26 = arith.cmpf oge, %22, %25 : vector<16x1024xf32>
    %27 = vector.broadcast %cst_9 : f32 to vector<16x1024xf32>
    %28 = arith.select %26, %27, %22 : vector<16x1024xi1>, vector<16x1024xf32>
    %c2_i32 = arith.constant 2 : i32
    %cst_17 = arith.constant dense<0xFF800000> : vector<16xf32>
    %29 = vector.multi_reduction <maximumf>, %28, %cst_17 [1] : vector<16x1024xf32> to vector<16xf32>
    %30 = vector.shape_cast %29 : vector<16xf32> to vector<16x1xf32>
    %31 = vector.broadcast %30 : vector<16x1xf32> to vector<16x1024xf32>
    %32 = arith.cmpf oge, %28, %31 : vector<16x1024xf32>
    %33 = vector.broadcast %cst_9 : f32 to vector<16x1024xf32>
    %34 = arith.select %32, %33, %28 : vector<16x1024xi1>, vector<16x1024xf32>
    %c3_i32 = arith.constant 3 : i32
    %cst_18 = arith.constant dense<0xFF800000> : vector<16xf32>
    %35 = vector.multi_reduction <maximumf>, %34, %cst_18 [1] : vector<16x1024xf32> to vector<16xf32>
    %36 = vector.shape_cast %35 : vector<16xf32> to vector<16x1xf32>
    %37 = vector.broadcast %36 : vector<16x1xf32> to vector<16x1024xf32>
    %38 = arith.cmpf oge, %34, %37 : vector<16x1024xf32>
    %39 = vector.broadcast %cst_9 : f32 to vector<16x1024xf32>
    %40 = arith.select %38, %39, %34 : vector<16x1024xi1>, vector<16x1024xf32>
    %c4_i32 = arith.constant 4 : i32
    %cst_19 = arith.constant dense<0xFF800000> : vector<16xf32>
    %41 = vector.multi_reduction <maximumf>, %40, %cst_19 [1] : vector<16x1024xf32> to vector<16xf32>
    %42 = vector.shape_cast %41 : vector<16xf32> to vector<16x1xf32>
    %43 = vector.broadcast %42 : vector<16x1xf32> to vector<16x1024xf32>
    %44 = arith.cmpf oge, %40, %43 : vector<16x1024xf32>
    %45 = vector.broadcast %cst_9 : f32 to vector<16x1024xf32>
    %46 = arith.select %44, %45, %40 : vector<16x1024xi1>, vector<16x1024xf32>
    %c5_i32 = arith.constant 5 : i32
    %cst_20 = arith.constant dense<0xFF800000> : vector<16xf32>
    %47 = vector.multi_reduction <maximumf>, %46, %cst_20 [1] : vector<16x1024xf32> to vector<16xf32>
    %48 = vector.shape_cast %47 : vector<16xf32> to vector<16x1xf32>
    %49 = vector.broadcast %48 : vector<16x1xf32> to vector<16x1024xf32>
    %50 = arith.cmpf oge, %46, %49 : vector<16x1024xf32>
    %51 = vector.broadcast %cst_9 : f32 to vector<16x1024xf32>
    %52 = arith.select %50, %51, %46 : vector<16x1024xi1>, vector<16x1024xf32>
    %c6_i32 = arith.constant 6 : i32
    %cst_21 = arith.constant dense<0xFF800000> : vector<16xf32>
    %53 = vector.multi_reduction <maximumf>, %52, %cst_21 [1] : vector<16x1024xf32> to vector<16xf32>
    %54 = vector.shape_cast %53 : vector<16xf32> to vector<16x1xf32>
    %55 = vector.broadcast %54 : vector<16x1xf32> to vector<16x1024xf32>
    %56 = arith.cmpf oge, %52, %55 : vector<16x1024xf32>
    %57 = vector.broadcast %cst_9 : f32 to vector<16x1024xf32>
    %58 = arith.select %56, %57, %52 : vector<16x1024xi1>, vector<16x1024xf32>
    %c7_i32 = arith.constant 7 : i32
    %cst_22 = arith.constant dense<0xFF800000> : vector<16xf32>
    %59 = vector.multi_reduction <maximumf>, %58, %cst_22 [1] : vector<16x1024xf32> to vector<16xf32>
    %60 = vector.shape_cast %59 : vector<16xf32> to vector<16x1xf32>
    %61 = vector.broadcast %60 : vector<16x1xf32> to vector<16x1024xf32>
    %62 = arith.cmpf oge, %58, %61 : vector<16x1024xf32>
    %63 = vector.broadcast %cst_9 : f32 to vector<16x1024xf32>
    %64 = arith.select %62, %63, %58 : vector<16x1024xi1>, vector<16x1024xf32>
    %c8_i32 = arith.constant 8 : i32
    %cst_23 = arith.constant dense<0xFF800000> : vector<16xf32>
    %65 = vector.multi_reduction <maximumf>, %64, %cst_23 [1] : vector<16x1024xf32> to vector<16xf32>
    %66 = vector.shape_cast %65 : vector<16xf32> to vector<16x1xf32>
    %67 = vector.broadcast %66 : vector<16x1xf32> to vector<16x1024xf32>
    %68 = arith.cmpf oge, %64, %67 : vector<16x1024xf32>
    %69 = vector.broadcast %cst_9 : f32 to vector<16x1024xf32>
    %70 = arith.select %68, %69, %64 : vector<16x1024xi1>, vector<16x1024xf32>
    %c9_i32 = arith.constant 9 : i32
    %cst_24 = arith.constant dense<0xFF800000> : vector<16xf32>
    %71 = vector.multi_reduction <maximumf>, %70, %cst_24 [1] : vector<16x1024xf32> to vector<16xf32>
    %72 = vector.shape_cast %71 : vector<16xf32> to vector<16x1xf32>
    %73 = vector.broadcast %72 : vector<16x1xf32> to vector<16x1024xf32>
    %74 = arith.cmpf oge, %70, %73 : vector<16x1024xf32>
    %75 = vector.broadcast %cst_9 : f32 to vector<16x1024xf32>
    %76 = arith.select %74, %75, %70 : vector<16x1024xi1>, vector<16x1024xf32>
    %c10_i32 = arith.constant 10 : i32
    %cst_25 = arith.constant dense<0xFF800000> : vector<16xf32>
    %77 = vector.multi_reduction <maximumf>, %76, %cst_25 [1] : vector<16x1024xf32> to vector<16xf32>
    %78 = vector.shape_cast %77 : vector<16xf32> to vector<16x1xf32>
    %79 = vector.broadcast %78 : vector<16x1xf32> to vector<16x1024xf32>
    %80 = arith.cmpf oge, %76, %79 : vector<16x1024xf32>
    %81 = vector.broadcast %cst_9 : f32 to vector<16x1024xf32>
    %82 = arith.select %80, %81, %76 : vector<16x1024xi1>, vector<16x1024xf32>
    %c11_i32 = arith.constant 11 : i32
    %cst_26 = arith.constant dense<0xFF800000> : vector<16xf32>
    %83 = vector.multi_reduction <maximumf>, %82, %cst_26 [1] : vector<16x1024xf32> to vector<16xf32>
    %84 = vector.shape_cast %83 : vector<16xf32> to vector<16x1xf32>
    %85 = vector.broadcast %84 : vector<16x1xf32> to vector<16x1024xf32>
    %86 = arith.cmpf oge, %82, %85 : vector<16x1024xf32>
    %87 = vector.broadcast %cst_9 : f32 to vector<16x1024xf32>
    %88 = arith.select %86, %87, %82 : vector<16x1024xi1>, vector<16x1024xf32>
    %c12_i32 = arith.constant 12 : i32
    %cst_27 = arith.constant dense<0xFF800000> : vector<16xf32>
    %89 = vector.multi_reduction <maximumf>, %88, %cst_27 [1] : vector<16x1024xf32> to vector<16xf32>
    %90 = vector.shape_cast %89 : vector<16xf32> to vector<16x1xf32>
    %91 = vector.broadcast %90 : vector<16x1xf32> to vector<16x1024xf32>
    %92 = arith.cmpf oge, %88, %91 : vector<16x1024xf32>
    %93 = vector.broadcast %cst_9 : f32 to vector<16x1024xf32>
    %94 = arith.select %92, %93, %88 : vector<16x1024xi1>, vector<16x1024xf32>
    %c13_i32 = arith.constant 13 : i32
    %cst_28 = arith.constant dense<0xFF800000> : vector<16xf32>
    %95 = vector.multi_reduction <maximumf>, %94, %cst_28 [1] : vector<16x1024xf32> to vector<16xf32>
    %96 = vector.shape_cast %95 : vector<16xf32> to vector<16x1xf32>
    %97 = vector.broadcast %96 : vector<16x1xf32> to vector<16x1024xf32>
    %98 = arith.cmpf oge, %94, %97 : vector<16x1024xf32>
    %99 = vector.broadcast %cst_9 : f32 to vector<16x1024xf32>
    %100 = arith.select %98, %99, %94 : vector<16x1024xi1>, vector<16x1024xf32>
    %c14_i32 = arith.constant 14 : i32
    %cst_29 = arith.constant dense<0xFF800000> : vector<16xf32>
    %101 = vector.multi_reduction <maximumf>, %100, %cst_29 [1] : vector<16x1024xf32> to vector<16xf32>
    %102 = vector.shape_cast %101 : vector<16xf32> to vector<16x1xf32>
    %103 = vector.broadcast %102 : vector<16x1xf32> to vector<16x1024xf32>
    %104 = arith.cmpf oge, %100, %103 : vector<16x1024xf32>
    %105 = vector.broadcast %cst_9 : f32 to vector<16x1024xf32>
    %106 = arith.select %104, %105, %100 : vector<16x1024xi1>, vector<16x1024xf32>
    %c15_i32 = arith.constant 15 : i32
    %cst_30 = arith.constant dense<0xFF800000> : vector<16xf32>
    %107 = vector.multi_reduction <maximumf>, %106, %cst_30 [1] : vector<16x1024xf32> to vector<16xf32>
    %108 = vector.shape_cast %107 : vector<16xf32> to vector<16x1xf32>
    %109 = vector.broadcast %108 : vector<16x1xf32> to vector<16x1024xf32>
    %110 = arith.cmpf oge, %106, %109 : vector<16x1024xf32>
    %111 = vector.broadcast %cst_9 : f32 to vector<16x1024xf32>
    %112 = arith.select %110, %111, %106 : vector<16x1024xi1>, vector<16x1024xf32>
    %c16_i32_31 = arith.constant 16 : i32
    %cst_32 = arith.constant dense<0xFF800000> : vector<16xf32>
    %113 = vector.multi_reduction <maximumf>, %112, %cst_32 [1] : vector<16x1024xf32> to vector<16xf32>
    %114 = vector.shape_cast %113 : vector<16xf32> to vector<16x1xf32>
    %115 = vector.broadcast %114 : vector<16x1xf32> to vector<16x1024xf32>
    %116 = arith.cmpf oge, %112, %115 : vector<16x1024xf32>
    %117 = vector.broadcast %cst_9 : f32 to vector<16x1024xf32>
    %118 = arith.select %116, %117, %112 : vector<16x1024xi1>, vector<16x1024xf32>
    %c17_i32 = arith.constant 17 : i32
    %cst_33 = arith.constant dense<0xFF800000> : vector<16xf32>
    %119 = vector.multi_reduction <maximumf>, %118, %cst_33 [1] : vector<16x1024xf32> to vector<16xf32>
    %120 = vector.shape_cast %119 : vector<16xf32> to vector<16x1xf32>
    %121 = vector.broadcast %120 : vector<16x1xf32> to vector<16x1024xf32>
    %122 = arith.cmpf oge, %118, %121 : vector<16x1024xf32>
    %123 = vector.broadcast %cst_9 : f32 to vector<16x1024xf32>
    %124 = arith.select %122, %123, %118 : vector<16x1024xi1>, vector<16x1024xf32>
    %c18_i32 = arith.constant 18 : i32
    %cst_34 = arith.constant dense<0xFF800000> : vector<16xf32>
    %125 = vector.multi_reduction <maximumf>, %124, %cst_34 [1] : vector<16x1024xf32> to vector<16xf32>
    %126 = vector.shape_cast %125 : vector<16xf32> to vector<16x1xf32>
    %127 = vector.broadcast %126 : vector<16x1xf32> to vector<16x1024xf32>
    %128 = arith.cmpf oge, %124, %127 : vector<16x1024xf32>
    %129 = vector.broadcast %cst_9 : f32 to vector<16x1024xf32>
    %130 = arith.select %128, %129, %124 : vector<16x1024xi1>, vector<16x1024xf32>
    %c19_i32 = arith.constant 19 : i32
    %cst_35 = arith.constant dense<0xFF800000> : vector<16xf32>
    %131 = vector.multi_reduction <maximumf>, %130, %cst_35 [1] : vector<16x1024xf32> to vector<16xf32>
    %132 = vector.shape_cast %131 : vector<16xf32> to vector<16x1xf32>
    %133 = vector.broadcast %132 : vector<16x1xf32> to vector<16x1024xf32>
    %134 = arith.cmpf oge, %130, %133 : vector<16x1024xf32>
    %135 = vector.broadcast %cst_9 : f32 to vector<16x1024xf32>
    %136 = arith.select %134, %135, %130 : vector<16x1024xi1>, vector<16x1024xf32>
    %c20_i32 = arith.constant 20 : i32
    %cst_36 = arith.constant dense<0xFF800000> : vector<16xf32>
    %137 = vector.multi_reduction <maximumf>, %136, %cst_36 [1] : vector<16x1024xf32> to vector<16xf32>
    %138 = vector.shape_cast %137 : vector<16xf32> to vector<16x1xf32>
    %139 = vector.broadcast %138 : vector<16x1xf32> to vector<16x1024xf32>
    %140 = arith.cmpf oge, %136, %139 : vector<16x1024xf32>
    %141 = vector.broadcast %cst_9 : f32 to vector<16x1024xf32>
    %142 = arith.select %140, %141, %136 : vector<16x1024xi1>, vector<16x1024xf32>
    %c21_i32 = arith.constant 21 : i32
    %cst_37 = arith.constant dense<0xFF800000> : vector<16xf32>
    %143 = vector.multi_reduction <maximumf>, %142, %cst_37 [1] : vector<16x1024xf32> to vector<16xf32>
    %144 = vector.shape_cast %143 : vector<16xf32> to vector<16x1xf32>
    %145 = vector.broadcast %144 : vector<16x1xf32> to vector<16x1024xf32>
    %146 = arith.cmpf oge, %142, %145 : vector<16x1024xf32>
    %147 = vector.broadcast %cst_9 : f32 to vector<16x1024xf32>
    %148 = arith.select %146, %147, %142 : vector<16x1024xi1>, vector<16x1024xf32>
    %c22_i32 = arith.constant 22 : i32
    %cst_38 = arith.constant dense<0xFF800000> : vector<16xf32>
    %149 = vector.multi_reduction <maximumf>, %148, %cst_38 [1] : vector<16x1024xf32> to vector<16xf32>
    %150 = vector.shape_cast %149 : vector<16xf32> to vector<16x1xf32>
    %151 = vector.broadcast %150 : vector<16x1xf32> to vector<16x1024xf32>
    %152 = arith.cmpf oge, %148, %151 : vector<16x1024xf32>
    %153 = vector.broadcast %cst_9 : f32 to vector<16x1024xf32>
    %154 = arith.select %152, %153, %148 : vector<16x1024xi1>, vector<16x1024xf32>
    %c23_i32 = arith.constant 23 : i32
    %cst_39 = arith.constant dense<0xFF800000> : vector<16xf32>
    %155 = vector.multi_reduction <maximumf>, %154, %cst_39 [1] : vector<16x1024xf32> to vector<16xf32>
    %156 = vector.shape_cast %155 : vector<16xf32> to vector<16x1xf32>
    %157 = vector.broadcast %156 : vector<16x1xf32> to vector<16x1024xf32>
    %158 = arith.cmpf oge, %154, %157 : vector<16x1024xf32>
    %159 = vector.broadcast %cst_9 : f32 to vector<16x1024xf32>
    %160 = arith.select %158, %159, %154 : vector<16x1024xi1>, vector<16x1024xf32>
    %c24_i32 = arith.constant 24 : i32
    %cst_40 = arith.constant dense<0xFF800000> : vector<16xf32>
    %161 = vector.multi_reduction <maximumf>, %160, %cst_40 [1] : vector<16x1024xf32> to vector<16xf32>
    %162 = vector.shape_cast %161 : vector<16xf32> to vector<16x1xf32>
    %163 = vector.broadcast %162 : vector<16x1xf32> to vector<16x1024xf32>
    %164 = arith.cmpf oge, %160, %163 : vector<16x1024xf32>
    %165 = vector.broadcast %cst_9 : f32 to vector<16x1024xf32>
    %166 = arith.select %164, %165, %160 : vector<16x1024xi1>, vector<16x1024xf32>
    %c25_i32 = arith.constant 25 : i32
    %cst_41 = arith.constant dense<0xFF800000> : vector<16xf32>
    %167 = vector.multi_reduction <maximumf>, %166, %cst_41 [1] : vector<16x1024xf32> to vector<16xf32>
    %168 = vector.shape_cast %167 : vector<16xf32> to vector<16x1xf32>
    %169 = vector.broadcast %168 : vector<16x1xf32> to vector<16x1024xf32>
    %170 = arith.cmpf oge, %166, %169 : vector<16x1024xf32>
    %171 = vector.broadcast %cst_9 : f32 to vector<16x1024xf32>
    %172 = arith.select %170, %171, %166 : vector<16x1024xi1>, vector<16x1024xf32>
    %c26_i32 = arith.constant 26 : i32
    %cst_42 = arith.constant dense<0xFF800000> : vector<16xf32>
    %173 = vector.multi_reduction <maximumf>, %172, %cst_42 [1] : vector<16x1024xf32> to vector<16xf32>
    %174 = vector.shape_cast %173 : vector<16xf32> to vector<16x1xf32>
    %175 = vector.broadcast %174 : vector<16x1xf32> to vector<16x1024xf32>
    %176 = arith.cmpf oge, %172, %175 : vector<16x1024xf32>
    %177 = vector.broadcast %cst_9 : f32 to vector<16x1024xf32>
    %178 = arith.select %176, %177, %172 : vector<16x1024xi1>, vector<16x1024xf32>
    %c27_i32 = arith.constant 27 : i32
    %cst_43 = arith.constant dense<0xFF800000> : vector<16xf32>
    %179 = vector.multi_reduction <maximumf>, %178, %cst_43 [1] : vector<16x1024xf32> to vector<16xf32>
    %180 = vector.shape_cast %179 : vector<16xf32> to vector<16x1xf32>
    %181 = vector.broadcast %180 : vector<16x1xf32> to vector<16x1024xf32>
    %182 = arith.cmpf oge, %178, %181 : vector<16x1024xf32>
    %183 = vector.broadcast %cst_9 : f32 to vector<16x1024xf32>
    %184 = arith.select %182, %183, %178 : vector<16x1024xi1>, vector<16x1024xf32>
    %c28_i32 = arith.constant 28 : i32
    %cst_44 = arith.constant dense<0xFF800000> : vector<16xf32>
    %185 = vector.multi_reduction <maximumf>, %184, %cst_44 [1] : vector<16x1024xf32> to vector<16xf32>
    %186 = vector.shape_cast %185 : vector<16xf32> to vector<16x1xf32>
    %187 = vector.broadcast %186 : vector<16x1xf32> to vector<16x1024xf32>
    %188 = arith.cmpf oge, %184, %187 : vector<16x1024xf32>
    %189 = vector.broadcast %cst_9 : f32 to vector<16x1024xf32>
    %190 = arith.select %188, %189, %184 : vector<16x1024xi1>, vector<16x1024xf32>
    %c29_i32 = arith.constant 29 : i32
    %cst_45 = arith.constant dense<0xFF800000> : vector<16xf32>
    %191 = vector.multi_reduction <maximumf>, %190, %cst_45 [1] : vector<16x1024xf32> to vector<16xf32>
    %192 = vector.shape_cast %191 : vector<16xf32> to vector<16x1xf32>
    %193 = vector.broadcast %192 : vector<16x1xf32> to vector<16x1024xf32>
    %194 = arith.cmpf oge, %190, %193 : vector<16x1024xf32>
    %195 = vector.broadcast %cst_9 : f32 to vector<16x1024xf32>
    %196 = arith.select %194, %195, %190 : vector<16x1024xi1>, vector<16x1024xf32>
    %c30_i32 = arith.constant 30 : i32
    %cst_46 = arith.constant dense<0xFF800000> : vector<16xf32>
    %197 = vector.multi_reduction <maximumf>, %196, %cst_46 [1] : vector<16x1024xf32> to vector<16xf32>
    %198 = vector.shape_cast %197 : vector<16xf32> to vector<16x1xf32>
    %199 = vector.broadcast %198 : vector<16x1xf32> to vector<16x1024xf32>
    %200 = arith.cmpf oge, %196, %199 : vector<16x1024xf32>
    %201 = vector.broadcast %cst_9 : f32 to vector<16x1024xf32>
    %202 = arith.select %200, %201, %196 : vector<16x1024xi1>, vector<16x1024xf32>
    %c31_i32 = arith.constant 31 : i32
    %cst_47 = arith.constant dense<0xFF800000> : vector<16xf32>
    %203 = vector.multi_reduction <maximumf>, %202, %cst_47 [1] : vector<16x1024xf32> to vector<16xf32>
    %204 = vector.shape_cast %203 : vector<16xf32> to vector<16x1xf32>
    %205 = vector.broadcast %204 : vector<16x1xf32> to vector<16x1024xf32>
    %206 = arith.cmpf oge, %202, %205 : vector<16x1024xf32>
    %207 = vector.broadcast %cst_9 : f32 to vector<16x1024xf32>
    %208 = arith.select %206, %207, %202 : vector<16x1024xi1>, vector<16x1024xf32>
    %209 = vector.broadcast %204 : vector<16x1xf32> to vector<16x1024xf32>
    %210 = arith.cmpf oge, %15, %209 : vector<16x1024xf32>
    %cst_48 = arith.constant 0.000000e+00 : f32
    %211 = vector.broadcast %cst_48 : f32 to vector<16x1024xf32>
    %212 = arith.select %210, %15, %211 : vector<16x1024xi1>, vector<16x1024xf32>
    %213 = arith.truncf %212 : vector<16x1024xf32> to vector<16x1024xbf16>
    %214 = arith.index_cast %13 : i32 to index
    %c0_49 = arith.constant 0 : index
    %215 = vector.load %arg6[%214, %c0_49] : memref<16x1024xbf16, #tpu.memory_space<vmem>>, vector<16x1024xbf16>
    tpu.vector_store %arg6[%214, %c0_49], %213 {strides = array<i32>} : memref<16x1024xbf16, #tpu.memory_space<vmem>>, vector<16x1024xbf16>,
    %c1_i32_50 = arith.constant 1 : i32
    %c0_51 = arith.constant 0 : index
    %c0_52 = arith.constant 0 : index
    %216 = vector.load %arg4[%c0_51, %c0_52] : memref<16x256xf32, #tpu.memory_space<vmem>>, vector<16x256xf32>
    tpu.vector_store %arg4[%c0_51, %c0_52], %0 {strides = array<i32>} : memref<16x256xf32, #tpu.memory_space<vmem>>, vector<16x256xf32>,
    return
  }
  func.func @transform_0(%arg0: i32) -> (i32, i32) {
    %c0_i32 = arith.constant 0 : i32
    %c0_i32_0 = arith.constant 0 : i32
    return %arg0, %c0_i32 : i32, i32
  }
  func.func @transform_1(%arg0: i32) -> (i32, i32) {
    %c0_i32 = arith.constant 0 : i32
    %c0_i32_0 = arith.constant 0 : i32
    %c0_i32_1 = arith.constant 0 : i32
    return %c0_i32, %c0_i32_0 : i32, i32
  }
  func.func @transform_2(%arg0: i32) -> (i32, i32) {
    %c0_i32 = arith.constant 0 : i32
    %c0_i32_0 = arith.constant 0 : i32
    %c0_i32_1 = arith.constant 0 : i32
    return %c0_i32, %c0_i32_0 : i32, i32
  }
  func.func @transform_3(%arg0: i32) -> (i32, i32) {
    %c0_i32 = arith.constant 0 : i32
    %c0_i32_0 = arith.constant 0 : i32
    return %arg0, %c0_i32 : i32, i32
  }
  func.func @transform_4(%arg0: i32) -> (i32, i32) {
    %c0_i32 = arith.constant 0 : i32
    %c0_i32_0 = arith.constant 0 : i32
    return %arg0, %c0_i32 : i32, i32
  }
  func.func @transform_5(%arg0: i32) -> (i32, i32) {
    %c0_i32 = arith.constant 0 : i32
    %c0_i32_0 = arith.constant 0 : i32
    return %arg0, %c0_i32 : i32, i32
  }
}

</mosaic_0001>

<llo_original>
// kernel: tpu_custom_call.1
$region0: #{tpu_custom_call.1}
  #allocation0 [shape = 'u32[]', space=smem, size = 0x4, offset = 0x4, fixed_abs, tag = 'smem constant byte address 0x4 - core index']
  #allocation1 [shape = 'u32[72,128]{1,0:T(1,128)}', space=vmem, size = 0x9000, scoped, tag = 'internal scratch']
  #allocation2 [shape = 'f32[16,1024]{1,0:T(8,128)}', space=vmem, size = 0x10000, scoped, tag = 'scratch operand']
  %s0 = inlined_call_operand.hbm [shape: f32[16,256], index: 0, kind: input, shape index: {}]
  %s1 = inlined_call_operand.hbm [shape: bf16[256,1024], index: 1, kind: input, shape index: {}]
  %s2 = inlined_call_operand.hbm [shape: f32[1,1024], index: 2, kind: input, shape index: {}]
  %s3 = inlined_call_operand.hbm [shape: f32[16,256], index: 3, kind: output, shape index: {0}]
  %s4 = inlined_call_operand.hbm [shape: bf16[16,1024], index: 4, kind: output, shape index: {1}]
  %s5 = inlined_call_operand.hbm [shape: bf16[16,1024], index: 5, kind: output, shape index: {2}]
  %6 = xla_tuple %s3, %s4, %s5
  %s7 = sld [smem:[#allocation0]]
  $region50: #{tpu_custom_call.1} parent=0
    _
  %s9 = ssub.s32 1, %s7
  %s10 = scalar_select 0, %s9, %s7
  $region1: #{tpu_custom_call.1} parent=0
    #allocation3 [shape = 'u8[16384]{0}', space=vmem, size = 0x4000, scoped, tag = 'input window, operand 0, single buffered']
    #allocation4 [shape = 's32[1]{0}', space=sflag, size = 0x4, scoped, tag = 'scoped memory for tpu_custom_call.1']
    #allocation5 [shape = 's32[1]{0}', space=sflag, size = 0x4, scoped, tag = 'scoped memory for tpu_custom_call.1']
    #allocation6 [shape = 'u8[524288]{0}', space=vmem, size = 0x80000, scoped, tag = 'input window, operand 1, single buffered']
    #allocation7 [shape = 's32[1]{0}', space=sflag, size = 0x4, scoped, tag = 'scoped memory for tpu_custom_call.1']
    #allocation8 [shape = 'u8[4096]{0}', space=vmem, size = 0x1000, scoped, tag = 'input window, operand 2, single buffered']
    #allocation9 [shape = 'u8[16384]{0}', space=vmem, size = 0x4000, scoped, tag = 'output window, operand 0, single buffered']
    #allocation10 [shape = 'u8[32768]{0}', space=vmem, size = 0x8000, scoped, tag = 'output window, operand 1, single buffered']
    #allocation11 [shape = 's32[1]{0}', space=sflag, size = 0x4, scoped, tag = 'scoped memory for tpu_custom_call.1']
    #allocation12 [shape = 'u8[32768]{0}', space=vmem, size = 0x8000, scoped, tag = 'output window, operand 2, single buffered']
    %11 = vsyncpa [#allocation4], 0
    %12 = vsyncpa [#allocation7], 0
    %13 = vsyncpa [#allocation5], 0
    %14 = vsyncpa [#allocation11], 0
    // Predicated region
    $region2: #{tpu_custom_call.1} parent=1 // pred_check
      _
    $region3: #{tpu_custom_call.1} parent=1 // pred_check_branch
      %16 = sbr.rel (0) target = $region5
    $region4: #{tpu_custom_call.1} parent=1 // pred_region
      %18 = vsyncadd [#allocation4], 0
      %s19 = sshll.u32 %s0, 4
      %s20 = int_to_ptr.hbm [resolvable:$true] %s19
      %s21 = sshll.u32 [#allocation3], 4
      %s22 = int_to_ptr.vmem [resolvable:$true] %s21
      %27 = dma.hbm_to_vmem [thread:$0]  %s20, 512, %s22, [#allocation4], 256, 256, 16
    $region5: #{tpu_custom_call.1} parent=1 // pred_fallthru
      _
    // Predicated region
    $region6: #{tpu_custom_call.1} parent=1 // pred_check
      _
    $region7: #{tpu_custom_call.1} parent=1 // pred_check_branch
      %29 = sbr.rel (0) target = $region9
    $region8: #{tpu_custom_call.1} parent=1 // pred_region
      %31 = vsyncadd [#allocation7], 0
      %s32 = sshll.u32 %s1, 4
      %s33 = int_to_ptr.hbm [resolvable:$true] %s32
      %s34 = sshll.u32 [#allocation6], 4
      %s35 = int_to_ptr.vmem [resolvable:$true] %s34
      %40 = dma.hbm_to_vmem [thread:$0]  %s33, 16384, %s35, [#allocation7], 512, 512, 32
    $region9: #{tpu_custom_call.1} parent=1 // pred_fallthru
      _
    // Predicated region
    $region10: #{tpu_custom_call.1} parent=1 // pred_check
      _
    $region11: #{tpu_custom_call.1} parent=1 // pred_check_branch
      %42 = sbr.rel (0) target = $region13
    $region12: #{tpu_custom_call.1} parent=1 // pred_region
      %44 = vsyncadd [#allocation7], 0
      %s46 = sshll.u32 %s2, 4
      %s47 = int_to_ptr.hbm [resolvable:$true] %s46
      %s48 = sshll.u32 [#allocation8], 4
      %s49 = int_to_ptr.vmem [resolvable:$true] %s48
      %51 = dma.hbm_to_vmem [thread:$0]  %s47, 128, %s49, [#allocation7]
    $region13: #{tpu_custom_call.1} parent=1 // pred_fallthru
      _
    // Predicated region
    $region14: #{tpu_custom_call.1} parent=1 // pred_check
      _
    $region15: #{tpu_custom_call.1} parent=1 // pred_check_branch
      %53 = sbr.rel (0) target = $region17
    $region16: #{tpu_custom_call.1} parent=1 // pred_region
      %55 = dma.done [#allocation4], 512
    $region17: #{tpu_custom_call.1} parent=1 // pred_fallthru
      _
    // Predicated region
    $region18: #{tpu_custom_call.1} parent=1 // pred_check
      _
    $region19: #{tpu_custom_call.1} parent=1 // pred_check_branch
      %57 = sbr.rel (0) target = $region21
    $region20: #{tpu_custom_call.1} parent=1 // pred_region
      %59 = dma.done [#allocation7], 16384
    $region21: #{tpu_custom_call.1} parent=1 // pred_fallthru
      _
    // Predicated region
    $region22: #{tpu_custom_call.1} parent=1 // pred_check
      _
    $region23: #{tpu_custom_call.1} parent=1 // pred_check_branch
      %61 = sbr.rel (0) target = $region25
    $region24: #{tpu_custom_call.1} parent=1 // pred_region
      %63 = dma.done [#allocation7], 128
    $region25: #{tpu_custom_call.1} parent=1 // pred_fallthru
      _
    %v64 = vld [vmem:[#allocation3] sm:$0xff]
    %v65 = vld [vmem:[#allocation3 + $0x8] sm:$0xff]
    %v66 = vld [vmem:[#allocation3 + $0x10] sm:$0xff]
    %v67 = vld [vmem:[#allocation3 + $0x18] sm:$0xff]
    %v68 = vpack.c.bf16 %v66, %v64
    %v69 = vpack.c.bf16 %v67, %v65
    %v70 = vld [vmem:[#allocation6] sm:$0xff]
    %v71 = vld [vmem:[#allocation6 + $0x8] sm:$0xff]
    %v72 = vld [vmem:[#allocation6 + $0x10] sm:$0xff]
    %v73 = vld [vmem:[#allocation6 + $0x18] sm:$0xff]
    %v74 = vld [vmem:[#allocation6 + $0x20] sm:$0xff]
    %v75 = vld [vmem:[#allocation6 + $0x28] sm:$0xff]
    %v76 = vld [vmem:[#allocation6 + $0x30] sm:$0xff]
    %v77 = vld [vmem:[#allocation6 + $0x38] sm:$0xff]
    %v78 = vld [vmem:[#allocation6 + $0x40] sm:$0xff]
    %v79 = vld [vmem:[#allocation6 + $0x48] sm:$0xff]
    %v80 = vld [vmem:[#allocation6 + $0x50] sm:$0xff]
    %v81 = vld [vmem:[#allocation6 + $0x58] sm:$0xff]
    %v82 = vld [vmem:[#allocation6 + $0x60] sm:$0xff]
    %v83 = vld [vmem:[#allocation6 + $0x68] sm:$0xff]
    %v84 = vld [vmem:[#allocation6 + $0x70] sm:$0xff]
    %v85 = vld [vmem:[#allocation6 + $0x78] sm:$0xff]
    %v86 = vld [vmem:[#allocation6 + $0x80] sm:$0xff]
    %v87 = vld [vmem:[#allocation6 + $0x88] sm:$0xff]
    %v88 = vld [vmem:[#allocation6 + $0x90] sm:$0xff]
    %v89 = vld [vmem:[#allocation6 + $0x98] sm:$0xff]
    %v90 = vld [vmem:[#allocation6 + $0xa0] sm:$0xff]
    %v91 = vld [vmem:[#allocation6 + $0xa8] sm:$0xff]
    %v92 = vld [vmem:[#allocation6 + $0xb0] sm:$0xff]
    %v93 = vld [vmem:[#allocation6 + $0xb8] sm:$0xff]
    %v94 = vld [vmem:[#allocation6 + $0xc0] sm:$0xff]
    %v95 = vld [vmem:[#allocation6 + $0xc8] sm:$0xff]
    %v96 = vld [vmem:[#allocation6 + $0xd0] sm:$0xff]
    %v97 = vld [vmem:[#allocation6 + $0xd8] sm:$0xff]
    %v98 = vld [vmem:[#allocation6 + $0xe0] sm:$0xff]
    %v99 = vld [vmem:[#allocation6 + $0xe8] sm:$0xff]
    %v100 = vld [vmem:[#allocation6 + $0xf0] sm:$0xff]
    %v101 = vld [vmem:[#allocation6 + $0xf8] sm:$0xff]
    %v102 = vld [vmem:[#allocation6 + $0x100] sm:$0xff]
    %v103 = vld [vmem:[#allocation6 + $0x108] sm:$0xff]
    %v104 = vld [vmem:[#allocation6 + $0x110] sm:$0xff]
    %v105 = vld [vmem:[#allocation6 + $0x118] sm:$0xff]
    %v106 = vld [vmem:[#allocation6 + $0x120] sm:$0xff]
    %v107 = vld [vmem:[#allocation6 + $0x128] sm:$0xff]
    %v108 = vld [vmem:[#allocation6 + $0x130] sm:$0xff]
    %v109 = vld [vmem:[#allocation6 + $0x138] sm:$0xff]
    %v110 = vld [vmem:[#allocation6 + $0x140] sm:$0xff]
    %v111 = vld [vmem:[#allocation6 + $0x148] sm:$0xff]
    %v112 = vld [vmem:[#allocation6 + $0x150] sm:$0xff]
    %v113 = vld [vmem:[#allocation6 + $0x158] sm:$0xff]
    %v114 = vld [vmem:[#allocation6 + $0x160] sm:$0xff]
    %v115 = vld [vmem:[#allocation6 + $0x168] sm:$0xff]
    %v116 = vld [vmem:[#allocation6 + $0x170] sm:$0xff]
    %v117 = vld [vmem:[#allocation6 + $0x178] sm:$0xff]
    %v118 = vld [vmem:[#allocation6 + $0x180] sm:$0xff]
    %v119 = vld [vmem:[#allocation6 + $0x188] sm:$0xff]
    %v120 = vld [vmem:[#allocation6 + $0x190] sm:$0xff]
    %v121 = vld [vmem:[#allocation6 + $0x198] sm:$0xff]
    %v122 = vld [vmem:[#allocation6 + $0x1a0] sm:$0xff]
    %v123 = vld [vmem:[#allocation6 + $0x1a8] sm:$0xff]
    %v124 = vld [vmem:[#allocation6 + $0x1b0] sm:$0xff]
    %v125 = vld [vmem:[#allocation6 + $0x1b8] sm:$0xff]
    %v126 = vld [vmem:[#allocation6 + $0x1c0] sm:$0xff]
    %v127 = vld [vmem:[#allocation6 + $0x1c8] sm:$0xff]
    %v128 = vld [vmem:[#allocation6 + $0x1d0] sm:$0xff]
    %v129 = vld [vmem:[#allocation6 + $0x1d8] sm:$0xff]
    %v130 = vld [vmem:[#allocation6 + $0x1e0] sm:$0xff]
    %v131 = vld [vmem:[#allocation6 + $0x1e8] sm:$0xff]
    %v132 = vld [vmem:[#allocation6 + $0x1f0] sm:$0xff]
    %v133 = vld [vmem:[#allocation6 + $0x1f8] sm:$0xff]
    %v134 = vld [vmem:[#allocation6 + $0x200] sm:$0xff]
    %v135 = vld [vmem:[#allocation6 + $0x208] sm:$0xff]
    %v136 = vld [vmem:[#allocation6 + $0x210] sm:$0xff]
    %v137 = vld [vmem:[#allocation6 + $0x218] sm:$0xff]
    %v138 = vld [vmem:[#allocation6 + $0x220] sm:$0xff]
    %v139 = vld [vmem:[#allocation6 + $0x228] sm:$0xff]
    %v140 = vld [vmem:[#allocation6 + $0x230] sm:$0xff]
    %v141 = vld [vmem:[#allocation6 + $0x238] sm:$0xff]
    %v142 = vld [vmem:[#allocation6 + $0x240] sm:$0xff]
    %v143 = vld [vmem:[#allocation6 + $0x248] sm:$0xff]
    %v144 = vld [vmem:[#allocation6 + $0x250] sm:$0xff]
    %v145 = vld [vmem:[#allocation6 + $0x258] sm:$0xff]
    %v146 = vld [vmem:[#allocation6 + $0x260] sm:$0xff]
    %v147 = vld [vmem:[#allocation6 + $0x268] sm:$0xff]
    %v148 = vld [vmem:[#allocation6 + $0x270] sm:$0xff]
    %v149 = vld [vmem:[#allocation6 + $0x278] sm:$0xff]
    %v150 = vld [vmem:[#allocation6 + $0x280] sm:$0xff]
    %v151 = vld [vmem:[#allocation6 + $0x288] sm:$0xff]
    %v152 = vld [vmem:[#allocation6 + $0x290] sm:$0xff]
    %v153 = vld [vmem:[#allocation6 + $0x298] sm:$0xff]
    %v154 = vld [vmem:[#allocation6 + $0x2a0] sm:$0xff]
    %v155 = vld [vmem:[#allocation6 + $0x2a8] sm:$0xff]
    %v156 = vld [vmem:[#allocation6 + $0x2b0] sm:$0xff]
    %v157 = vld [vmem:[#allocation6 + $0x2b8] sm:$0xff]
    %v158 = vld [vmem:[#allocation6 + $0x2c0] sm:$0xff]
    %v159 = vld [vmem:[#allocation6 + $0x2c8] sm:$0xff]
    %v160 = vld [vmem:[#allocation6 + $0x2d0] sm:$0xff]
    %v161 = vld [vmem:[#allocation6 + $0x2d8] sm:$0xff]
    %v162 = vld [vmem:[#allocation6 + $0x2e0] sm:$0xff]
    %v163 = vld [vmem:[#allocation6 + $0x2e8] sm:$0xff]
    %v164 = vld [vmem:[#allocation6 + $0x2f0] sm:$0xff]
    %v165 = vld [vmem:[#allocation6 + $0x2f8] sm:$0xff]
    %v166 = vld [vmem:[#allocation6 + $0x300] sm:$0xff]
    %v167 = vld [vmem:[#allocation6 + $0x308] sm:$0xff]
    %v168 = vld [vmem:[#allocation6 + $0x310] sm:$0xff]
    %v169 = vld [vmem:[#allocation6 + $0x318] sm:$0xff]
    %v170 = vld [vmem:[#allocation6 + $0x320] sm:$0xff]
    %v171 = vld [vmem:[#allocation6 + $0x328] sm:$0xff]
    %v172 = vld [vmem:[#allocation6 + $0x330] sm:$0xff]
    %v173 = vld [vmem:[#allocation6 + $0x338] sm:$0xff]
    %v174 = vld [vmem:[#allocation6 + $0x340] sm:$0xff]
    %v175 = vld [vmem:[#allocation6 + $0x348] sm:$0xff]
    %v176 = vld [vmem:[#allocation6 + $0x350] sm:$0xff]
    %v177 = vld [vmem:[#allocation6 + $0x358] sm:$0xff]
    %v178 = vld [vmem:[#allocation6 + $0x360] sm:$0xff]
    %v179 = vld [vmem:[#allocation6 + $0x368] sm:$0xff]
    %v180 = vld [vmem:[#allocation6 + $0x370] sm:$0xff]
    %v181 = vld [vmem:[#allocation6 + $0x378] sm:$0xff]
    %v182 = vld [vmem:[#allocation6 + $0x380] sm:$0xff]
    %v183 = vld [vmem:[#allocation6 + $0x388] sm:$0xff]
    %v184 = vld [vmem:[#allocation6 + $0x390] sm:$0xff]
    %v185 = vld [vmem:[#allocation6 + $0x398] sm:$0xff]
    %v186 = vld [vmem:[#allocation6 + $0x3a0] sm:$0xff]
    %v187 = vld [vmem:[#allocation6 + $0x3a8] sm:$0xff]
    %v188 = vld [vmem:[#allocation6 + $0x3b0] sm:$0xff]
    %v189 = vld [vmem:[#allocation6 + $0x3b8] sm:$0xff]
    %v190 = vld [vmem:[#allocation6 + $0x3c0] sm:$0xff]
    %v191 = vld [vmem:[#allocation6 + $0x3c8] sm:$0xff]
    %v192 = vld [vmem:[#allocation6 + $0x3d0] sm:$0xff]
    %v193 = vld [vmem:[#allocation6 + $0x3d8] sm:$0xff]
    %v194 = vld [vmem:[#allocation6 + $0x3e0] sm:$0xff]
    %v195 = vld [vmem:[#allocation6 + $0x3e8] sm:$0xff]
    %v196 = vld [vmem:[#allocation6 + $0x3f0] sm:$0xff]
    %v197 = vld [vmem:[#allocation6 + $0x3f8] sm:$0xff]
    %v198 = vld [vmem:[#allocation8] sm:$0xff]
    %v200 = vperm.slane %v198, 0
    %v201 = vperm.slane %v198, 1
    %v202 = vperm.slane %v198, 2
    %v203 = vperm.slane %v198, 3
    %v204 = vperm.slane %v198, 4
    %v205 = vperm.slane %v198, 5
    %v206 = vperm.slane %v198, 6
    %v207 = vperm.slane %v198, 7
    %v344 = vunpack.c.l.b16 %v70
    %v345 = vunpack.c.h.b16 %v70
    %v346 = vunpack.c.l.b16 %v71
    %v347 = vunpack.c.h.b16 %v71
    %v348 = vunpack.c.l.b16 %v72
    %v349 = vunpack.c.h.b16 %v72
    %v350 = vunpack.c.l.b16 %v73
    %v351 = vunpack.c.h.b16 %v73
    %v352 = vunpack.c.l.b16 %v74
    %v353 = vunpack.c.h.b16 %v74
    %v354 = vunpack.c.l.b16 %v75
    %v355 = vunpack.c.h.b16 %v75
    %v356 = vunpack.c.l.b16 %v76
    %v357 = vunpack.c.h.b16 %v76
    %v358 = vunpack.c.l.b16 %v77
    %v359 = vunpack.c.h.b16 %v77
    %v360 = vunpack.c.l.b16 %v78
    %v361 = vunpack.c.h.b16 %v78
    %v362 = vunpack.c.l.b16 %v79
    %v363 = vunpack.c.h.b16 %v79
    %v364 = vunpack.c.l.b16 %v80
    %v365 = vunpack.c.h.b16 %v80
    %v366 = vunpack.c.l.b16 %v81
    %v367 = vunpack.c.h.b16 %v81
    %v368 = vunpack.c.l.b16 %v82
    %v369 = vunpack.c.h.b16 %v82
    %v370 = vunpack.c.l.b16 %v83
    %v371 = vunpack.c.h.b16 %v83
    %v372 = vunpack.c.l.b16 %v84
    %v373 = vunpack.c.h.b16 %v84
    %v374 = vunpack.c.l.b16 %v85
    %v375 = vunpack.c.h.b16 %v85
    %v376 = vunpack.c.l.b16 %v86
    %v377 = vunpack.c.h.b16 %v86
    %v378 = vunpack.c.l.b16 %v87
    %v379 = vunpack.c.h.b16 %v87
    %v380 = vunpack.c.l.b16 %v88
    %v381 = vunpack.c.h.b16 %v88
    %v382 = vunpack.c.l.b16 %v89
    %v383 = vunpack.c.h.b16 %v89
    %v384 = vunpack.c.l.b16 %v90
    %v385 = vunpack.c.h.b16 %v90
    %v386 = vunpack.c.l.b16 %v91
    %v387 = vunpack.c.h.b16 %v91
    %v388 = vunpack.c.l.b16 %v92
    %v389 = vunpack.c.h.b16 %v92
    %v390 = vunpack.c.l.b16 %v93
    %v391 = vunpack.c.h.b16 %v93
    %v392 = vunpack.c.l.b16 %v94
    %v393 = vunpack.c.h.b16 %v94
    %v394 = vunpack.c.l.b16 %v95
    %v395 = vunpack.c.h.b16 %v95
    %v396 = vunpack.c.l.b16 %v96
    %v397 = vunpack.c.h.b16 %v96
    %v398 = vunpack.c.l.b16 %v97
    %v399 = vunpack.c.h.b16 %v97
    %v400 = vunpack.c.l.b16 %v98
    %v401 = vunpack.c.h.b16 %v98
    %v402 = vunpack.c.l.b16 %v99
    %v403 = vunpack.c.h.b16 %v99
    %v404 = vunpack.c.l.b16 %v100
    %v405 = vunpack.c.h.b16 %v100
    %v406 = vunpack.c.l.b16 %v101
    %v407 = vunpack.c.h.b16 %v101
    %v408 = vunpack.c.l.b16 %v102
    %v409 = vunpack.c.h.b16 %v102
    %v410 = vunpack.c.l.b16 %v103
    %v411 = vunpack.c.h.b16 %v103
    %v412 = vunpack.c.l.b16 %v104
    %v413 = vunpack.c.h.b16 %v104
    %v414 = vunpack.c.l.b16 %v105
    %v415 = vunpack.c.h.b16 %v105
    %v416 = vunpack.c.l.b16 %v106
    %v417 = vunpack.c.h.b16 %v106
    %v418 = vunpack.c.l.b16 %v107
    %v419 = vunpack.c.h.b16 %v107
    %v420 = vunpack.c.l.b16 %v108
    %v421 = vunpack.c.h.b16 %v108
    %v422 = vunpack.c.l.b16 %v109
    %v423 = vunpack.c.h.b16 %v109
    %v424 = vunpack.c.l.b16 %v110
    %v425 = vunpack.c.h.b16 %v110
    %v426 = vunpack.c.l.b16 %v111
    %v427 = vunpack.c.h.b16 %v111
    %v428 = vunpack.c.l.b16 %v112
    %v429 = vunpack.c.h.b16 %v112
    %v430 = vunpack.c.l.b16 %v113
    %v431 = vunpack.c.h.b16 %v113
    %v432 = vunpack.c.l.b16 %v114
    %v433 = vunpack.c.h.b16 %v114
    %v434 = vunpack.c.l.b16 %v115
    %v435 = vunpack.c.h.b16 %v115
    %v436 = vunpack.c.l.b16 %v116
    %v437 = vunpack.c.h.b16 %v116
    %v438 = vunpack.c.l.b16 %v117
    %v439 = vunpack.c.h.b16 %v117
    %v440 = vunpack.c.l.b16 %v118
    %v441 = vunpack.c.h.b16 %v118
    %v442 = vunpack.c.l.b16 %v119
    %v443 = vunpack.c.h.b16 %v119
    %v444 = vunpack.c.l.b16 %v120
    %v445 = vunpack.c.h.b16 %v120
    %v446 = vunpack.c.l.b16 %v121
    %v447 = vunpack.c.h.b16 %v121
    %v448 = vunpack.c.l.b16 %v122
    %v449 = vunpack.c.h.b16 %v122
    %v450 = vunpack.c.l.b16 %v123
    %v451 = vunpack.c.h.b16 %v123
    %v452 = vunpack.c.l.b16 %v124
    %v453 = vunpack.c.h.b16 %v124
    %v454 = vunpack.c.l.b16 %v125
    %v455 = vunpack.c.h.b16 %v125
    %v456 = vunpack.c.l.b16 %v126
    %v457 = vunpack.c.h.b16 %v126
    %v458 = vunpack.c.l.b16 %v127
    %v459 = vunpack.c.h.b16 %v127
    %v460 = vunpack.c.l.b16 %v128
    %v461 = vunpack.c.h.b16 %v128
    %v462 = vunpack.c.l.b16 %v129
    %v463 = vunpack.c.h.b16 %v129
    %v464 = vunpack.c.l.b16 %v130
    %v465 = vunpack.c.h.b16 %v130
    %v466 = vunpack.c.l.b16 %v131
    %v467 = vunpack.c.h.b16 %v131
    %v468 = vunpack.c.l.b16 %v132
    %v469 = vunpack.c.h.b16 %v132
    %v470 = vunpack.c.l.b16 %v133
    %v471 = vunpack.c.h.b16 %v133
    %v472 = vunpack.c.l.b16 %v134
    %v473 = vunpack.c.h.b16 %v134
    %v474 = vunpack.c.l.b16 %v135
    %v475 = vunpack.c.h.b16 %v135
    %v476 = vunpack.c.l.b16 %v136
    %v477 = vunpack.c.h.b16 %v136
    %v478 = vunpack.c.l.b16 %v137
    %v479 = vunpack.c.h.b16 %v137
    %v480 = vunpack.c.l.b16 %v138
    %v481 = vunpack.c.h.b16 %v138
    %v482 = vunpack.c.l.b16 %v139
    %v483 = vunpack.c.h.b16 %v139
    %v484 = vunpack.c.l.b16 %v140
    %v485 = vunpack.c.h.b16 %v140
    %v486 = vunpack.c.l.b16 %v141
    %v487 = vunpack.c.h.b16 %v141
    %v488 = vunpack.c.l.b16 %v142
    %v489 = vunpack.c.h.b16 %v142
    %v490 = vunpack.c.l.b16 %v143
    %v491 = vunpack.c.h.b16 %v143
    %v492 = vunpack.c.l.b16 %v144
    %v493 = vunpack.c.h.b16 %v144
    %v494 = vunpack.c.l.b16 %v145
    %v495 = vunpack.c.h.b16 %v145
    %v496 = vunpack.c.l.b16 %v146
    %v497 = vunpack.c.h.b16 %v146
    %v498 = vunpack.c.l.b16 %v147
    %v499 = vunpack.c.h.b16 %v147
    %v500 = vunpack.c.l.b16 %v148
    %v501 = vunpack.c.h.b16 %v148
    %v502 = vunpack.c.l.b16 %v149
    %v503 = vunpack.c.h.b16 %v149
    %v504 = vunpack.c.l.b16 %v150
    %v505 = vunpack.c.h.b16 %v150
    %v506 = vunpack.c.l.b16 %v151
    %v507 = vunpack.c.h.b16 %v151
    %v508 = vunpack.c.l.b16 %v152
    %v509 = vunpack.c.h.b16 %v152
    %v510 = vunpack.c.l.b16 %v153
    %v511 = vunpack.c.h.b16 %v153
    %v512 = vunpack.c.l.b16 %v154
    %v513 = vunpack.c.h.b16 %v154
    %v514 = vunpack.c.l.b16 %v155
    %v515 = vunpack.c.h.b16 %v155
    %v516 = vunpack.c.l.b16 %v156
    %v517 = vunpack.c.h.b16 %v156
    %v518 = vunpack.c.l.b16 %v157
    %v519 = vunpack.c.h.b16 %v157
    %v520 = vunpack.c.l.b16 %v158
    %v521 = vunpack.c.h.b16 %v158
    %v522 = vunpack.c.l.b16 %v159
    %v523 = vunpack.c.h.b16 %v159
    %v524 = vunpack.c.l.b16 %v160
    %v525 = vunpack.c.h.b16 %v160
    %v526 = vunpack.c.l.b16 %v161
    %v527 = vunpack.c.h.b16 %v161
    %v528 = vunpack.c.l.b16 %v162
    %v529 = vunpack.c.h.b16 %v162
    %v530 = vunpack.c.l.b16 %v163
    %v531 = vunpack.c.h.b16 %v163
    %v532 = vunpack.c.l.b16 %v164
    %v533 = vunpack.c.h.b16 %v164
    %v534 = vunpack.c.l.b16 %v165
    %v535 = vunpack.c.h.b16 %v165
    %v536 = vunpack.c.l.b16 %v166
    %v537 = vunpack.c.h.b16 %v166
    %v538 = vunpack.c.l.b16 %v167
    %v539 = vunpack.c.h.b16 %v167
    %v540 = vunpack.c.l.b16 %v168
    %v541 = vunpack.c.h.b16 %v168
    %v542 = vunpack.c.l.b16 %v169
    %v543 = vunpack.c.h.b16 %v169
    %v544 = vunpack.c.l.b16 %v170
    %v545 = vunpack.c.h.b16 %v170
    %v546 = vunpack.c.l.b16 %v171
    %v547 = vunpack.c.h.b16 %v171
    %v548 = vunpack.c.l.b16 %v172
    %v549 = vunpack.c.h.b16 %v172
    %v550 = vunpack.c.l.b16 %v173
    %v551 = vunpack.c.h.b16 %v173
    %v552 = vunpack.c.l.b16 %v174
    %v553 = vunpack.c.h.b16 %v174
    %v554 = vunpack.c.l.b16 %v175
    %v555 = vunpack.c.h.b16 %v175
    %v556 = vunpack.c.l.b16 %v176
    %v557 = vunpack.c.h.b16 %v176
    %v558 = vunpack.c.l.b16 %v177
    %v559 = vunpack.c.h.b16 %v177
    %v560 = vunpack.c.l.b16 %v178
    %v561 = vunpack.c.h.b16 %v178
    %v562 = vunpack.c.l.b16 %v179
    %v563 = vunpack.c.h.b16 %v179
    %v564 = vunpack.c.l.b16 %v180
    %v565 = vunpack.c.h.b16 %v180
    %v566 = vunpack.c.l.b16 %v181
    %v567 = vunpack.c.h.b16 %v181
    %v568 = vunpack.c.l.b16 %v182
    %v569 = vunpack.c.h.b16 %v182
    %v570 = vunpack.c.l.b16 %v183
    %v571 = vunpack.c.h.b16 %v183
    %v572 = vunpack.c.l.b16 %v184
    %v573 = vunpack.c.h.b16 %v184
    %v574 = vunpack.c.l.b16 %v185
    %v575 = vunpack.c.h.b16 %v185
    %v576 = vunpack.c.l.b16 %v186
    %v577 = vunpack.c.h.b16 %v186
    %v578 = vunpack.c.l.b16 %v187
    %v579 = vunpack.c.h.b16 %v187
    %v580 = vunpack.c.l.b16 %v188
    %v581 = vunpack.c.h.b16 %v188
    %v582 = vunpack.c.l.b16 %v189
    %v583 = vunpack.c.h.b16 %v189
    %v584 = vunpack.c.l.b16 %v190
    %v585 = vunpack.c.h.b16 %v190
    %v586 = vunpack.c.l.b16 %v191
    %v587 = vunpack.c.h.b16 %v191
    %v588 = vunpack.c.l.b16 %v192
    %v589 = vunpack.c.h.b16 %v192
    %v590 = vunpack.c.l.b16 %v193
    %v591 = vunpack.c.h.b16 %v193
    %v592 = vunpack.c.l.b16 %v194
    %v593 = vunpack.c.h.b16 %v194
    %v594 = vunpack.c.l.b16 %v195
    %v595 = vunpack.c.h.b16 %v195
    %v596 = vunpack.c.l.b16 %v196
    %v597 = vunpack.c.h.b16 %v196
    %v598 = vunpack.c.l.b16 %v197
    %v599 = vunpack.c.h.b16 %v197
    %v600 = vpack.c.b16 %v352, %v344
    %v601 = vpack.c.b16 %v353, %v345
    %v602 = vpack.c.b16 %v354, %v346
    %v603 = vpack.c.b16 %v355, %v347
    %v604 = vpack.c.b16 %v356, %v348
    %v605 = vpack.c.b16 %v357, %v349
    %v606 = vpack.c.b16 %v358, %v350
    %v607 = vpack.c.b16 %v359, %v351
    %v608 = vpack.c.b16 %v368, %v360
    %v609 = vpack.c.b16 %v369, %v361
    %v610 = vpack.c.b16 %v370, %v362
    %v611 = vpack.c.b16 %v371, %v363
    %v612 = vpack.c.b16 %v372, %v364
    %v613 = vpack.c.b16 %v373, %v365
    %v614 = vpack.c.b16 %v374, %v366
    %v615 = vpack.c.b16 %v375, %v367
    %v616 = vpack.c.b16 %v384, %v376
    %v617 = vpack.c.b16 %v385, %v377
    %v618 = vpack.c.b16 %v386, %v378
    %v619 = vpack.c.b16 %v387, %v379
    %v620 = vpack.c.b16 %v388, %v380
    %v621 = vpack.c.b16 %v389, %v381
    %v622 = vpack.c.b16 %v390, %v382
    %v623 = vpack.c.b16 %v391, %v383
    %v624 = vpack.c.b16 %v400, %v392
    %v625 = vpack.c.b16 %v401, %v393
    %v626 = vpack.c.b16 %v402, %v394
    %v627 = vpack.c.b16 %v403, %v395
    %v628 = vpack.c.b16 %v404, %v396
    %v629 = vpack.c.b16 %v405, %v397
    %v630 = vpack.c.b16 %v406, %v398
    %v631 = vpack.c.b16 %v407, %v399
    %v632 = vpack.c.b16 %v416, %v408
    %v633 = vpack.c.b16 %v417, %v409
    %v634 = vpack.c.b16 %v418, %v410
    %v635 = vpack.c.b16 %v419, %v411
    %v636 = vpack.c.b16 %v420, %v412
    %v637 = vpack.c.b16 %v421, %v413
    %v638 = vpack.c.b16 %v422, %v414
    %v639 = vpack.c.b16 %v423, %v415
    %v640 = vpack.c.b16 %v432, %v424
    %v641 = vpack.c.b16 %v433, %v425
    %v642 = vpack.c.b16 %v434, %v426
    %v643 = vpack.c.b16 %v435, %v427
    %v644 = vpack.c.b16 %v436, %v428
    %v645 = vpack.c.b16 %v437, %v429
    %v646 = vpack.c.b16 %v438, %v430
    %v647 = vpack.c.b16 %v439, %v431
    %v648 = vpack.c.b16 %v448, %v440
    %v649 = vpack.c.b16 %v449, %v441
    %v650 = vpack.c.b16 %v450, %v442
    %v651 = vpack.c.b16 %v451, %v443
    %v652 = vpack.c.b16 %v452, %v444
    %v653 = vpack.c.b16 %v453, %v445
    %v654 = vpack.c.b16 %v454, %v446
    %v655 = vpack.c.b16 %v455, %v447
    %v656 = vpack.c.b16 %v464, %v456
    %v657 = vpack.c.b16 %v465, %v457
    %v658 = vpack.c.b16 %v466, %v458
    %v659 = vpack.c.b16 %v467, %v459
    %v660 = vpack.c.b16 %v468, %v460
    %v661 = vpack.c.b16 %v469, %v461
    %v662 = vpack.c.b16 %v470, %v462
    %v663 = vpack.c.b16 %v471, %v463
    %v664 = vpack.c.b16 %v480, %v472
    %v665 = vpack.c.b16 %v481, %v473
    %v666 = vpack.c.b16 %v482, %v474
    %v667 = vpack.c.b16 %v483, %v475
    %v668 = vpack.c.b16 %v484, %v476
    %v669 = vpack.c.b16 %v485, %v477
    %v670 = vpack.c.b16 %v486, %v478
    %v671 = vpack.c.b16 %v487, %v479
    %v672 = vpack.c.b16 %v496, %v488
    %v673 = vpack.c.b16 %v497, %v489
    %v674 = vpack.c.b16 %v498, %v490
    %v675 = vpack.c.b16 %v499, %v491
    %v676 = vpack.c.b16 %v500, %v492
    %v677 = vpack.c.b16 %v501, %v493
    %v678 = vpack.c.b16 %v502, %v494
    %v679 = vpack.c.b16 %v503, %v495
    %v680 = vpack.c.b16 %v512, %v504
    %v681 = vpack.c.b16 %v513, %v505
    %v682 = vpack.c.b16 %v514, %v506
    %v683 = vpack.c.b16 %v515, %v507
    %v684 = vpack.c.b16 %v516, %v508
    %v685 = vpack.c.b16 %v517, %v509
    %v686 = vpack.c.b16 %v518, %v510
    %v687 = vpack.c.b16 %v519, %v511
    %v688 = vpack.c.b16 %v528, %v520
    %v689 = vpack.c.b16 %v529, %v521
    %v690 = vpack.c.b16 %v530, %v522
    %v691 = vpack.c.b16 %v531, %v523
    %v692 = vpack.c.b16 %v532, %v524
    %v693 = vpack.c.b16 %v533, %v525
    %v694 = vpack.c.b16 %v534, %v526
    %v695 = vpack.c.b16 %v535, %v527
    %v696 = vpack.c.b16 %v544, %v536
    %v697 = vpack.c.b16 %v545, %v537
    %v698 = vpack.c.b16 %v546, %v538
    %v699 = vpack.c.b16 %v547, %v539
    %v700 = vpack.c.b16 %v548, %v540
    %v701 = vpack.c.b16 %v549, %v541
    %v702 = vpack.c.b16 %v550, %v542
    %v703 = vpack.c.b16 %v551, %v543
    %v704 = vpack.c.b16 %v560, %v552
    %v705 = vpack.c.b16 %v561, %v553
    %v706 = vpack.c.b16 %v562, %v554
    %v707 = vpack.c.b16 %v563, %v555
    %v708 = vpack.c.b16 %v564, %v556
    %v709 = vpack.c.b16 %v565, %v557
    %v710 = vpack.c.b16 %v566, %v558
    %v711 = vpack.c.b16 %v567, %v559
    %v712 = vpack.c.b16 %v576, %v568
    %v713 = vpack.c.b16 %v577, %v569
    %v714 = vpack.c.b16 %v578, %v570
    %v715 = vpack.c.b16 %v579, %v571
    %v716 = vpack.c.b16 %v580, %v572
    %v717 = vpack.c.b16 %v581, %v573
    %v718 = vpack.c.b16 %v582, %v574
    %v719 = vpack.c.b16 %v583, %v575
    %v720 = vpack.c.b16 %v592, %v584
    %v721 = vpack.c.b16 %v593, %v585
    %v722 = vpack.c.b16 %v594, %v586
    %v723 = vpack.c.b16 %v595, %v587
    %v724 = vpack.c.b16 %v596, %v588
    %v725 = vpack.c.b16 %v597, %v589
    %v726 = vpack.c.b16 %v598, %v590
    %v727 = vpack.c.b16 %v599, %v591
    %856 = vmatpush.bf16.msra.mxu0 %v656
    %857 = vmatpush.bf16.msra.mxu0 %v648
    %858 = vmatpush.bf16.msra.mxu0 %v640
    %859 = vmatpush.bf16.msra.mxu0 %v632
    %860 = vmatpush.bf16.msra.mxu0 %v624
    %861 = vmatpush.bf16.msra.mxu0 %v616
    %862 = vmatpush.bf16.msra.mxu0 %v608
    %863 = vmatpush.bf16.msra.mxu0 %v600
    %864 = vmatmul.bf16.gmra.mxu0 %v68
    %v865 = vpop.f32.mrf.mxu0
    %v866 = vadd.f32 %v200, %v865
    %v867 = vpop.f32.mrf.mxu0
    %v868 = vadd.f32 %v200, %v867
    %869 = vdwg.mxu0
    %870 = vmatpush.bf16.msra.mxu0 %v720
    %871 = vmatpush.bf16.msra.mxu0 %v712
    %872 = vmatpush.bf16.msra.mxu0 %v704
    %873 = vmatpush.bf16.msra.mxu0 %v696
    %874 = vmatpush.bf16.msra.mxu0 %v688
    %875 = vmatpush.bf16.msra.mxu0 %v680
    %876 = vmatpush.bf16.msra.mxu0 %v672
    %877 = vmatpush.bf16.msra.mxu0 %v664
    %878 = vmatmul.bf16.gmra.mxu0 %v69
    %v879 = vpop.f32.mrf.mxu0
    %v880 = vadd.f32 %v866, %v879
    %v881 = vpop.f32.mrf.mxu0
    %v882 = vadd.f32 %v868, %v881
    %883 = vdwg.mxu0
    %884 = vmatpush.bf16.msra.mxu0 %v657
    %885 = vmatpush.bf16.msra.mxu0 %v649
    %886 = vmatpush.bf16.msra.mxu0 %v641
    %887 = vmatpush.bf16.msra.mxu0 %v633
    %888 = vmatpush.bf16.msra.mxu0 %v625
    %889 = vmatpush.bf16.msra.mxu0 %v617
    %890 = vmatpush.bf16.msra.mxu0 %v609
    %891 = vmatpush.bf16.msra.mxu0 %v601
    %892 = vmatmul.bf16.gmra.mxu0 %v68
    %v893 = vpop.f32.mrf.mxu0
    %v894 = vadd.f32 %v201, %v893
    %v895 = vpop.f32.mrf.mxu0
    %v896 = vadd.f32 %v201, %v895
    %897 = vdwg.mxu0
    %898 = vmatpush.bf16.msra.mxu0 %v721
    %899 = vmatpush.bf16.msra.mxu0 %v713
    %900 = vmatpush.bf16.msra.mxu0 %v705
    %901 = vmatpush.bf16.msra.mxu0 %v697
    %902 = vmatpush.bf16.msra.mxu0 %v689
    %903 = vmatpush.bf16.msra.mxu0 %v681
    %904 = vmatpush.bf16.msra.mxu0 %v673
    %905 = vmatpush.bf16.msra.mxu0 %v665
    %906 = vmatmul.bf16.gmra.mxu0 %v69
    %v907 = vpop.f32.mrf.mxu0
    %v908 = vadd.f32 %v894, %v907
    %v909 = vpop.f32.mrf.mxu0
    %v910 = vadd.f32 %v896, %v909
    %911 = vdwg.mxu0
    %912 = vmatpush.bf16.msra.mxu0 %v658
    %913 = vmatpush.bf16.msra.mxu0 %v650
    %914 = vmatpush.bf16.msra.mxu0 %v642
    %915 = vmatpush.bf16.msra.mxu0 %v634
    %916 = vmatpush.bf16.msra.mxu0 %v626
    %917 = vmatpush.bf16.msra.mxu0 %v618
    %918 = vmatpush.bf16.msra.mxu0 %v610
    %919 = vmatpush.bf16.msra.mxu0 %v602
    %920 = vmatmul.bf16.gmra.mxu0 %v68
    %v921 = vpop.f32.mrf.mxu0
    %v922 = vadd.f32 %v202, %v921
    %v923 = vpop.f32.mrf.mxu0
    %v924 = vadd.f32 %v202, %v923
    %925 = vdwg.mxu0
    %926 = vmatpush.bf16.msra.mxu0 %v722
    %927 = vmatpush.bf16.msra.mxu0 %v714
    %928 = vmatpush.bf16.msra.mxu0 %v706
    %929 = vmatpush.bf16.msra.mxu0 %v698
    %930 = vmatpush.bf16.msra.mxu0 %v690
    %931 = vmatpush.bf16.msra.mxu0 %v682
    %932 = vmatpush.bf16.msra.mxu0 %v674
    %933 = vmatpush.bf16.msra.mxu0 %v666
    %934 = vmatmul.bf16.gmra.mxu0 %v69
    %v935 = vpop.f32.mrf.mxu0
    %v936 = vadd.f32 %v922, %v935
    %v937 = vpop.f32.mrf.mxu0
    %v938 = vadd.f32 %v924, %v937
    %939 = vdwg.mxu0
    %940 = vmatpush.bf16.msra.mxu0 %v659
    %941 = vmatpush.bf16.msra.mxu0 %v651
    %942 = vmatpush.bf16.msra.mxu0 %v643
    %943 = vmatpush.bf16.msra.mxu0 %v635
    %944 = vmatpush.bf16.msra.mxu0 %v627
    %945 = vmatpush.bf16.msra.mxu0 %v619
    %946 = vmatpush.bf16.msra.mxu0 %v611
    %947 = vmatpush.bf16.msra.mxu0 %v603
    %948 = vmatmul.bf16.gmra.mxu0 %v68
    %v949 = vpop.f32.mrf.mxu0
    %v950 = vadd.f32 %v203, %v949
    %v951 = vpop.f32.mrf.mxu0
    %v952 = vadd.f32 %v203, %v951
    %953 = vdwg.mxu0
    %954 = vmatpush.bf16.msra.mxu0 %v723
    %955 = vmatpush.bf16.msra.mxu0 %v715
    %956 = vmatpush.bf16.msra.mxu0 %v707
    %957 = vmatpush.bf16.msra.mxu0 %v699
    %958 = vmatpush.bf16.msra.mxu0 %v691
    %959 = vmatpush.bf16.msra.mxu0 %v683
    %960 = vmatpush.bf16.msra.mxu0 %v675
    %961 = vmatpush.bf16.msra.mxu0 %v667
    %962 = vmatmul.bf16.gmra.mxu0 %v69
    %v963 = vpop.f32.mrf.mxu0
    %v964 = vadd.f32 %v950, %v963
    %v965 = vpop.f32.mrf.mxu0
    %v966 = vadd.f32 %v952, %v965
    %967 = vdwg.mxu0
    %968 = vmatpush.bf16.msra.mxu0 %v660
    %969 = vmatpush.bf16.msra.mxu0 %v652
    %970 = vmatpush.bf16.msra.mxu0 %v644
    %971 = vmatpush.bf16.msra.mxu0 %v636
    %972 = vmatpush.bf16.msra.mxu0 %v628
    %973 = vmatpush.bf16.msra.mxu0 %v620
    %974 = vmatpush.bf16.msra.mxu0 %v612
    %975 = vmatpush.bf16.msra.mxu0 %v604
    %976 = vmatmul.bf16.gmra.mxu0 %v68
    %v977 = vpop.f32.mrf.mxu0
    %v978 = vadd.f32 %v204, %v977
    %v979 = vpop.f32.mrf.mxu0
    %v980 = vadd.f32 %v204, %v979
    %981 = vdwg.mxu0
    %982 = vmatpush.bf16.msra.mxu0 %v724
    %983 = vmatpush.bf16.msra.mxu0 %v716
    %984 = vmatpush.bf16.msra.mxu0 %v708
    %985 = vmatpush.bf16.msra.mxu0 %v700
    %986 = vmatpush.bf16.msra.mxu0 %v692
    %987 = vmatpush.bf16.msra.mxu0 %v684
    %988 = vmatpush.bf16.msra.mxu0 %v676
    %989 = vmatpush.bf16.msra.mxu0 %v668
    %990 = vmatmul.bf16.gmra.mxu0 %v69
    %v991 = vpop.f32.mrf.mxu0
    %v992 = vadd.f32 %v978, %v991
    %v993 = vpop.f32.mrf.mxu0
    %v994 = vadd.f32 %v980, %v993
    %995 = vdwg.mxu0
    %996 = vmatpush.bf16.msra.mxu0 %v661
    %997 = vmatpush.bf16.msra.mxu0 %v653
    %998 = vmatpush.bf16.msra.mxu0 %v645
    %999 = vmatpush.bf16.msra.mxu0 %v637
    %1000 = vmatpush.bf16.msra.mxu0 %v629
    %1001 = vmatpush.bf16.msra.mxu0 %v621
    %1002 = vmatpush.bf16.msra.mxu0 %v613
    %1003 = vmatpush.bf16.msra.mxu0 %v605
    %1004 = vmatmul.bf16.gmra.mxu0 %v68
    %v1005 = vpop.f32.mrf.mxu0
    %v1006 = vadd.f32 %v205, %v1005
    %v1007 = vpop.f32.mrf.mxu0
    %v1008 = vadd.f32 %v205, %v1007
    %1009 = vdwg.mxu0
    %1010 = vmatpush.bf16.msra.mxu0 %v725
    %1011 = vmatpush.bf16.msra.mxu0 %v717
    %1012 = vmatpush.bf16.msra.mxu0 %v709
    %1013 = vmatpush.bf16.msra.mxu0 %v701
    %1014 = vmatpush.bf16.msra.mxu0 %v693
    %1015 = vmatpush.bf16.msra.mxu0 %v685
    %1016 = vmatpush.bf16.msra.mxu0 %v677
    %1017 = vmatpush.bf16.msra.mxu0 %v669
    %1018 = vmatmul.bf16.gmra.mxu0 %v69
    %v1019 = vpop.f32.mrf.mxu0
    %v1020 = vadd.f32 %v1006, %v1019
    %v1021 = vpop.f32.mrf.mxu0
    %v1022 = vadd.f32 %v1008, %v1021
    %1023 = vdwg.mxu0
    %1024 = vmatpush.bf16.msra.mxu0 %v662
    %1025 = vmatpush.bf16.msra.mxu0 %v654
    %1026 = vmatpush.bf16.msra.mxu0 %v646
    %1027 = vmatpush.bf16.msra.mxu0 %v638
    %1028 = vmatpush.bf16.msra.mxu0 %v630
    %1029 = vmatpush.bf16.msra.mxu0 %v622
    %1030 = vmatpush.bf16.msra.mxu0 %v614
    %1031 = vmatpush.bf16.msra.mxu0 %v606
    %1032 = vmatmul.bf16.gmra.mxu0 %v68
    %v1033 = vpop.f32.mrf.mxu0
    %v1034 = vadd.f32 %v206, %v1033
    %v1035 = vpop.f32.mrf.mxu0
    %v1036 = vadd.f32 %v206, %v1035
    %1037 = vdwg.mxu0
    %1038 = vmatpush.bf16.msra.mxu0 %v726
    %1039 = vmatpush.bf16.msra.mxu0 %v718
    %1040 = vmatpush.bf16.msra.mxu0 %v710
    %1041 = vmatpush.bf16.msra.mxu0 %v702
    %1042 = vmatpush.bf16.msra.mxu0 %v694
    %1043 = vmatpush.bf16.msra.mxu0 %v686
    %1044 = vmatpush.bf16.msra.mxu0 %v678
    %1045 = vmatpush.bf16.msra.mxu0 %v670
    %1046 = vmatmul.bf16.gmra.mxu0 %v69
    %v1047 = vpop.f32.mrf.mxu0
    %v1048 = vadd.f32 %v1034, %v1047
    %v1049 = vpop.f32.mrf.mxu0
    %v1050 = vadd.f32 %v1036, %v1049
    %1051 = vdwg.mxu0
    %1052 = vmatpush.bf16.msra.mxu0 %v663
    %1053 = vmatpush.bf16.msra.mxu0 %v655
    %1054 = vmatpush.bf16.msra.mxu0 %v647
    %1055 = vmatpush.bf16.msra.mxu0 %v639
    %1056 = vmatpush.bf16.msra.mxu0 %v631
    %1057 = vmatpush.bf16.msra.mxu0 %v623
    %1058 = vmatpush.bf16.msra.mxu0 %v615
    %1059 = vmatpush.bf16.msra.mxu0 %v607
    %1060 = vmatmul.bf16.gmra.mxu0 %v68
    %v1061 = vpop.f32.mrf.mxu0
    %v1062 = vadd.f32 %v207, %v1061
    %v1063 = vpop.f32.mrf.mxu0
    %v1064 = vadd.f32 %v207, %v1063
    %1065 = vdwg.mxu0
    %1066 = vmatpush.bf16.msra.mxu0 %v727
    %1067 = vmatpush.bf16.msra.mxu0 %v719
    %1068 = vmatpush.bf16.msra.mxu0 %v711
    %1069 = vmatpush.bf16.msra.mxu0 %v703
    %1070 = vmatpush.bf16.msra.mxu0 %v695
    %1071 = vmatpush.bf16.msra.mxu0 %v687
    %1072 = vmatpush.bf16.msra.mxu0 %v679
    %1073 = vmatpush.bf16.msra.mxu0 %v671
    %1074 = vmatmul.bf16.gmra.mxu0 %v69
    %v1075 = vpop.f32.mrf.mxu0
    %v1076 = vadd.f32 %v1062, %v1075
    %v1077 = vpop.f32.mrf.mxu0
    %v1078 = vadd.f32 %v1064, %v1077
    %1079 = vdwg.mxu0
    %1080 = vst [vmem:[#allocation2] sm:$0xff] %v880
    %1081 = vst [vmem:[#allocation2 + $0x8] sm:$0xff] %v908
    %1082 = vst [vmem:[#allocation2 + $0x10] sm:$0xff] %v936
    %1083 = vst [vmem:[#allocation2 + $0x18] sm:$0xff] %v964
    %1084 = vst [vmem:[#allocation2 + $0x20] sm:$0xff] %v992
    %1085 = vst [vmem:[#allocation2 + $0x28] sm:$0xff] %v1020
    %1086 = vst [vmem:[#allocation2 + $0x30] sm:$0xff] %v1048
    %1087 = vst [vmem:[#allocation2 + $0x38] sm:$0xff] %v1076
    %1088 = vst [vmem:[#allocation2 + $0x40] sm:$0xff] %v882
    %1089 = vst [vmem:[#allocation2 + $0x48] sm:$0xff] %v910
    %1090 = vst [vmem:[#allocation2 + $0x50] sm:$0xff] %v938
    %1091 = vst [vmem:[#allocation2 + $0x58] sm:$0xff] %v966
    %1092 = vst [vmem:[#allocation2 + $0x60] sm:$0xff] %v994
    %1093 = vst [vmem:[#allocation2 + $0x68] sm:$0xff] %v1022
    %1094 = vst [vmem:[#allocation2 + $0x70] sm:$0xff] %v1050
    %1095 = vst [vmem:[#allocation2 + $0x78] sm:$0xff] %v1078
    %v1096 = vpack.c.bf16 %v908, %v880
    %v1097 = vpack.c.bf16 %v964, %v936
    %v1098 = vpack.c.bf16 %v1020, %v992
    %v1099 = vpack.c.bf16 %v1076, %v1048
    %v1100 = vpack.c.bf16 %v910, %v882
    %v1101 = vpack.c.bf16 %v966, %v938
    %v1102 = vpack.c.bf16 %v1022, %v994
    %v1103 = vpack.c.bf16 %v1078, %v1050
    %1104 = vst [vmem:[#allocation10] sm:$0xff] %v1096
    %1105 = vst [vmem:[#allocation10 + $0x8] sm:$0xff] %v1097
    %1106 = vst [vmem:[#allocation10 + $0x10] sm:$0xff] %v1098
    %1107 = vst [vmem:[#allocation10 + $0x18] sm:$0xff] %v1099
    %1108 = vst [vmem:[#allocation10 + $0x20] sm:$0xff] %v1100
    %1109 = vst [vmem:[#allocation10 + $0x28] sm:$0xff] %v1101
    %1110 = vst [vmem:[#allocation10 + $0x30] sm:$0xff] %v1102
    %1111 = vst [vmem:[#allocation10 + $0x38] sm:$0xff] %v1103
    %s1112 = smul.u32 0, 8
    %s1113 = smul.addr %s1112, 8
    %s1114 = scalar_lea.vmem [#allocation2], %s1113
    %v1115 = vld [vmem:[%s1114] sm:$0xff]
    %v1116 = vld [vmem:[%s1114 + $0x8] sm:$0xff]
    %v1117 = vld [vmem:[%s1114 + $0x10] sm:$0xff]
    %v1118 = vld [vmem:[%s1114 + $0x18] sm:$0xff]
    %v1119 = vld [vmem:[%s1114 + $0x20] sm:$0xff]
    %v1120 = vld [vmem:[%s1114 + $0x28] sm:$0xff]
    %v1121 = vld [vmem:[%s1114 + $0x30] sm:$0xff]
    %v1122 = vld [vmem:[%s1114 + $0x38] sm:$0xff]
    %v1123 = vld [vmem:[%s1114 + $0x40] sm:$0xff]
    %v1124 = vld [vmem:[%s1114 + $0x48] sm:$0xff]
    %v1125 = vld [vmem:[%s1114 + $0x50] sm:$0xff]
    %v1126 = vld [vmem:[%s1114 + $0x58] sm:$0xff]
    %v1127 = vld [vmem:[%s1114 + $0x60] sm:$0xff]
    %v1128 = vld [vmem:[%s1114 + $0x68] sm:$0xff]
    %v1129 = vld [vmem:[%s1114 + $0x70] sm:$0xff]
    %v1130 = vld [vmem:[%s1114 + $0x78] sm:$0xff]
    %v1131 = vmax.f32 %v1115, %v1117
    %v1132 = vmax.f32 %v1116, %v1118
    %v1133 = vmax.f32 %v1131, %v1119
    %v1134 = vmax.f32 %v1132, %v1120
    %v1135 = vmax.f32 %v1133, %v1121
    %v1136 = vmax.f32 %v1134, %v1122
    %v1137 = vmax.f32 %v1135, %v1136
    %1138 = vmax.xlane.f32.xlu0 %v1137
    %v1139 = vpop.xlane.xlu0 %1138
    %v1140 = vmax.f32 %v1123, %v1125
    %v1141 = vmax.f32 %v1124, %v1126
    %v1142 = vmax.f32 %v1140, %v1127
    %v1143 = vmax.f32 %v1141, %v1128
    %v1144 = vmax.f32 %v1142, %v1129
    %v1145 = vmax.f32 %v1143, %v1130
    %v1146 = vmax.f32 %v1144, %v1145
    %1147 = vmax.xlane.f32.xlu0 %v1146
    %v1148 = vpop.xlane.xlu0 %1147
    %vm1149 = vcmp.ge.f32.partialorder %v1115, %v1139
    %vm1150 = vcmp.ge.f32.partialorder %v1116, %v1139
    %vm1151 = vcmp.ge.f32.partialorder %v1117, %v1139
    %vm1152 = vcmp.ge.f32.partialorder %v1118, %v1139
    %vm1153 = vcmp.ge.f32.partialorder %v1119, %v1139
    %vm1154 = vcmp.ge.f32.partialorder %v1120, %v1139
    %vm1155 = vcmp.ge.f32.partialorder %v1121, %v1139
    %vm1156 = vcmp.ge.f32.partialorder %v1122, %v1139
    %vm1157 = vcmp.ge.f32.partialorder %v1123, %v1148
    %vm1158 = vcmp.ge.f32.partialorder %v1124, %v1148
    %vm1159 = vcmp.ge.f32.partialorder %v1125, %v1148
    %vm1160 = vcmp.ge.f32.partialorder %v1126, %v1148
    %vm1161 = vcmp.ge.f32.partialorder %v1127, %v1148
    %vm1162 = vcmp.ge.f32.partialorder %v1128, %v1148
    %vm1163 = vcmp.ge.f32.partialorder %v1129, %v1148
    %vm1164 = vcmp.ge.f32.partialorder %v1130, %v1148
    %v1165 = vsel %vm1149, -inf, %v1115
    %v1166 = vsel %vm1150, -inf, %v1116
    %v1167 = vsel %vm1151, -inf, %v1117
    %v1168 = vsel %vm1152, -inf, %v1118
    %v1169 = vsel %vm1153, -inf, %v1119
    %v1170 = vsel %vm1154, -inf, %v1120
    %v1171 = vsel %vm1155, -inf, %v1121
    %v1172 = vsel %vm1156, -inf, %v1122
    %v1173 = vsel %vm1157, -inf, %v1123
    %v1174 = vsel %vm1158, -inf, %v1124
    %v1175 = vsel %vm1159, -inf, %v1125
    %v1176 = vsel %vm1160, -inf, %v1126
    %v1177 = vsel %vm1161, -inf, %v1127
    %v1178 = vsel %vm1162, -inf, %v1128
    %v1179 = vsel %vm1163, -inf, %v1129
    %v1180 = vsel %vm1164, -inf, %v1130
    %v1181 = vmax.f32 %v1165, %v1167
    %v1182 = vmax.f32 %v1166, %v1168
    %v1183 = vmax.f32 %v1181, %v1169
    %v1184 = vmax.f32 %v1182, %v1170
    %v1185 = vmax.f32 %v1183, %v1171
    %v1186 = vmax.f32 %v1184, %v1172
    %v1187 = vmax.f32 %v1185, %v1186
    %1188 = vmax.xlane.f32.xlu0 %v1187
    %v1189 = vpop.xlane.xlu0 %1188
    %v1190 = vmax.f32 %v1173, %v1175
    %v1191 = vmax.f32 %v1174, %v1176
    %v1192 = vmax.f32 %v1190, %v1177
    %v1193 = vmax.f32 %v1191, %v1178
    %v1194 = vmax.f32 %v1192, %v1179
    %v1195 = vmax.f32 %v1193, %v1180
    %v1196 = vmax.f32 %v1194, %v1195
    %1197 = vmax.xlane.f32.xlu0 %v1196
    %v1198 = vpop.xlane.xlu0 %1197
    %vm1199 = vcmp.ge.f32.partialorder %v1165, %v1189
    %vm1200 = vcmp.ge.f32.partialorder %v1166, %v1189
    %vm1201 = vcmp.ge.f32.partialorder %v1167, %v1189
    %vm1202 = vcmp.ge.f32.partialorder %v1168, %v1189
    %vm1203 = vcmp.ge.f32.partialorder %v1169, %v1189
    %vm1204 = vcmp.ge.f32.partialorder %v1170, %v1189
    %vm1205 = vcmp.ge.f32.partialorder %v1171, %v1189
    %vm1206 = vcmp.ge.f32.partialorder %v1172, %v1189
    %vm1207 = vcmp.ge.f32.partialorder %v1173, %v1198
    %vm1208 = vcmp.ge.f32.partialorder %v1174, %v1198
    %vm1209 = vcmp.ge.f32.partialorder %v1175, %v1198
    %vm1210 = vcmp.ge.f32.partialorder %v1176, %v1198
    %vm1211 = vcmp.ge.f32.partialorder %v1177, %v1198
    %vm1212 = vcmp.ge.f32.partialorder %v1178, %v1198
    %vm1213 = vcmp.ge.f32.partialorder %v1179, %v1198
    %vm1214 = vcmp.ge.f32.partialorder %v1180, %v1198
    %v1215 = vsel %vm1199, -inf, %v1165
    %v1216 = vsel %vm1200, -inf, %v1166
    %v1217 = vsel %vm1201, -inf, %v1167
    %v1218 = vsel %vm1202, -inf, %v1168
    %v1219 = vsel %vm1203, -inf, %v1169
    %v1220 = vsel %vm1204, -inf, %v1170
    %v1221 = vsel %vm1205, -inf, %v1171
    %v1222 = vsel %vm1206, -inf, %v1172
    %v1223 = vsel %vm1207, -inf, %v1173
    %v1224 = vsel %vm1208, -inf, %v1174
    %v1225 = vsel %vm1209, -inf, %v1175
    %v1226 = vsel %vm1210, -inf, %v1176
    %v1227 = vsel %vm1211, -inf, %v1177
    %v1228 = vsel %vm1212, -inf, %v1178
    %v1229 = vsel %vm1213, -inf, %v1179
    %v1230 = vsel %vm1214, -inf, %v1180
    %v1231 = vmax.f32 %v1215, %v1217
    %v1232 = vmax.f32 %v1216, %v1218
    %v1233 = vmax.f32 %v1231, %v1219
    %v1234 = vmax.f32 %v1232, %v1220
    %v1235 = vmax.f32 %v1233, %v1221
    %v1236 = vmax.f32 %v1234, %v1222
    %v1237 = vmax.f32 %v1235, %v1236
    %1238 = vmax.xlane.f32.xlu0 %v1237
    %v1239 = vpop.xlane.xlu0 %1238
    %v1240 = vmax.f32 %v1223, %v1225
    %v1241 = vmax.f32 %v1224, %v1226
    %v1242 = vmax.f32 %v1240, %v1227
    %v1243 = vmax.f32 %v1241, %v1228
    %v1244 = vmax.f32 %v1242, %v1229
    %v1245 = vmax.f32 %v1243, %v1230
    %v1246 = vmax.f32 %v1244, %v1245
    %1247 = vmax.xlane.f32.xlu0 %v1246
    %v1248 = vpop.xlane.xlu0 %1247
    %vm1249 = vcmp.ge.f32.partialorder %v1215, %v1239
    %vm1250 = vcmp.ge.f32.partialorder %v1216, %v1239
    %vm1251 = vcmp.ge.f32.partialorder %v1217, %v1239
    %vm1252 = vcmp.ge.f32.partialorder %v1218, %v1239
    %vm1253 = vcmp.ge.f32.partialorder %v1219, %v1239
    %vm1254 = vcmp.ge.f32.partialorder %v1220, %v1239
    %vm1255 = vcmp.ge.f32.partialorder %v1221, %v1239
    %vm1256 = vcmp.ge.f32.partialorder %v1222, %v1239
    %vm1257 = vcmp.ge.f32.partialorder %v1223, %v1248
    %vm1258 = vcmp.ge.f32.partialorder %v1224, %v1248
    %vm1259 = vcmp.ge.f32.partialorder %v1225, %v1248
    %vm1260 = vcmp.ge.f32.partialorder %v1226, %v1248
    %vm1261 = vcmp.ge.f32.partialorder %v1227, %v1248
    %vm1262 = vcmp.ge.f32.partialorder %v1228, %v1248
    %vm1263 = vcmp.ge.f32.partialorder %v1229, %v1248
    %vm1264 = vcmp.ge.f32.partialorder %v1230, %v1248
    %v1265 = vsel %vm1249, -inf, %v1215
    %v1266 = vsel %vm1250, -inf, %v1216
    %v1267 = vsel %vm1251, -inf, %v1217
    %v1268 = vsel %vm1252, -inf, %v1218
    %v1269 = vsel %vm1253, -inf, %v1219
    %v1270 = vsel %vm1254, -inf, %v1220
    %v1271 = vsel %vm1255, -inf, %v1221
    %v1272 = vsel %vm1256, -inf, %v1222
    %v1273 = vsel %vm1257, -inf, %v1223
    %v1274 = vsel %vm1258, -inf, %v1224
    %v1275 = vsel %vm1259, -inf, %v1225
    %v1276 = vsel %vm1260, -inf, %v1226
    %v1277 = vsel %vm1261, -inf, %v1227
    %v1278 = vsel %vm1262, -inf, %v1228
    %v1279 = vsel %vm1263, -inf, %v1229
    %v1280 = vsel %vm1264, -inf, %v1230
    %v1281 = vmax.f32 %v1265, %v1267
    %v1282 = vmax.f32 %v1266, %v1268
    %v1283 = vmax.f32 %v1281, %v1269
    %v1284 = vmax.f32 %v1282, %v1270
    %v1285 = vmax.f32 %v1283, %v1271
    %v1286 = vmax.f32 %v1284, %v1272
    %v1287 = vmax.f32 %v1285, %v1286
    %1288 = vmax.xlane.f32.xlu0 %v1287
    %v1289 = vpop.xlane.xlu0 %1288
    %v1290 = vmax.f32 %v1273, %v1275
    %v1291 = vmax.f32 %v1274, %v1276
    %v1292 = vmax.f32 %v1290, %v1277
    %v1293 = vmax.f32 %v1291, %v1278
    %v1294 = vmax.f32 %v1292, %v1279
    %v1295 = vmax.f32 %v1293, %v1280
    %v1296 = vmax.f32 %v1294, %v1295
    %1297 = vmax.xlane.f32.xlu0 %v1296
    %v1298 = vpop.xlane.xlu0 %1297
    %vm1299 = vcmp.ge.f32.partialorder %v1265, %v1289
    %vm1300 = vcmp.ge.f32.partialorder %v1266, %v1289
    %vm1301 = vcmp.ge.f32.partialorder %v1267, %v1289
    %vm1302 = vcmp.ge.f32.partialorder %v1268, %v1289
    %vm1303 = vcmp.ge.f32.partialorder %v1269, %v1289
    %vm1304 = vcmp.ge.f32.partialorder %v1270, %v1289
    %vm1305 = vcmp.ge.f32.partialorder %v1271, %v1289
    %vm1306 = vcmp.ge.f32.partialorder %v1272, %v1289
    %vm1307 = vcmp.ge.f32.partialorder %v1273, %v1298
    %vm1308 = vcmp.ge.f32.partialorder %v1274, %v1298
    %vm1309 = vcmp.ge.f32.partialorder %v1275, %v1298
    %vm1310 = vcmp.ge.f32.partialorder %v1276, %v1298
    %vm1311 = vcmp.ge.f32.partialorder %v1277, %v1298
    %vm1312 = vcmp.ge.f32.partialorder %v1278, %v1298
    %vm1313 = vcmp.ge.f32.partialorder %v1279, %v1298
    %vm1314 = vcmp.ge.f32.partialorder %v1280, %v1298
    %v1315 = vsel %vm1299, -inf, %v1265
    %v1316 = vsel %vm1300, -inf, %v1266
    %v1317 = vsel %vm1301, -inf, %v1267
    %v1318 = vsel %vm1302, -inf, %v1268
    %v1319 = vsel %vm1303, -inf, %v1269
    %v1320 = vsel %vm1304, -inf, %v1270
    %v1321 = vsel %vm1305, -inf, %v1271
    %v1322 = vsel %vm1306, -inf, %v1272
    %v1323 = vsel %vm1307, -inf, %v1273
    %v1324 = vsel %vm1308, -inf, %v1274
    %v1325 = vsel %vm1309, -inf, %v1275
    %v1326 = vsel %vm1310, -inf, %v1276
    %v1327 = vsel %vm1311, -inf, %v1277
    %v1328 = vsel %vm1312, -inf, %v1278
    %v1329 = vsel %vm1313, -inf, %v1279
    %v1330 = vsel %vm1314, -inf, %v1280
    %v1331 = vmax.f32 %v1315, %v1317
    %v1332 = vmax.f32 %v1316, %v1318
    %v1333 = vmax.f32 %v1331, %v1319
    %v1334 = vmax.f32 %v1332, %v1320
    %v1335 = vmax.f32 %v1333, %v1321
    %v1336 = vmax.f32 %v1334, %v1322
    %v1337 = vmax.f32 %v1335, %v1336
    %1338 = vmax.xlane.f32.xlu0 %v1337
    %v1339 = vpop.xlane.xlu0 %1338
    %v1340 = vmax.f32 %v1323, %v1325
    %v1341 = vmax.f32 %v1324, %v1326
    %v1342 = vmax.f32 %v1340, %v1327
    %v1343 = vmax.f32 %v1341, %v1328
    %v1344 = vmax.f32 %v1342, %v1329
    %v1345 = vmax.f32 %v1343, %v1330
    %v1346 = vmax.f32 %v1344, %v1345
    %1347 = vmax.xlane.f32.xlu0 %v1346
    %v1348 = vpop.xlane.xlu0 %1347
    %vm1349 = vcmp.ge.f32.partialorder %v1315, %v1339
    %vm1350 = vcmp.ge.f32.partialorder %v1316, %v1339
    %vm1351 = vcmp.ge.f32.partialorder %v1317, %v1339
    %vm1352 = vcmp.ge.f32.partialorder %v1318, %v1339
    %vm1353 = vcmp.ge.f32.partialorder %v1319, %v1339
    %vm1354 = vcmp.ge.f32.partialorder %v1320, %v1339
    %vm1355 = vcmp.ge.f32.partialorder %v1321, %v1339
    %vm1356 = vcmp.ge.f32.partialorder %v1322, %v1339
    %vm1357 = vcmp.ge.f32.partialorder %v1323, %v1348
    %vm1358 = vcmp.ge.f32.partialorder %v1324, %v1348
    %vm1359 = vcmp.ge.f32.partialorder %v1325, %v1348
    %vm1360 = vcmp.ge.f32.partialorder %v1326, %v1348
    %vm1361 = vcmp.ge.f32.partialorder %v1327, %v1348
    %vm1362 = vcmp.ge.f32.partialorder %v1328, %v1348
    %vm1363 = vcmp.ge.f32.partialorder %v1329, %v1348
    %vm1364 = vcmp.ge.f32.partialorder %v1330, %v1348
    %v1365 = vsel %vm1349, -inf, %v1315
    %v1366 = vsel %vm1350, -inf, %v1316
    %v1367 = vsel %vm1351, -inf, %v1317
    %v1368 = vsel %vm1352, -inf, %v1318
    %v1369 = vsel %vm1353, -inf, %v1319
    %v1370 = vsel %vm1354, -inf, %v1320
    %v1371 = vsel %vm1355, -inf, %v1321
    %v1372 = vsel %vm1356, -inf, %v1322
    %v1373 = vsel %vm1357, -inf, %v1323
    %v1374 = vsel %vm1358, -inf, %v1324
    %v1375 = vsel %vm1359, -inf, %v1325
    %v1376 = vsel %vm1360, -inf, %v1326
    %v1377 = vsel %vm1361, -inf, %v1327
    %v1378 = vsel %vm1362, -inf, %v1328
    %v1379 = vsel %vm1363, -inf, %v1329
    %v1380 = vsel %vm1364, -inf, %v1330
    %v1381 = vmax.f32 %v1365, %v1367
    %v1382 = vmax.f32 %v1366, %v1368
    %v1383 = vmax.f32 %v1381, %v1369
    %v1384 = vmax.f32 %v1382, %v1370
    %v1385 = vmax.f32 %v1383, %v1371
    %v1386 = vmax.f32 %v1384, %v1372
    %v1387 = vmax.f32 %v1385, %v1386
    %1388 = vmax.xlane.f32.xlu0 %v1387
    %v1389 = vpop.xlane.xlu0 %1388
    %v1390 = vmax.f32 %v1373, %v1375
    %v1391 = vmax.f32 %v1374, %v1376
    %v1392 = vmax.f32 %v1390, %v1377
    %v1393 = vmax.f32 %v1391, %v1378
    %v1394 = vmax.f32 %v1392, %v1379
    %v1395 = vmax.f32 %v1393, %v1380
    %v1396 = vmax.f32 %v1394, %v1395
    %1397 = vmax.xlane.f32.xlu0 %v1396
    %v1398 = vpop.xlane.xlu0 %1397
    %vm1399 = vcmp.ge.f32.partialorder %v1365, %v1389
    %vm1400 = vcmp.ge.f32.partialorder %v1366, %v1389
    %vm1401 = vcmp.ge.f32.partialorder %v1367, %v1389
    %vm1402 = vcmp.ge.f32.partialorder %v1368, %v1389
    %vm1403 = vcmp.ge.f32.partialorder %v1369, %v1389
    %vm1404 = vcmp.ge.f32.partialorder %v1370, %v1389
    %vm1405 = vcmp.ge.f32.partialorder %v1371, %v1389
    %vm1406 = vcmp.ge.f32.partialorder %v1372, %v1389
    %vm1407 = vcmp.ge.f32.partialorder %v1373, %v1398
    %vm1408 = vcmp.ge.f32.partialorder %v1374, %v1398
    %vm1409 = vcmp.ge.f32.partialorder %v1375, %v1398
    %vm1410 = vcmp.ge.f32.partialorder %v1376, %v1398
    %vm1411 = vcmp.ge.f32.partialorder %v1377, %v1398
    %vm1412 = vcmp.ge.f32.partialorder %v1378, %v1398
    %vm1413 = vcmp.ge.f32.partialorder %v1379, %v1398
    %vm1414 = vcmp.ge.f32.partialorder %v1380, %v1398
    %v1415 = vsel %vm1399, -inf, %v1365
    %v1416 = vsel %vm1400, -inf, %v1366
    %v1417 = vsel %vm1401, -inf, %v1367
    %v1418 = vsel %vm1402, -inf, %v1368
    %v1419 = vsel %vm1403, -inf, %v1369
    %v1420 = vsel %vm1404, -inf, %v1370
    %v1421 = vsel %vm1405, -inf, %v1371
    %v1422 = vsel %vm1406, -inf, %v1372
    %v1423 = vsel %vm1407, -inf, %v1373
    %v1424 = vsel %vm1408, -inf, %v1374
    %v1425 = vsel %vm1409, -inf, %v1375
    %v1426 = vsel %vm1410, -inf, %v1376
    %v1427 = vsel %vm1411, -inf, %v1377
    %v1428 = vsel %vm1412, -inf, %v1378
    %v1429 = vsel %vm1413, -inf, %v1379
    %v1430 = vsel %vm1414, -inf, %v1380
    %v1431 = vmax.f32 %v1415, %v1417
    %v1432 = vmax.f32 %v1416, %v1418
    %v1433 = vmax.f32 %v1431, %v1419
    %v1434 = vmax.f32 %v1432, %v1420
    %v1435 = vmax.f32 %v1433, %v1421
    %v1436 = vmax.f32 %v1434, %v1422
    %v1437 = vmax.f32 %v1435, %v1436
    %1438 = vmax.xlane.f32.xlu0 %v1437
    %v1439 = vpop.xlane.xlu0 %1438
    %v1440 = vmax.f32 %v1423, %v1425
    %v1441 = vmax.f32 %v1424, %v1426
    %v1442 = vmax.f32 %v1440, %v1427
    %v1443 = vmax.f32 %v1441, %v1428
    %v1444 = vmax.f32 %v1442, %v1429
    %v1445 = vmax.f32 %v1443, %v1430
    %v1446 = vmax.f32 %v1444, %v1445
    %1447 = vmax.xlane.f32.xlu0 %v1446
    %v1448 = vpop.xlane.xlu0 %1447
    %vm1449 = vcmp.ge.f32.partialorder %v1415, %v1439
    %vm1450 = vcmp.ge.f32.partialorder %v1416, %v1439
    %vm1451 = vcmp.ge.f32.partialorder %v1417, %v1439
    %vm1452 = vcmp.ge.f32.partialorder %v1418, %v1439
    %vm1453 = vcmp.ge.f32.partialorder %v1419, %v1439
    %vm1454 = vcmp.ge.f32.partialorder %v1420, %v1439
    %vm1455 = vcmp.ge.f32.partialorder %v1421, %v1439
    %vm1456 = vcmp.ge.f32.partialorder %v1422, %v1439
    %vm1457 = vcmp.ge.f32.partialorder %v1423, %v1448
    %vm1458 = vcmp.ge.f32.partialorder %v1424, %v1448
    %vm1459 = vcmp.ge.f32.partialorder %v1425, %v1448
    %vm1460 = vcmp.ge.f32.partialorder %v1426, %v1448
    %vm1461 = vcmp.ge.f32.partialorder %v1427, %v1448
    %vm1462 = vcmp.ge.f32.partialorder %v1428, %v1448
    %vm1463 = vcmp.ge.f32.partialorder %v1429, %v1448
    %vm1464 = vcmp.ge.f32.partialorder %v1430, %v1448
    %v1465 = vsel %vm1449, -inf, %v1415
    %v1466 = vsel %vm1450, -inf, %v1416
    %v1467 = vsel %vm1451, -inf, %v1417
    %v1468 = vsel %vm1452, -inf, %v1418
    %v1469 = vsel %vm1453, -inf, %v1419
    %v1470 = vsel %vm1454, -inf, %v1420
    %v1471 = vsel %vm1455, -inf, %v1421
    %v1472 = vsel %vm1456, -inf, %v1422
    %v1473 = vsel %vm1457, -inf, %v1423
    %v1474 = vsel %vm1458, -inf, %v1424
    %v1475 = vsel %vm1459, -inf, %v1425
    %v1476 = vsel %vm1460, -inf, %v1426
    %v1477 = vsel %vm1461, -inf, %v1427
    %v1478 = vsel %vm1462, -inf, %v1428
    %v1479 = vsel %vm1463, -inf, %v1429
    %v1480 = vsel %vm1464, -inf, %v1430
    %v1481 = vmax.f32 %v1465, %v1467
    %v1482 = vmax.f32 %v1466, %v1468
    %v1483 = vmax.f32 %v1481, %v1469
    %v1484 = vmax.f32 %v1482, %v1470
    %v1485 = vmax.f32 %v1483, %v1471
    %v1486 = vmax.f32 %v1484, %v1472
    %v1487 = vmax.f32 %v1485, %v1486
    %1488 = vmax.xlane.f32.xlu0 %v1487
    %v1489 = vpop.xlane.xlu0 %1488
    %v1490 = vmax.f32 %v1473, %v1475
    %v1491 = vmax.f32 %v1474, %v1476
    %v1492 = vmax.f32 %v1490, %v1477
    %v1493 = vmax.f32 %v1491, %v1478
    %v1494 = vmax.f32 %v1492, %v1479
    %v1495 = vmax.f32 %v1493, %v1480
    %v1496 = vmax.f32 %v1494, %v1495
    %1497 = vmax.xlane.f32.xlu0 %v1496
    %v1498 = vpop.xlane.xlu0 %1497
    %vm1499 = vcmp.ge.f32.partialorder %v1465, %v1489
    %vm1500 = vcmp.ge.f32.partialorder %v1466, %v1489
    %vm1501 = vcmp.ge.f32.partialorder %v1467, %v1489
    %vm1502 = vcmp.ge.f32.partialorder %v1468, %v1489
    %vm1503 = vcmp.ge.f32.partialorder %v1469, %v1489
    %vm1504 = vcmp.ge.f32.partialorder %v1470, %v1489
    %vm1505 = vcmp.ge.f32.partialorder %v1471, %v1489
    %vm1506 = vcmp.ge.f32.partialorder %v1472, %v1489
    %vm1507 = vcmp.ge.f32.partialorder %v1473, %v1498
    %vm1508 = vcmp.ge.f32.partialorder %v1474, %v1498
    %vm1509 = vcmp.ge.f32.partialorder %v1475, %v1498
    %vm1510 = vcmp.ge.f32.partialorder %v1476, %v1498
    %vm1511 = vcmp.ge.f32.partialorder %v1477, %v1498
    %vm1512 = vcmp.ge.f32.partialorder %v1478, %v1498
    %vm1513 = vcmp.ge.f32.partialorder %v1479, %v1498
    %vm1514 = vcmp.ge.f32.partialorder %v1480, %v1498
    %v1515 = vsel %vm1499, -inf, %v1465
    %v1516 = vsel %vm1500, -inf, %v1466
    %v1517 = vsel %vm1501, -inf, %v1467
    %v1518 = vsel %vm1502, -inf, %v1468
    %v1519 = vsel %vm1503, -inf, %v1469
    %v1520 = vsel %vm1504, -inf, %v1470
    %v1521 = vsel %vm1505, -inf, %v1471
    %v1522 = vsel %vm1506, -inf, %v1472
    %v1523 = vsel %vm1507, -inf, %v1473
    %v1524 = vsel %vm1508, -inf, %v1474
    %v1525 = vsel %vm1509, -inf, %v1475
    %v1526 = vsel %vm1510, -inf, %v1476
    %v1527 = vsel %vm1511, -inf, %v1477
    %v1528 = vsel %vm1512, -inf, %v1478
    %v1529 = vsel %vm1513, -inf, %v1479
    %v1530 = vsel %vm1514, -inf, %v1480
    %v1531 = vmax.f32 %v1515, %v1517
    %v1532 = vmax.f32 %v1516, %v1518
    %v1533 = vmax.f32 %v1531, %v1519
    %v1534 = vmax.f32 %v1532, %v1520
    %v1535 = vmax.f32 %v1533, %v1521
    %v1536 = vmax.f32 %v1534, %v1522
    %v1537 = vmax.f32 %v1535, %v1536
    %1538 = vmax.xlane.f32.xlu0 %v1537
    %v1539 = vpop.xlane.xlu0 %1538
    %v1540 = vmax.f32 %v1523, %v1525
    %v1541 = vmax.f32 %v1524, %v1526
    %v1542 = vmax.f32 %v1540, %v1527
    %v1543 = vmax.f32 %v1541, %v1528
    %v1544 = vmax.f32 %v1542, %v1529
    %v1545 = vmax.f32 %v1543, %v1530
    %v1546 = vmax.f32 %v1544, %v1545
    %1547 = vmax.xlane.f32.xlu0 %v1546
    %v1548 = vpop.xlane.xlu0 %1547
    %vm1549 = vcmp.ge.f32.partialorder %v1515, %v1539
    %vm1550 = vcmp.ge.f32.partialorder %v1516, %v1539
    %vm1551 = vcmp.ge.f32.partialorder %v1517, %v1539
    %vm1552 = vcmp.ge.f32.partialorder %v1518, %v1539
    %vm1553 = vcmp.ge.f32.partialorder %v1519, %v1539
    %vm1554 = vcmp.ge.f32.partialorder %v1520, %v1539
    %vm1555 = vcmp.ge.f32.partialorder %v1521, %v1539
    %vm1556 = vcmp.ge.f32.partialorder %v1522, %v1539
    %vm1557 = vcmp.ge.f32.partialorder %v1523, %v1548
    %vm1558 = vcmp.ge.f32.partialorder %v1524, %v1548
    %vm1559 = vcmp.ge.f32.partialorder %v1525, %v1548
    %vm1560 = vcmp.ge.f32.partialorder %v1526, %v1548
    %vm1561 = vcmp.ge.f32.partialorder %v1527, %v1548
    %vm1562 = vcmp.ge.f32.partialorder %v1528, %v1548
    %vm1563 = vcmp.ge.f32.partialorder %v1529, %v1548
    %vm1564 = vcmp.ge.f32.partialorder %v1530, %v1548
    %v1565 = vsel %vm1549, -inf, %v1515
    %v1566 = vsel %vm1550, -inf, %v1516
    %v1567 = vsel %vm1551, -inf, %v1517
    %v1568 = vsel %vm1552, -inf, %v1518
    %v1569 = vsel %vm1553, -inf, %v1519
    %v1570 = vsel %vm1554, -inf, %v1520
    %v1571 = vsel %vm1555, -inf, %v1521
    %v1572 = vsel %vm1556, -inf, %v1522
    %v1573 = vsel %vm1557, -inf, %v1523
    %v1574 = vsel %vm1558, -inf, %v1524
    %v1575 = vsel %vm1559, -inf, %v1525
    %v1576 = vsel %vm1560, -inf, %v1526
    %v1577 = vsel %vm1561, -inf, %v1527
    %v1578 = vsel %vm1562, -inf, %v1528
    %v1579 = vsel %vm1563, -inf, %v1529
    %v1580 = vsel %vm1564, -inf, %v1530
    %v1581 = vmax.f32 %v1565, %v1567
    %v1582 = vmax.f32 %v1566, %v1568
    %v1583 = vmax.f32 %v1581, %v1569
    %v1584 = vmax.f32 %v1582, %v1570
    %v1585 = vmax.f32 %v1583, %v1571
    %v1586 = vmax.f32 %v1584, %v1572
    %v1587 = vmax.f32 %v1585, %v1586
    %1588 = vmax.xlane.f32.xlu0 %v1587
    %v1589 = vpop.xlane.xlu0 %1588
    %v1590 = vmax.f32 %v1573, %v1575
    %v1591 = vmax.f32 %v1574, %v1576
    %v1592 = vmax.f32 %v1590, %v1577
    %v1593 = vmax.f32 %v1591, %v1578
    %v1594 = vmax.f32 %v1592, %v1579
    %v1595 = vmax.f32 %v1593, %v1580
    %v1596 = vmax.f32 %v1594, %v1595
    %1597 = vmax.xlane.f32.xlu0 %v1596
    %v1598 = vpop.xlane.xlu0 %1597
    %vm1599 = vcmp.ge.f32.partialorder %v1565, %v1589
    %vm1600 = vcmp.ge.f32.partialorder %v1566, %v1589
    %vm1601 = vcmp.ge.f32.partialorder %v1567, %v1589
    %vm1602 = vcmp.ge.f32.partialorder %v1568, %v1589
    %vm1603 = vcmp.ge.f32.partialorder %v1569, %v1589
    %vm1604 = vcmp.ge.f32.partialorder %v1570, %v1589
    %vm1605 = vcmp.ge.f32.partialorder %v1571, %v1589
    %vm1606 = vcmp.ge.f32.partialorder %v1572, %v1589
    %vm1607 = vcmp.ge.f32.partialorder %v1573, %v1598
    %vm1608 = vcmp.ge.f32.partialorder %v1574, %v1598
    %vm1609 = vcmp.ge.f32.partialorder %v1575, %v1598
    %vm1610 = vcmp.ge.f32.partialorder %v1576, %v1598
    %vm1611 = vcmp.ge.f32.partialorder %v1577, %v1598
    %vm1612 = vcmp.ge.f32.partialorder %v1578, %v1598
    %vm1613 = vcmp.ge.f32.partialorder %v1579, %v1598
    %vm1614 = vcmp.ge.f32.partialorder %v1580, %v1598
    %v1615 = vsel %vm1599, -inf, %v1565
    %v1616 = vsel %vm1600, -inf, %v1566
    %v1617 = vsel %vm1601, -inf, %v1567
    %v1618 = vsel %vm1602, -inf, %v1568
    %v1619 = vsel %vm1603, -inf, %v1569
    %v1620 = vsel %vm1604, -inf, %v1570
    %v1621 = vsel %vm1605, -inf, %v1571
    %v1622 = vsel %vm1606, -inf, %v1572
    %v1623 = vsel %vm1607, -inf, %v1573
    %v1624 = vsel %vm1608, -inf, %v1574
    %v1625 = vsel %vm1609, -inf, %v1575
    %v1626 = vsel %vm1610, -inf, %v1576
    %v1627 = vsel %vm1611, -inf, %v1577
    %v1628 = vsel %vm1612, -inf, %v1578
    %v1629 = vsel %vm1613, -inf, %v1579
    %v1630 = vsel %vm1614, -inf, %v1580
    %v1631 = vmax.f32 %v1615, %v1617
    %v1632 = vmax.f32 %v1616, %v1618
    %v1633 = vmax.f32 %v1631, %v1619
    %v1634 = vmax.f32 %v1632, %v1620
    %v1635 = vmax.f32 %v1633, %v1621
    %v1636 = vmax.f32 %v1634, %v1622
    %v1637 = vmax.f32 %v1635, %v1636
    %1638 = vmax.xlane.f32.xlu0 %v1637
    %v1639 = vpop.xlane.xlu0 %1638
    %v1640 = vmax.f32 %v1623, %v1625
    %v1641 = vmax.f32 %v1624, %v1626
    %v1642 = vmax.f32 %v1640, %v1627
    %v1643 = vmax.f32 %v1641, %v1628
    %v1644 = vmax.f32 %v1642, %v1629
    %v1645 = vmax.f32 %v1643, %v1630
    %v1646 = vmax.f32 %v1644, %v1645
    %1647 = vmax.xlane.f32.xlu0 %v1646
    %v1648 = vpop.xlane.xlu0 %1647
    %vm1649 = vcmp.ge.f32.partialorder %v1615, %v1639
    %vm1650 = vcmp.ge.f32.partialorder %v1616, %v1639
    %vm1651 = vcmp.ge.f32.partialorder %v1617, %v1639
    %vm1652 = vcmp.ge.f32.partialorder %v1618, %v1639
    %vm1653 = vcmp.ge.f32.partialorder %v1619, %v1639
    %vm1654 = vcmp.ge.f32.partialorder %v1620, %v1639
    %vm1655 = vcmp.ge.f32.partialorder %v1621, %v1639
    %vm1656 = vcmp.ge.f32.partialorder %v1622, %v1639
    %vm1657 = vcmp.ge.f32.partialorder %v1623, %v1648
    %vm1658 = vcmp.ge.f32.partialorder %v1624, %v1648
    %vm1659 = vcmp.ge.f32.partialorder %v1625, %v1648
    %vm1660 = vcmp.ge.f32.partialorder %v1626, %v1648
    %vm1661 = vcmp.ge.f32.partialorder %v1627, %v1648
    %vm1662 = vcmp.ge.f32.partialorder %v1628, %v1648
    %vm1663 = vcmp.ge.f32.partialorder %v1629, %v1648
    %vm1664 = vcmp.ge.f32.partialorder %v1630, %v1648
    %v1665 = vsel %vm1649, -inf, %v1615
    %v1666 = vsel %vm1650, -inf, %v1616
    %v1667 = vsel %vm1651, -inf, %v1617
    %v1668 = vsel %vm1652, -inf, %v1618
    %v1669 = vsel %vm1653, -inf, %v1619
    %v1670 = vsel %vm1654, -inf, %v1620
    %v1671 = vsel %vm1655, -inf, %v1621
    %v1672 = vsel %vm1656, -inf, %v1622
    %v1673 = vsel %vm1657, -inf, %v1623
    %v1674 = vsel %vm1658, -inf, %v1624
    %v1675 = vsel %vm1659, -inf, %v1625
    %v1676 = vsel %vm1660, -inf, %v1626
    %v1677 = vsel %vm1661, -inf, %v1627
    %v1678 = vsel %vm1662, -inf, %v1628
    %v1679 = vsel %vm1663, -inf, %v1629
    %v1680 = vsel %vm1664, -inf, %v1630
    %v1681 = vmax.f32 %v1665, %v1667
    %v1682 = vmax.f32 %v1666, %v1668
    %v1683 = vmax.f32 %v1681, %v1669
    %v1684 = vmax.f32 %v1682, %v1670
    %v1685 = vmax.f32 %v1683, %v1671
    %v1686 = vmax.f32 %v1684, %v1672
    %v1687 = vmax.f32 %v1685, %v1686
    %1688 = vmax.xlane.f32.xlu0 %v1687
    %v1689 = vpop.xlane.xlu0 %1688
    %v1690 = vmax.f32 %v1673, %v1675
    %v1691 = vmax.f32 %v1674, %v1676
    %v1692 = vmax.f32 %v1690, %v1677
    %v1693 = vmax.f32 %v1691, %v1678
    %v1694 = vmax.f32 %v1692, %v1679
    %v1695 = vmax.f32 %v1693, %v1680
    %v1696 = vmax.f32 %v1694, %v1695
    %1697 = vmax.xlane.f32.xlu0 %v1696
    %v1698 = vpop.xlane.xlu0 %1697
    %vm1699 = vcmp.ge.f32.partialorder %v1665, %v1689
    %vm1700 = vcmp.ge.f32.partialorder %v1666, %v1689
    %vm1701 = vcmp.ge.f32.partialorder %v1667, %v1689
    %vm1702 = vcmp.ge.f32.partialorder %v1668, %v1689
    %vm1703 = vcmp.ge.f32.partialorder %v1669, %v1689
    %vm1704 = vcmp.ge.f32.partialorder %v1670, %v1689
    %vm1705 = vcmp.ge.f32.partialorder %v1671, %v1689
    %vm1706 = vcmp.ge.f32.partialorder %v1672, %v1689
    %vm1707 = vcmp.ge.f32.partialorder %v1673, %v1698
    %vm1708 = vcmp.ge.f32.partialorder %v1674, %v1698
    %vm1709 = vcmp.ge.f32.partialorder %v1675, %v1698
    %vm1710 = vcmp.ge.f32.partialorder %v1676, %v1698
    %vm1711 = vcmp.ge.f32.partialorder %v1677, %v1698
    %vm1712 = vcmp.ge.f32.partialorder %v1678, %v1698
    %vm1713 = vcmp.ge.f32.partialorder %v1679, %v1698
    %vm1714 = vcmp.ge.f32.partialorder %v1680, %v1698
    %v1715 = vsel %vm1699, -inf, %v1665
    %v1716 = vsel %vm1700, -inf, %v1666
    %v1717 = vsel %vm1701, -inf, %v1667
    %v1718 = vsel %vm1702, -inf, %v1668
    %v1719 = vsel %vm1703, -inf, %v1669
    %v1720 = vsel %vm1704, -inf, %v1670
    %v1721 = vsel %vm1705, -inf, %v1671
    %v1722 = vsel %vm1706, -inf, %v1672
    %v1723 = vsel %vm1707, -inf, %v1673
    %v1724 = vsel %vm1708, -inf, %v1674
    %v1725 = vsel %vm1709, -inf, %v1675
    %v1726 = vsel %vm1710, -inf, %v1676
    %v1727 = vsel %vm1711, -inf, %v1677
    %v1728 = vsel %vm1712, -inf, %v1678
    %v1729 = vsel %vm1713, -inf, %v1679
    %v1730 = vsel %vm1714, -inf, %v1680
    %v1731 = vmax.f32 %v1715, %v1717
    %v1732 = vmax.f32 %v1716, %v1718
    %v1733 = vmax.f32 %v1731, %v1719
    %v1734 = vmax.f32 %v1732, %v1720
    %v1735 = vmax.f32 %v1733, %v1721
    %v1736 = vmax.f32 %v1734, %v1722
    %v1737 = vmax.f32 %v1735, %v1736
    %1738 = vmax.xlane.f32.xlu0 %v1737
    %v1739 = vpop.xlane.xlu0 %1738
    %v1740 = vmax.f32 %v1723, %v1725
    %v1741 = vmax.f32 %v1724, %v1726
    %v1742 = vmax.f32 %v1740, %v1727
    %v1743 = vmax.f32 %v1741, %v1728
    %v1744 = vmax.f32 %v1742, %v1729
    %v1745 = vmax.f32 %v1743, %v1730
    %v1746 = vmax.f32 %v1744, %v1745
    %1747 = vmax.xlane.f32.xlu0 %v1746
    %v1748 = vpop.xlane.xlu0 %1747
    %vm1749 = vcmp.ge.f32.partialorder %v1715, %v1739
    %vm1750 = vcmp.ge.f32.partialorder %v1716, %v1739
    %vm1751 = vcmp.ge.f32.partialorder %v1717, %v1739
    %vm1752 = vcmp.ge.f32.partialorder %v1718, %v1739
    %vm1753 = vcmp.ge.f32.partialorder %v1719, %v1739
    %vm1754 = vcmp.ge.f32.partialorder %v1720, %v1739
    %vm1755 = vcmp.ge.f32.partialorder %v1721, %v1739
    %vm1756 = vcmp.ge.f32.partialorder %v1722, %v1739
    %vm1757 = vcmp.ge.f32.partialorder %v1723, %v1748
    %vm1758 = vcmp.ge.f32.partialorder %v1724, %v1748
    %vm1759 = vcmp.ge.f32.partialorder %v1725, %v1748
    %vm1760 = vcmp.ge.f32.partialorder %v1726, %v1748
    %vm1761 = vcmp.ge.f32.partialorder %v1727, %v1748
    %vm1762 = vcmp.ge.f32.partialorder %v1728, %v1748
    %vm1763 = vcmp.ge.f32.partialorder %v1729, %v1748
    %vm1764 = vcmp.ge.f32.partialorder %v1730, %v1748
    %v1765 = vsel %vm1749, -inf, %v1715
    %v1766 = vsel %vm1750, -inf, %v1716
    %v1767 = vsel %vm1751, -inf, %v1717
    %v1768 = vsel %vm1752, -inf, %v1718
    %v1769 = vsel %vm1753, -inf, %v1719
    %v1770 = vsel %vm1754, -inf, %v1720
    %v1771 = vsel %vm1755, -inf, %v1721
    %v1772 = vsel %vm1756, -inf, %v1722
    %v1773 = vsel %vm1757, -inf, %v1723
    %v1774 = vsel %vm1758, -inf, %v1724
    %v1775 = vsel %vm1759, -inf, %v1725
    %v1776 = vsel %vm1760, -inf, %v1726
    %v1777 = vsel %vm1761, -inf, %v1727
    %v1778 = vsel %vm1762, -inf, %v1728
    %v1779 = vsel %vm1763, -inf, %v1729
    %v1780 = vsel %vm1764, -inf, %v1730
    %v1781 = vmax.f32 %v1765, %v1767
    %v1782 = vmax.f32 %v1766, %v1768
    %v1783 = vmax.f32 %v1781, %v1769
    %v1784 = vmax.f32 %v1782, %v1770
    %v1785 = vmax.f32 %v1783, %v1771
    %v1786 = vmax.f32 %v1784, %v1772
    %v1787 = vmax.f32 %v1785, %v1786
    %1788 = vmax.xlane.f32.xlu0 %v1787
    %v1789 = vpop.xlane.xlu0 %1788
    %v1790 = vmax.f32 %v1773, %v1775
    %v1791 = vmax.f32 %v1774, %v1776
    %v1792 = vmax.f32 %v1790, %v1777
    %v1793 = vmax.f32 %v1791, %v1778
    %v1794 = vmax.f32 %v1792, %v1779
    %v1795 = vmax.f32 %v1793, %v1780
    %v1796 = vmax.f32 %v1794, %v1795
    %1797 = vmax.xlane.f32.xlu0 %v1796
    %v1798 = vpop.xlane.xlu0 %1797
    %vm1799 = vcmp.ge.f32.partialorder %v1765, %v1789
    %vm1800 = vcmp.ge.f32.partialorder %v1766, %v1789
    %vm1801 = vcmp.ge.f32.partialorder %v1767, %v1789
    %vm1802 = vcmp.ge.f32.partialorder %v1768, %v1789
    %vm1803 = vcmp.ge.f32.partialorder %v1769, %v1789
    %vm1804 = vcmp.ge.f32.partialorder %v1770, %v1789
    %vm1805 = vcmp.ge.f32.partialorder %v1771, %v1789
    %vm1806 = vcmp.ge.f32.partialorder %v1772, %v1789
    %vm1807 = vcmp.ge.f32.partialorder %v1773, %v1798
    %vm1808 = vcmp.ge.f32.partialorder %v1774, %v1798
    %vm1809 = vcmp.ge.f32.partialorder %v1775, %v1798
    %vm1810 = vcmp.ge.f32.partialorder %v1776, %v1798
    %vm1811 = vcmp.ge.f32.partialorder %v1777, %v1798
    %vm1812 = vcmp.ge.f32.partialorder %v1778, %v1798
    %vm1813 = vcmp.ge.f32.partialorder %v1779, %v1798
    %vm1814 = vcmp.ge.f32.partialorder %v1780, %v1798
    %v1815 = vsel %vm1799, -inf, %v1765
    %v1816 = vsel %vm1800, -inf, %v1766
    %v1817 = vsel %vm1801, -inf, %v1767
    %v1818 = vsel %vm1802, -inf, %v1768
    %v1819 = vsel %vm1803, -inf, %v1769
    %v1820 = vsel %vm1804, -inf, %v1770
    %v1821 = vsel %vm1805, -inf, %v1771
    %v1822 = vsel %vm1806, -inf, %v1772
    %v1823 = vsel %vm1807, -inf, %v1773
    %v1824 = vsel %vm1808, -inf, %v1774
    %v1825 = vsel %vm1809, -inf, %v1775
    %v1826 = vsel %vm1810, -inf, %v1776
    %v1827 = vsel %vm1811, -inf, %v1777
    %v1828 = vsel %vm1812, -inf, %v1778
    %v1829 = vsel %vm1813, -inf, %v1779
    %v1830 = vsel %vm1814, -inf, %v1780
    %v1831 = vmax.f32 %v1815, %v1817
    %v1832 = vmax.f32 %v1816, %v1818
    %v1833 = vmax.f32 %v1831, %v1819
    %v1834 = vmax.f32 %v1832, %v1820
    %v1835 = vmax.f32 %v1833, %v1821
    %v1836 = vmax.f32 %v1834, %v1822
    %v1837 = vmax.f32 %v1835, %v1836
    %1838 = vmax.xlane.f32.xlu0 %v1837
    %v1839 = vpop.xlane.xlu0 %1838
    %v1840 = vmax.f32 %v1823, %v1825
    %v1841 = vmax.f32 %v1824, %v1826
    %v1842 = vmax.f32 %v1840, %v1827
    %v1843 = vmax.f32 %v1841, %v1828
    %v1844 = vmax.f32 %v1842, %v1829
    %v1845 = vmax.f32 %v1843, %v1830
    %v1846 = vmax.f32 %v1844, %v1845
    %1847 = vmax.xlane.f32.xlu0 %v1846
    %v1848 = vpop.xlane.xlu0 %1847
    %vm1849 = vcmp.ge.f32.partialorder %v1815, %v1839
    %vm1850 = vcmp.ge.f32.partialorder %v1816, %v1839
    %vm1851 = vcmp.ge.f32.partialorder %v1817, %v1839
    %vm1852 = vcmp.ge.f32.partialorder %v1818, %v1839
    %vm1853 = vcmp.ge.f32.partialorder %v1819, %v1839
    %vm1854 = vcmp.ge.f32.partialorder %v1820, %v1839
    %vm1855 = vcmp.ge.f32.partialorder %v1821, %v1839
    %vm1856 = vcmp.ge.f32.partialorder %v1822, %v1839
    %vm1857 = vcmp.ge.f32.partialorder %v1823, %v1848
    %vm1858 = vcmp.ge.f32.partialorder %v1824, %v1848
    %vm1859 = vcmp.ge.f32.partialorder %v1825, %v1848
    %vm1860 = vcmp.ge.f32.partialorder %v1826, %v1848
    %vm1861 = vcmp.ge.f32.partialorder %v1827, %v1848
    %vm1862 = vcmp.ge.f32.partialorder %v1828, %v1848
    %vm1863 = vcmp.ge.f32.partialorder %v1829, %v1848
    %vm1864 = vcmp.ge.f32.partialorder %v1830, %v1848
    %v1865 = vsel %vm1849, -inf, %v1815
    %v1866 = vsel %vm1850, -inf, %v1816
    %v1867 = vsel %vm1851, -inf, %v1817
    %v1868 = vsel %vm1852, -inf, %v1818
    %v1869 = vsel %vm1853, -inf, %v1819
    %v1870 = vsel %vm1854, -inf, %v1820
    %v1871 = vsel %vm1855, -inf, %v1821
    %v1872 = vsel %vm1856, -inf, %v1822
    %v1873 = vsel %vm1857, -inf, %v1823
    %v1874 = vsel %vm1858, -inf, %v1824
    %v1875 = vsel %vm1859, -inf, %v1825
    %v1876 = vsel %vm1860, -inf, %v1826
    %v1877 = vsel %vm1861, -inf, %v1827
    %v1878 = vsel %vm1862, -inf, %v1828
    %v1879 = vsel %vm1863, -inf, %v1829
    %v1880 = vsel %vm1864, -inf, %v1830
    %v1881 = vmax.f32 %v1865, %v1867
    %v1882 = vmax.f32 %v1866, %v1868
    %v1883 = vmax.f32 %v1881, %v1869
    %v1884 = vmax.f32 %v1882, %v1870
    %v1885 = vmax.f32 %v1883, %v1871
    %v1886 = vmax.f32 %v1884, %v1872
    %v1887 = vmax.f32 %v1885, %v1886
    %1888 = vmax.xlane.f32.xlu0 %v1887
    %v1889 = vpop.xlane.xlu0 %1888
    %v1890 = vmax.f32 %v1873, %v1875
    %v1891 = vmax.f32 %v1874, %v1876
    %v1892 = vmax.f32 %v1890, %v1877
    %v1893 = vmax.f32 %v1891, %v1878
    %v1894 = vmax.f32 %v1892, %v1879
    %v1895 = vmax.f32 %v1893, %v1880
    %v1896 = vmax.f32 %v1894, %v1895
    %1897 = vmax.xlane.f32.xlu0 %v1896
    %v1898 = vpop.xlane.xlu0 %1897
    %vm1899 = vcmp.ge.f32.partialorder %v1865, %v1889
    %vm1900 = vcmp.ge.f32.partialorder %v1866, %v1889
    %vm1901 = vcmp.ge.f32.partialorder %v1867, %v1889
    %vm1902 = vcmp.ge.f32.partialorder %v1868, %v1889
    %vm1903 = vcmp.ge.f32.partialorder %v1869, %v1889
    %vm1904 = vcmp.ge.f32.partialorder %v1870, %v1889
    %vm1905 = vcmp.ge.f32.partialorder %v1871, %v1889
    %vm1906 = vcmp.ge.f32.partialorder %v1872, %v1889
    %vm1907 = vcmp.ge.f32.partialorder %v1873, %v1898
    %vm1908 = vcmp.ge.f32.partialorder %v1874, %v1898
    %vm1909 = vcmp.ge.f32.partialorder %v1875, %v1898
    %vm1910 = vcmp.ge.f32.partialorder %v1876, %v1898
    %vm1911 = vcmp.ge.f32.partialorder %v1877, %v1898
    %vm1912 = vcmp.ge.f32.partialorder %v1878, %v1898
    %vm1913 = vcmp.ge.f32.partialorder %v1879, %v1898
    %vm1914 = vcmp.ge.f32.partialorder %v1880, %v1898
    %v1915 = vsel %vm1899, -inf, %v1865
    %v1916 = vsel %vm1900, -inf, %v1866
    %v1917 = vsel %vm1901, -inf, %v1867
    %v1918 = vsel %vm1902, -inf, %v1868
    %v1919 = vsel %vm1903, -inf, %v1869
    %v1920 = vsel %vm1904, -inf, %v1870
    %v1921 = vsel %vm1905, -inf, %v1871
    %v1922 = vsel %vm1906, -inf, %v1872
    %v1923 = vsel %vm1907, -inf, %v1873
    %v1924 = vsel %vm1908, -inf, %v1874
    %v1925 = vsel %vm1909, -inf, %v1875
    %v1926 = vsel %vm1910, -inf, %v1876
    %v1927 = vsel %vm1911, -inf, %v1877
    %v1928 = vsel %vm1912, -inf, %v1878
    %v1929 = vsel %vm1913, -inf, %v1879
    %v1930 = vsel %vm1914, -inf, %v1880
    %v1931 = vmax.f32 %v1915, %v1917
    %v1932 = vmax.f32 %v1916, %v1918
    %v1933 = vmax.f32 %v1931, %v1919
    %v1934 = vmax.f32 %v1932, %v1920
    %v1935 = vmax.f32 %v1933, %v1921
    %v1936 = vmax.f32 %v1934, %v1922
    %v1937 = vmax.f32 %v1935, %v1936
    %1938 = vmax.xlane.f32.xlu0 %v1937
    %v1939 = vpop.xlane.xlu0 %1938
    %v1940 = vmax.f32 %v1923, %v1925
    %v1941 = vmax.f32 %v1924, %v1926
    %v1942 = vmax.f32 %v1940, %v1927
    %v1943 = vmax.f32 %v1941, %v1928
    %v1944 = vmax.f32 %v1942, %v1929
    %v1945 = vmax.f32 %v1943, %v1930
    %v1946 = vmax.f32 %v1944, %v1945
    %1947 = vmax.xlane.f32.xlu0 %v1946
    %v1948 = vpop.xlane.xlu0 %1947
    %vm1949 = vcmp.ge.f32.partialorder %v1915, %v1939
    %vm1950 = vcmp.ge.f32.partialorder %v1916, %v1939
    %vm1951 = vcmp.ge.f32.partialorder %v1917, %v1939
    %vm1952 = vcmp.ge.f32.partialorder %v1918, %v1939
    %vm1953 = vcmp.ge.f32.partialorder %v1919, %v1939
    %vm1954 = vcmp.ge.f32.partialorder %v1920, %v1939
    %vm1955 = vcmp.ge.f32.partialorder %v1921, %v1939
    %vm1956 = vcmp.ge.f32.partialorder %v1922, %v1939
    %vm1957 = vcmp.ge.f32.partialorder %v1923, %v1948
    %vm1958 = vcmp.ge.f32.partialorder %v1924, %v1948
    %vm1959 = vcmp.ge.f32.partialorder %v1925, %v1948
    %vm1960 = vcmp.ge.f32.partialorder %v1926, %v1948
    %vm1961 = vcmp.ge.f32.partialorder %v1927, %v1948
    %vm1962 = vcmp.ge.f32.partialorder %v1928, %v1948
    %vm1963 = vcmp.ge.f32.partialorder %v1929, %v1948
    %vm1964 = vcmp.ge.f32.partialorder %v1930, %v1948
    %v1965 = vsel %vm1949, -inf, %v1915
    %v1966 = vsel %vm1950, -inf, %v1916
    %v1967 = vsel %vm1951, -inf, %v1917
    %v1968 = vsel %vm1952, -inf, %v1918
    %v1969 = vsel %vm1953, -inf, %v1919
    %v1970 = vsel %vm1954, -inf, %v1920
    %v1971 = vsel %vm1955, -inf, %v1921
    %v1972 = vsel %vm1956, -inf, %v1922
    %v1973 = vsel %vm1957, -inf, %v1923
    %v1974 = vsel %vm1958, -inf, %v1924
    %v1975 = vsel %vm1959, -inf, %v1925
    %v1976 = vsel %vm1960, -inf, %v1926
    %v1977 = vsel %vm1961, -inf, %v1927
    %v1978 = vsel %vm1962, -inf, %v1928
    %v1979 = vsel %vm1963, -inf, %v1929
    %v1980 = vsel %vm1964, -inf, %v1930
    %v1981 = vmax.f32 %v1965, %v1967
    %v1982 = vmax.f32 %v1966, %v1968
    %v1983 = vmax.f32 %v1981, %v1969
    %v1984 = vmax.f32 %v1982, %v1970
    %v1985 = vmax.f32 %v1983, %v1971
    %v1986 = vmax.f32 %v1984, %v1972
    %v1987 = vmax.f32 %v1985, %v1986
    %1988 = vmax.xlane.f32.xlu0 %v1987
    %v1989 = vpop.xlane.xlu0 %1988
    %v1990 = vmax.f32 %v1973, %v1975
    %v1991 = vmax.f32 %v1974, %v1976
    %v1992 = vmax.f32 %v1990, %v1977
    %v1993 = vmax.f32 %v1991, %v1978
    %v1994 = vmax.f32 %v1992, %v1979
    %v1995 = vmax.f32 %v1993, %v1980
    %v1996 = vmax.f32 %v1994, %v1995
    %1997 = vmax.xlane.f32.xlu0 %v1996
    %v1998 = vpop.xlane.xlu0 %1997
    %vm1999 = vcmp.ge.f32.partialorder %v1965, %v1989
    %vm2000 = vcmp.ge.f32.partialorder %v1966, %v1989
    %vm2001 = vcmp.ge.f32.partialorder %v1967, %v1989
    %vm2002 = vcmp.ge.f32.partialorder %v1968, %v1989
    %vm2003 = vcmp.ge.f32.partialorder %v1969, %v1989
    %vm2004 = vcmp.ge.f32.partialorder %v1970, %v1989
    %vm2005 = vcmp.ge.f32.partialorder %v1971, %v1989
    %vm2006 = vcmp.ge.f32.partialorder %v1972, %v1989
    %vm2007 = vcmp.ge.f32.partialorder %v1973, %v1998
    %vm2008 = vcmp.ge.f32.partialorder %v1974, %v1998
    %vm2009 = vcmp.ge.f32.partialorder %v1975, %v1998
    %vm2010 = vcmp.ge.f32.partialorder %v1976, %v1998
    %vm2011 = vcmp.ge.f32.partialorder %v1977, %v1998
    %vm2012 = vcmp.ge.f32.partialorder %v1978, %v1998
    %vm2013 = vcmp.ge.f32.partialorder %v1979, %v1998
    %vm2014 = vcmp.ge.f32.partialorder %v1980, %v1998
    %v2015 = vsel %vm1999, -inf, %v1965
    %v2016 = vsel %vm2000, -inf, %v1966
    %v2017 = vsel %vm2001, -inf, %v1967
    %v2018 = vsel %vm2002, -inf, %v1968
    %v2019 = vsel %vm2003, -inf, %v1969
    %v2020 = vsel %vm2004, -inf, %v1970
    %v2021 = vsel %vm2005, -inf, %v1971
    %v2022 = vsel %vm2006, -inf, %v1972
    %v2023 = vsel %vm2007, -inf, %v1973
    %v2024 = vsel %vm2008, -inf, %v1974
    %v2025 = vsel %vm2009, -inf, %v1975
    %v2026 = vsel %vm2010, -inf, %v1976
    %v2027 = vsel %vm2011, -inf, %v1977
    %v2028 = vsel %vm2012, -inf, %v1978
    %v2029 = vsel %vm2013, -inf, %v1979
    %v2030 = vsel %vm2014, -inf, %v1980
    %v2031 = vmax.f32 %v2015, %v2017
    %v2032 = vmax.f32 %v2016, %v2018
    %v2033 = vmax.f32 %v2031, %v2019
    %v2034 = vmax.f32 %v2032, %v2020
    %v2035 = vmax.f32 %v2033, %v2021
    %v2036 = vmax.f32 %v2034, %v2022
    %v2037 = vmax.f32 %v2035, %v2036
    %2038 = vmax.xlane.f32.xlu0 %v2037
    %v2039 = vpop.xlane.xlu0 %2038
    %v2040 = vmax.f32 %v2023, %v2025
    %v2041 = vmax.f32 %v2024, %v2026
    %v2042 = vmax.f32 %v2040, %v2027
    %v2043 = vmax.f32 %v2041, %v2028
    %v2044 = vmax.f32 %v2042, %v2029
    %v2045 = vmax.f32 %v2043, %v2030
    %v2046 = vmax.f32 %v2044, %v2045
    %2047 = vmax.xlane.f32.xlu0 %v2046
    %v2048 = vpop.xlane.xlu0 %2047
    %vm2049 = vcmp.ge.f32.partialorder %v2015, %v2039
    %vm2050 = vcmp.ge.f32.partialorder %v2016, %v2039
    %vm2051 = vcmp.ge.f32.partialorder %v2017, %v2039
    %vm2052 = vcmp.ge.f32.partialorder %v2018, %v2039
    %vm2053 = vcmp.ge.f32.partialorder %v2019, %v2039
    %vm2054 = vcmp.ge.f32.partialorder %v2020, %v2039
    %vm2055 = vcmp.ge.f32.partialorder %v2021, %v2039
    %vm2056 = vcmp.ge.f32.partialorder %v2022, %v2039
    %vm2057 = vcmp.ge.f32.partialorder %v2023, %v2048
    %vm2058 = vcmp.ge.f32.partialorder %v2024, %v2048
    %vm2059 = vcmp.ge.f32.partialorder %v2025, %v2048
    %vm2060 = vcmp.ge.f32.partialorder %v2026, %v2048
    %vm2061 = vcmp.ge.f32.partialorder %v2027, %v2048
    %vm2062 = vcmp.ge.f32.partialorder %v2028, %v2048
    %vm2063 = vcmp.ge.f32.partialorder %v2029, %v2048
    %vm2064 = vcmp.ge.f32.partialorder %v2030, %v2048
    %v2065 = vsel %vm2049, -inf, %v2015
    %v2066 = vsel %vm2050, -inf, %v2016
    %v2067 = vsel %vm2051, -inf, %v2017
    %v2068 = vsel %vm2052, -inf, %v2018
    %v2069 = vsel %vm2053, -inf, %v2019
    %v2070 = vsel %vm2054, -inf, %v2020
    %v2071 = vsel %vm2055, -inf, %v2021
    %v2072 = vsel %vm2056, -inf, %v2022
    %v2073 = vsel %vm2057, -inf, %v2023
    %v2074 = vsel %vm2058, -inf, %v2024
    %v2075 = vsel %vm2059, -inf, %v2025
    %v2076 = vsel %vm2060, -inf, %v2026
    %v2077 = vsel %vm2061, -inf, %v2027
    %v2078 = vsel %vm2062, -inf, %v2028
    %v2079 = vsel %vm2063, -inf, %v2029
    %v2080 = vsel %vm2064, -inf, %v2030
    %v2081 = vmax.f32 %v2065, %v2067
    %v2082 = vmax.f32 %v2066, %v2068
    %v2083 = vmax.f32 %v2081, %v2069
    %v2084 = vmax.f32 %v2082, %v2070
    %v2085 = vmax.f32 %v2083, %v2071
    %v2086 = vmax.f32 %v2084, %v2072
    %v2087 = vmax.f32 %v2085, %v2086
    %2088 = vmax.xlane.f32.xlu0 %v2087
    %v2089 = vpop.xlane.xlu0 %2088
    %v2090 = vmax.f32 %v2073, %v2075
    %v2091 = vmax.f32 %v2074, %v2076
    %v2092 = vmax.f32 %v2090, %v2077
    %v2093 = vmax.f32 %v2091, %v2078
    %v2094 = vmax.f32 %v2092, %v2079
    %v2095 = vmax.f32 %v2093, %v2080
    %v2096 = vmax.f32 %v2094, %v2095
    %2097 = vmax.xlane.f32.xlu0 %v2096
    %v2098 = vpop.xlane.xlu0 %2097
    %vm2099 = vcmp.ge.f32.partialorder %v2065, %v2089
    %vm2100 = vcmp.ge.f32.partialorder %v2066, %v2089
    %vm2101 = vcmp.ge.f32.partialorder %v2067, %v2089
    %vm2102 = vcmp.ge.f32.partialorder %v2068, %v2089
    %vm2103 = vcmp.ge.f32.partialorder %v2069, %v2089
    %vm2104 = vcmp.ge.f32.partialorder %v2070, %v2089
    %vm2105 = vcmp.ge.f32.partialorder %v2071, %v2089
    %vm2106 = vcmp.ge.f32.partialorder %v2072, %v2089
    %vm2107 = vcmp.ge.f32.partialorder %v2073, %v2098
    %vm2108 = vcmp.ge.f32.partialorder %v2074, %v2098
    %vm2109 = vcmp.ge.f32.partialorder %v2075, %v2098
    %vm2110 = vcmp.ge.f32.partialorder %v2076, %v2098
    %vm2111 = vcmp.ge.f32.partialorder %v2077, %v2098
    %vm2112 = vcmp.ge.f32.partialorder %v2078, %v2098
    %vm2113 = vcmp.ge.f32.partialorder %v2079, %v2098
    %vm2114 = vcmp.ge.f32.partialorder %v2080, %v2098
    %v2115 = vsel %vm2099, -inf, %v2065
    %v2116 = vsel %vm2100, -inf, %v2066
    %v2117 = vsel %vm2101, -inf, %v2067
    %v2118 = vsel %vm2102, -inf, %v2068
    %v2119 = vsel %vm2103, -inf, %v2069
    %v2120 = vsel %vm2104, -inf, %v2070
    %v2121 = vsel %vm2105, -inf, %v2071
    %v2122 = vsel %vm2106, -inf, %v2072
    %v2123 = vsel %vm2107, -inf, %v2073
    %v2124 = vsel %vm2108, -inf, %v2074
    %v2125 = vsel %vm2109, -inf, %v2075
    %v2126 = vsel %vm2110, -inf, %v2076
    %v2127 = vsel %vm2111, -inf, %v2077
    %v2128 = vsel %vm2112, -inf, %v2078
    %v2129 = vsel %vm2113, -inf, %v2079
    %v2130 = vsel %vm2114, -inf, %v2080
    %v2131 = vmax.f32 %v2115, %v2117
    %v2132 = vmax.f32 %v2116, %v2118
    %v2133 = vmax.f32 %v2131, %v2119
    %v2134 = vmax.f32 %v2132, %v2120
    %v2135 = vmax.f32 %v2133, %v2121
    %v2136 = vmax.f32 %v2134, %v2122
    %v2137 = vmax.f32 %v2135, %v2136
    %2138 = vmax.xlane.f32.xlu0 %v2137
    %v2139 = vpop.xlane.xlu0 %2138
    %v2140 = vmax.f32 %v2123, %v2125
    %v2141 = vmax.f32 %v2124, %v2126
    %v2142 = vmax.f32 %v2140, %v2127
    %v2143 = vmax.f32 %v2141, %v2128
    %v2144 = vmax.f32 %v2142, %v2129
    %v2145 = vmax.f32 %v2143, %v2130
    %v2146 = vmax.f32 %v2144, %v2145
    %2147 = vmax.xlane.f32.xlu0 %v2146
    %v2148 = vpop.xlane.xlu0 %2147
    %vm2149 = vcmp.ge.f32.partialorder %v2115, %v2139
    %vm2150 = vcmp.ge.f32.partialorder %v2116, %v2139
    %vm2151 = vcmp.ge.f32.partialorder %v2117, %v2139
    %vm2152 = vcmp.ge.f32.partialorder %v2118, %v2139
    %vm2153 = vcmp.ge.f32.partialorder %v2119, %v2139
    %vm2154 = vcmp.ge.f32.partialorder %v2120, %v2139
    %vm2155 = vcmp.ge.f32.partialorder %v2121, %v2139
    %vm2156 = vcmp.ge.f32.partialorder %v2122, %v2139
    %vm2157 = vcmp.ge.f32.partialorder %v2123, %v2148
    %vm2158 = vcmp.ge.f32.partialorder %v2124, %v2148
    %vm2159 = vcmp.ge.f32.partialorder %v2125, %v2148
    %vm2160 = vcmp.ge.f32.partialorder %v2126, %v2148
    %vm2161 = vcmp.ge.f32.partialorder %v2127, %v2148
    %vm2162 = vcmp.ge.f32.partialorder %v2128, %v2148
    %vm2163 = vcmp.ge.f32.partialorder %v2129, %v2148
    %vm2164 = vcmp.ge.f32.partialorder %v2130, %v2148
    %v2165 = vsel %vm2149, -inf, %v2115
    %v2166 = vsel %vm2150, -inf, %v2116
    %v2167 = vsel %vm2151, -inf, %v2117
    %v2168 = vsel %vm2152, -inf, %v2118
    %v2169 = vsel %vm2153, -inf, %v2119
    %v2170 = vsel %vm2154, -inf, %v2120
    %v2171 = vsel %vm2155, -inf, %v2121
    %v2172 = vsel %vm2156, -inf, %v2122
    %v2173 = vsel %vm2157, -inf, %v2123
    %v2174 = vsel %vm2158, -inf, %v2124
    %v2175 = vsel %vm2159, -inf, %v2125
    %v2176 = vsel %vm2160, -inf, %v2126
    %v2177 = vsel %vm2161, -inf, %v2127
    %v2178 = vsel %vm2162, -inf, %v2128
    %v2179 = vsel %vm2163, -inf, %v2129
    %v2180 = vsel %vm2164, -inf, %v2130
    %v2181 = vmax.f32 %v2165, %v2167
    %v2182 = vmax.f32 %v2166, %v2168
    %v2183 = vmax.f32 %v2181, %v2169
    %v2184 = vmax.f32 %v2182, %v2170
    %v2185 = vmax.f32 %v2183, %v2171
    %v2186 = vmax.f32 %v2184, %v2172
    %v2187 = vmax.f32 %v2185, %v2186
    %2188 = vmax.xlane.f32.xlu0 %v2187
    %v2189 = vpop.xlane.xlu0 %2188
    %v2190 = vmax.f32 %v2173, %v2175
    %v2191 = vmax.f32 %v2174, %v2176
    %v2192 = vmax.f32 %v2190, %v2177
    %v2193 = vmax.f32 %v2191, %v2178
    %v2194 = vmax.f32 %v2192, %v2179
    %v2195 = vmax.f32 %v2193, %v2180
    %v2196 = vmax.f32 %v2194, %v2195
    %2197 = vmax.xlane.f32.xlu0 %v2196
    %v2198 = vpop.xlane.xlu0 %2197
    %vm2199 = vcmp.ge.f32.partialorder %v2165, %v2189
    %vm2200 = vcmp.ge.f32.partialorder %v2166, %v2189
    %vm2201 = vcmp.ge.f32.partialorder %v2167, %v2189
    %vm2202 = vcmp.ge.f32.partialorder %v2168, %v2189
    %vm2203 = vcmp.ge.f32.partialorder %v2169, %v2189
    %vm2204 = vcmp.ge.f32.partialorder %v2170, %v2189
    %vm2205 = vcmp.ge.f32.partialorder %v2171, %v2189
    %vm2206 = vcmp.ge.f32.partialorder %v2172, %v2189
    %vm2207 = vcmp.ge.f32.partialorder %v2173, %v2198
    %vm2208 = vcmp.ge.f32.partialorder %v2174, %v2198
    %vm2209 = vcmp.ge.f32.partialorder %v2175, %v2198
    %vm2210 = vcmp.ge.f32.partialorder %v2176, %v2198
    %vm2211 = vcmp.ge.f32.partialorder %v2177, %v2198
    %vm2212 = vcmp.ge.f32.partialorder %v2178, %v2198
    %vm2213 = vcmp.ge.f32.partialorder %v2179, %v2198
    %vm2214 = vcmp.ge.f32.partialorder %v2180, %v2198
    %v2215 = vsel %vm2199, -inf, %v2165
    %v2216 = vsel %vm2200, -inf, %v2166
    %v2217 = vsel %vm2201, -inf, %v2167
    %v2218 = vsel %vm2202, -inf, %v2168
    %v2219 = vsel %vm2203, -inf, %v2169
    %v2220 = vsel %vm2204, -inf, %v2170
    %v2221 = vsel %vm2205, -inf, %v2171
    %v2222 = vsel %vm2206, -inf, %v2172
    %v2223 = vsel %vm2207, -inf, %v2173
    %v2224 = vsel %vm2208, -inf, %v2174
    %v2225 = vsel %vm2209, -inf, %v2175
    %v2226 = vsel %vm2210, -inf, %v2176
    %v2227 = vsel %vm2211, -inf, %v2177
    %v2228 = vsel %vm2212, -inf, %v2178
    %v2229 = vsel %vm2213, -inf, %v2179
    %v2230 = vsel %vm2214, -inf, %v2180
    %v2231 = vmax.f32 %v2215, %v2217
    %v2232 = vmax.f32 %v2216, %v2218
    %v2233 = vmax.f32 %v2231, %v2219
    %v2234 = vmax.f32 %v2232, %v2220
    %v2235 = vmax.f32 %v2233, %v2221
    %v2236 = vmax.f32 %v2234, %v2222
    %v2237 = vmax.f32 %v2235, %v2236
    %2238 = vmax.xlane.f32.xlu0 %v2237
    %v2239 = vpop.xlane.xlu0 %2238
    %v2240 = vmax.f32 %v2223, %v2225
    %v2241 = vmax.f32 %v2224, %v2226
    %v2242 = vmax.f32 %v2240, %v2227
    %v2243 = vmax.f32 %v2241, %v2228
    %v2244 = vmax.f32 %v2242, %v2229
    %v2245 = vmax.f32 %v2243, %v2230
    %v2246 = vmax.f32 %v2244, %v2245
    %2247 = vmax.xlane.f32.xlu0 %v2246
    %v2248 = vpop.xlane.xlu0 %2247
    %vm2249 = vcmp.ge.f32.partialorder %v2215, %v2239
    %vm2250 = vcmp.ge.f32.partialorder %v2216, %v2239
    %vm2251 = vcmp.ge.f32.partialorder %v2217, %v2239
    %vm2252 = vcmp.ge.f32.partialorder %v2218, %v2239
    %vm2253 = vcmp.ge.f32.partialorder %v2219, %v2239
    %vm2254 = vcmp.ge.f32.partialorder %v2220, %v2239
    %vm2255 = vcmp.ge.f32.partialorder %v2221, %v2239
    %vm2256 = vcmp.ge.f32.partialorder %v2222, %v2239
    %vm2257 = vcmp.ge.f32.partialorder %v2223, %v2248
    %vm2258 = vcmp.ge.f32.partialorder %v2224, %v2248
    %vm2259 = vcmp.ge.f32.partialorder %v2225, %v2248
    %vm2260 = vcmp.ge.f32.partialorder %v2226, %v2248
    %vm2261 = vcmp.ge.f32.partialorder %v2227, %v2248
    %vm2262 = vcmp.ge.f32.partialorder %v2228, %v2248
    %vm2263 = vcmp.ge.f32.partialorder %v2229, %v2248
    %vm2264 = vcmp.ge.f32.partialorder %v2230, %v2248
    %v2265 = vsel %vm2249, -inf, %v2215
    %v2266 = vsel %vm2250, -inf, %v2216
    %v2267 = vsel %vm2251, -inf, %v2217
    %v2268 = vsel %vm2252, -inf, %v2218
    %v2269 = vsel %vm2253, -inf, %v2219
    %v2270 = vsel %vm2254, -inf, %v2220
    %v2271 = vsel %vm2255, -inf, %v2221
    %v2272 = vsel %vm2256, -inf, %v2222
    %v2273 = vsel %vm2257, -inf, %v2223
    %v2274 = vsel %vm2258, -inf, %v2224
    %v2275 = vsel %vm2259, -inf, %v2225
    %v2276 = vsel %vm2260, -inf, %v2226
    %v2277 = vsel %vm2261, -inf, %v2227
    %v2278 = vsel %vm2262, -inf, %v2228
    %v2279 = vsel %vm2263, -inf, %v2229
    %v2280 = vsel %vm2264, -inf, %v2230
    %v2281 = vmax.f32 %v2265, %v2267
    %v2282 = vmax.f32 %v2266, %v2268
    %v2283 = vmax.f32 %v2281, %v2269
    %v2284 = vmax.f32 %v2282, %v2270
    %v2285 = vmax.f32 %v2283, %v2271
    %v2286 = vmax.f32 %v2284, %v2272
    %v2287 = vmax.f32 %v2285, %v2286
    %2288 = vmax.xlane.f32.xlu0 %v2287
    %v2289 = vpop.xlane.xlu0 %2288
    %v2290 = vmax.f32 %v2273, %v2275
    %v2291 = vmax.f32 %v2274, %v2276
    %v2292 = vmax.f32 %v2290, %v2277
    %v2293 = vmax.f32 %v2291, %v2278
    %v2294 = vmax.f32 %v2292, %v2279
    %v2295 = vmax.f32 %v2293, %v2280
    %v2296 = vmax.f32 %v2294, %v2295
    %2297 = vmax.xlane.f32.xlu0 %v2296
    %v2298 = vpop.xlane.xlu0 %2297
    %vm2299 = vcmp.ge.f32.partialorder %v2265, %v2289
    %vm2300 = vcmp.ge.f32.partialorder %v2266, %v2289
    %vm2301 = vcmp.ge.f32.partialorder %v2267, %v2289
    %vm2302 = vcmp.ge.f32.partialorder %v2268, %v2289
    %vm2303 = vcmp.ge.f32.partialorder %v2269, %v2289
    %vm2304 = vcmp.ge.f32.partialorder %v2270, %v2289
    %vm2305 = vcmp.ge.f32.partialorder %v2271, %v2289
    %vm2306 = vcmp.ge.f32.partialorder %v2272, %v2289
    %vm2307 = vcmp.ge.f32.partialorder %v2273, %v2298
    %vm2308 = vcmp.ge.f32.partialorder %v2274, %v2298
    %vm2309 = vcmp.ge.f32.partialorder %v2275, %v2298
    %vm2310 = vcmp.ge.f32.partialorder %v2276, %v2298
    %vm2311 = vcmp.ge.f32.partialorder %v2277, %v2298
    %vm2312 = vcmp.ge.f32.partialorder %v2278, %v2298
    %vm2313 = vcmp.ge.f32.partialorder %v2279, %v2298
    %vm2314 = vcmp.ge.f32.partialorder %v2280, %v2298
    %v2315 = vsel %vm2299, -inf, %v2265
    %v2316 = vsel %vm2300, -inf, %v2266
    %v2317 = vsel %vm2301, -inf, %v2267
    %v2318 = vsel %vm2302, -inf, %v2268
    %v2319 = vsel %vm2303, -inf, %v2269
    %v2320 = vsel %vm2304, -inf, %v2270
    %v2321 = vsel %vm2305, -inf, %v2271
    %v2322 = vsel %vm2306, -inf, %v2272
    %v2323 = vsel %vm2307, -inf, %v2273
    %v2324 = vsel %vm2308, -inf, %v2274
    %v2325 = vsel %vm2309, -inf, %v2275
    %v2326 = vsel %vm2310, -inf, %v2276
    %v2327 = vsel %vm2311, -inf, %v2277
    %v2328 = vsel %vm2312, -inf, %v2278
    %v2329 = vsel %vm2313, -inf, %v2279
    %v2330 = vsel %vm2314, -inf, %v2280
    %v2331 = vmax.f32 %v2315, %v2317
    %v2332 = vmax.f32 %v2316, %v2318
    %v2333 = vmax.f32 %v2331, %v2319
    %v2334 = vmax.f32 %v2332, %v2320
    %v2335 = vmax.f32 %v2333, %v2321
    %v2336 = vmax.f32 %v2334, %v2322
    %v2337 = vmax.f32 %v2335, %v2336
    %2338 = vmax.xlane.f32.xlu0 %v2337
    %v2339 = vpop.xlane.xlu0 %2338
    %v2340 = vmax.f32 %v2323, %v2325
    %v2341 = vmax.f32 %v2324, %v2326
    %v2342 = vmax.f32 %v2340, %v2327
    %v2343 = vmax.f32 %v2341, %v2328
    %v2344 = vmax.f32 %v2342, %v2329
    %v2345 = vmax.f32 %v2343, %v2330
    %v2346 = vmax.f32 %v2344, %v2345
    %2347 = vmax.xlane.f32.xlu0 %v2346
    %v2348 = vpop.xlane.xlu0 %2347
    %vm2349 = vcmp.ge.f32.partialorder %v2315, %v2339
    %vm2350 = vcmp.ge.f32.partialorder %v2316, %v2339
    %vm2351 = vcmp.ge.f32.partialorder %v2317, %v2339
    %vm2352 = vcmp.ge.f32.partialorder %v2318, %v2339
    %vm2353 = vcmp.ge.f32.partialorder %v2319, %v2339
    %vm2354 = vcmp.ge.f32.partialorder %v2320, %v2339
    %vm2355 = vcmp.ge.f32.partialorder %v2321, %v2339
    %vm2356 = vcmp.ge.f32.partialorder %v2322, %v2339
    %vm2357 = vcmp.ge.f32.partialorder %v2323, %v2348
    %vm2358 = vcmp.ge.f32.partialorder %v2324, %v2348
    %vm2359 = vcmp.ge.f32.partialorder %v2325, %v2348
    %vm2360 = vcmp.ge.f32.partialorder %v2326, %v2348
    %vm2361 = vcmp.ge.f32.partialorder %v2327, %v2348
    %vm2362 = vcmp.ge.f32.partialorder %v2328, %v2348
    %vm2363 = vcmp.ge.f32.partialorder %v2329, %v2348
    %vm2364 = vcmp.ge.f32.partialorder %v2330, %v2348
    %v2365 = vsel %vm2349, -inf, %v2315
    %v2366 = vsel %vm2350, -inf, %v2316
    %v2367 = vsel %vm2351, -inf, %v2317
    %v2368 = vsel %vm2352, -inf, %v2318
    %v2369 = vsel %vm2353, -inf, %v2319
    %v2370 = vsel %vm2354, -inf, %v2320
    %v2371 = vsel %vm2355, -inf, %v2321
    %v2372 = vsel %vm2356, -inf, %v2322
    %v2373 = vsel %vm2357, -inf, %v2323
    %v2374 = vsel %vm2358, -inf, %v2324
    %v2375 = vsel %vm2359, -inf, %v2325
    %v2376 = vsel %vm2360, -inf, %v2326
    %v2377 = vsel %vm2361, -inf, %v2327
    %v2378 = vsel %vm2362, -inf, %v2328
    %v2379 = vsel %vm2363, -inf, %v2329
    %v2380 = vsel %vm2364, -inf, %v2330
    %v2381 = vmax.f32 %v2365, %v2367
    %v2382 = vmax.f32 %v2366, %v2368
    %v2383 = vmax.f32 %v2381, %v2369
    %v2384 = vmax.f32 %v2382, %v2370
    %v2385 = vmax.f32 %v2383, %v2371
    %v2386 = vmax.f32 %v2384, %v2372
    %v2387 = vmax.f32 %v2385, %v2386
    %2388 = vmax.xlane.f32.xlu0 %v2387
    %v2389 = vpop.xlane.xlu0 %2388
    %v2390 = vmax.f32 %v2373, %v2375
    %v2391 = vmax.f32 %v2374, %v2376
    %v2392 = vmax.f32 %v2390, %v2377
    %v2393 = vmax.f32 %v2391, %v2378
    %v2394 = vmax.f32 %v2392, %v2379
    %v2395 = vmax.f32 %v2393, %v2380
    %v2396 = vmax.f32 %v2394, %v2395
    %2397 = vmax.xlane.f32.xlu0 %v2396
    %v2398 = vpop.xlane.xlu0 %2397
    %vm2399 = vcmp.ge.f32.partialorder %v2365, %v2389
    %vm2400 = vcmp.ge.f32.partialorder %v2366, %v2389
    %vm2401 = vcmp.ge.f32.partialorder %v2367, %v2389
    %vm2402 = vcmp.ge.f32.partialorder %v2368, %v2389
    %vm2403 = vcmp.ge.f32.partialorder %v2369, %v2389
    %vm2404 = vcmp.ge.f32.partialorder %v2370, %v2389
    %vm2405 = vcmp.ge.f32.partialorder %v2371, %v2389
    %vm2406 = vcmp.ge.f32.partialorder %v2372, %v2389
    %vm2407 = vcmp.ge.f32.partialorder %v2373, %v2398
    %vm2408 = vcmp.ge.f32.partialorder %v2374, %v2398
    %vm2409 = vcmp.ge.f32.partialorder %v2375, %v2398
    %vm2410 = vcmp.ge.f32.partialorder %v2376, %v2398
    %vm2411 = vcmp.ge.f32.partialorder %v2377, %v2398
    %vm2412 = vcmp.ge.f32.partialorder %v2378, %v2398
    %vm2413 = vcmp.ge.f32.partialorder %v2379, %v2398
    %vm2414 = vcmp.ge.f32.partialorder %v2380, %v2398
    %v2415 = vsel %vm2399, -inf, %v2365
    %v2416 = vsel %vm2400, -inf, %v2366
    %v2417 = vsel %vm2401, -inf, %v2367
    %v2418 = vsel %vm2402, -inf, %v2368
    %v2419 = vsel %vm2403, -inf, %v2369
    %v2420 = vsel %vm2404, -inf, %v2370
    %v2421 = vsel %vm2405, -inf, %v2371
    %v2422 = vsel %vm2406, -inf, %v2372
    %v2423 = vsel %vm2407, -inf, %v2373
    %v2424 = vsel %vm2408, -inf, %v2374
    %v2425 = vsel %vm2409, -inf, %v2375
    %v2426 = vsel %vm2410, -inf, %v2376
    %v2427 = vsel %vm2411, -inf, %v2377
    %v2428 = vsel %vm2412, -inf, %v2378
    %v2429 = vsel %vm2413, -inf, %v2379
    %v2430 = vsel %vm2414, -inf, %v2380
    %v2431 = vmax.f32 %v2415, %v2417
    %v2432 = vmax.f32 %v2416, %v2418
    %v2433 = vmax.f32 %v2431, %v2419
    %v2434 = vmax.f32 %v2432, %v2420
    %v2435 = vmax.f32 %v2433, %v2421
    %v2436 = vmax.f32 %v2434, %v2422
    %v2437 = vmax.f32 %v2435, %v2436
    %2438 = vmax.xlane.f32.xlu0 %v2437
    %v2439 = vpop.xlane.xlu0 %2438
    %v2440 = vmax.f32 %v2423, %v2425
    %v2441 = vmax.f32 %v2424, %v2426
    %v2442 = vmax.f32 %v2440, %v2427
    %v2443 = vmax.f32 %v2441, %v2428
    %v2444 = vmax.f32 %v2442, %v2429
    %v2445 = vmax.f32 %v2443, %v2430
    %v2446 = vmax.f32 %v2444, %v2445
    %2447 = vmax.xlane.f32.xlu0 %v2446
    %v2448 = vpop.xlane.xlu0 %2447
    %vm2449 = vcmp.ge.f32.partialorder %v2415, %v2439
    %vm2450 = vcmp.ge.f32.partialorder %v2416, %v2439
    %vm2451 = vcmp.ge.f32.partialorder %v2417, %v2439
    %vm2452 = vcmp.ge.f32.partialorder %v2418, %v2439
    %vm2453 = vcmp.ge.f32.partialorder %v2419, %v2439
    %vm2454 = vcmp.ge.f32.partialorder %v2420, %v2439
    %vm2455 = vcmp.ge.f32.partialorder %v2421, %v2439
    %vm2456 = vcmp.ge.f32.partialorder %v2422, %v2439
    %vm2457 = vcmp.ge.f32.partialorder %v2423, %v2448
    %vm2458 = vcmp.ge.f32.partialorder %v2424, %v2448
    %vm2459 = vcmp.ge.f32.partialorder %v2425, %v2448
    %vm2460 = vcmp.ge.f32.partialorder %v2426, %v2448
    %vm2461 = vcmp.ge.f32.partialorder %v2427, %v2448
    %vm2462 = vcmp.ge.f32.partialorder %v2428, %v2448
    %vm2463 = vcmp.ge.f32.partialorder %v2429, %v2448
    %vm2464 = vcmp.ge.f32.partialorder %v2430, %v2448
    %v2465 = vsel %vm2449, -inf, %v2415
    %v2466 = vsel %vm2450, -inf, %v2416
    %v2467 = vsel %vm2451, -inf, %v2417
    %v2468 = vsel %vm2452, -inf, %v2418
    %v2469 = vsel %vm2453, -inf, %v2419
    %v2470 = vsel %vm2454, -inf, %v2420
    %v2471 = vsel %vm2455, -inf, %v2421
    %v2472 = vsel %vm2456, -inf, %v2422
    %v2473 = vsel %vm2457, -inf, %v2423
    %v2474 = vsel %vm2458, -inf, %v2424
    %v2475 = vsel %vm2459, -inf, %v2425
    %v2476 = vsel %vm2460, -inf, %v2426
    %v2477 = vsel %vm2461, -inf, %v2427
    %v2478 = vsel %vm2462, -inf, %v2428
    %v2479 = vsel %vm2463, -inf, %v2429
    %v2480 = vsel %vm2464, -inf, %v2430
    %v2481 = vmax.f32 %v2465, %v2467
    %v2482 = vmax.f32 %v2466, %v2468
    %v2483 = vmax.f32 %v2481, %v2469
    %v2484 = vmax.f32 %v2482, %v2470
    %v2485 = vmax.f32 %v2483, %v2471
    %v2486 = vmax.f32 %v2484, %v2472
    %v2487 = vmax.f32 %v2485, %v2486
    %2488 = vmax.xlane.f32.xlu0 %v2487
    %v2489 = vpop.xlane.xlu0 %2488
    %v2490 = vmax.f32 %v2473, %v2475
    %v2491 = vmax.f32 %v2474, %v2476
    %v2492 = vmax.f32 %v2490, %v2477
    %v2493 = vmax.f32 %v2491, %v2478
    %v2494 = vmax.f32 %v2492, %v2479
    %v2495 = vmax.f32 %v2493, %v2480
    %v2496 = vmax.f32 %v2494, %v2495
    %2497 = vmax.xlane.f32.xlu0 %v2496
    %v2498 = vpop.xlane.xlu0 %2497
    %vm2499 = vcmp.ge.f32.partialorder %v2465, %v2489
    %vm2500 = vcmp.ge.f32.partialorder %v2466, %v2489
    %vm2501 = vcmp.ge.f32.partialorder %v2467, %v2489
    %vm2502 = vcmp.ge.f32.partialorder %v2468, %v2489
    %vm2503 = vcmp.ge.f32.partialorder %v2469, %v2489
    %vm2504 = vcmp.ge.f32.partialorder %v2470, %v2489
    %vm2505 = vcmp.ge.f32.partialorder %v2471, %v2489
    %vm2506 = vcmp.ge.f32.partialorder %v2472, %v2489
    %vm2507 = vcmp.ge.f32.partialorder %v2473, %v2498
    %vm2508 = vcmp.ge.f32.partialorder %v2474, %v2498
    %vm2509 = vcmp.ge.f32.partialorder %v2475, %v2498
    %vm2510 = vcmp.ge.f32.partialorder %v2476, %v2498
    %vm2511 = vcmp.ge.f32.partialorder %v2477, %v2498
    %vm2512 = vcmp.ge.f32.partialorder %v2478, %v2498
    %vm2513 = vcmp.ge.f32.partialorder %v2479, %v2498
    %vm2514 = vcmp.ge.f32.partialorder %v2480, %v2498
    %v2515 = vsel %vm2499, -inf, %v2465
    %v2516 = vsel %vm2500, -inf, %v2466
    %v2517 = vsel %vm2501, -inf, %v2467
    %v2518 = vsel %vm2502, -inf, %v2468
    %v2519 = vsel %vm2503, -inf, %v2469
    %v2520 = vsel %vm2504, -inf, %v2470
    %v2521 = vsel %vm2505, -inf, %v2471
    %v2522 = vsel %vm2506, -inf, %v2472
    %v2523 = vsel %vm2507, -inf, %v2473
    %v2524 = vsel %vm2508, -inf, %v2474
    %v2525 = vsel %vm2509, -inf, %v2475
    %v2526 = vsel %vm2510, -inf, %v2476
    %v2527 = vsel %vm2511, -inf, %v2477
    %v2528 = vsel %vm2512, -inf, %v2478
    %v2529 = vsel %vm2513, -inf, %v2479
    %v2530 = vsel %vm2514, -inf, %v2480
    %v2531 = vmax.f32 %v2515, %v2517
    %v2532 = vmax.f32 %v2516, %v2518
    %v2533 = vmax.f32 %v2531, %v2519
    %v2534 = vmax.f32 %v2532, %v2520
    %v2535 = vmax.f32 %v2533, %v2521
    %v2536 = vmax.f32 %v2534, %v2522
    %v2537 = vmax.f32 %v2535, %v2536
    %2538 = vmax.xlane.f32.xlu0 %v2537
    %v2539 = vpop.xlane.xlu0 %2538
    %v2540 = vmax.f32 %v2523, %v2525
    %v2541 = vmax.f32 %v2524, %v2526
    %v2542 = vmax.f32 %v2540, %v2527
    %v2543 = vmax.f32 %v2541, %v2528
    %v2544 = vmax.f32 %v2542, %v2529
    %v2545 = vmax.f32 %v2543, %v2530
    %v2546 = vmax.f32 %v2544, %v2545
    %2547 = vmax.xlane.f32.xlu0 %v2546
    %v2548 = vpop.xlane.xlu0 %2547
    %vm2549 = vcmp.ge.f32.partialorder %v2515, %v2539
    %vm2550 = vcmp.ge.f32.partialorder %v2516, %v2539
    %vm2551 = vcmp.ge.f32.partialorder %v2517, %v2539
    %vm2552 = vcmp.ge.f32.partialorder %v2518, %v2539
    %vm2553 = vcmp.ge.f32.partialorder %v2519, %v2539
    %vm2554 = vcmp.ge.f32.partialorder %v2520, %v2539
    %vm2555 = vcmp.ge.f32.partialorder %v2521, %v2539
    %vm2556 = vcmp.ge.f32.partialorder %v2522, %v2539
    %vm2557 = vcmp.ge.f32.partialorder %v2523, %v2548
    %vm2558 = vcmp.ge.f32.partialorder %v2524, %v2548
    %vm2559 = vcmp.ge.f32.partialorder %v2525, %v2548
    %vm2560 = vcmp.ge.f32.partialorder %v2526, %v2548
    %vm2561 = vcmp.ge.f32.partialorder %v2527, %v2548
    %vm2562 = vcmp.ge.f32.partialorder %v2528, %v2548
    %vm2563 = vcmp.ge.f32.partialorder %v2529, %v2548
    %vm2564 = vcmp.ge.f32.partialorder %v2530, %v2548
    %v2565 = vsel %vm2549, -inf, %v2515
    %v2566 = vsel %vm2550, -inf, %v2516
    %v2567 = vsel %vm2551, -inf, %v2517
    %v2568 = vsel %vm2552, -inf, %v2518
    %v2569 = vsel %vm2553, -inf, %v2519
    %v2570 = vsel %vm2554, -inf, %v2520
    %v2571 = vsel %vm2555, -inf, %v2521
    %v2572 = vsel %vm2556, -inf, %v2522
    %v2573 = vsel %vm2557, -inf, %v2523
    %v2574 = vsel %vm2558, -inf, %v2524
    %v2575 = vsel %vm2559, -inf, %v2525
    %v2576 = vsel %vm2560, -inf, %v2526
    %v2577 = vsel %vm2561, -inf, %v2527
    %v2578 = vsel %vm2562, -inf, %v2528
    %v2579 = vsel %vm2563, -inf, %v2529
    %v2580 = vsel %vm2564, -inf, %v2530
    %v2581 = vmax.f32 %v2565, %v2567
    %v2582 = vmax.f32 %v2566, %v2568
    %v2583 = vmax.f32 %v2581, %v2569
    %v2584 = vmax.f32 %v2582, %v2570
    %v2585 = vmax.f32 %v2583, %v2571
    %v2586 = vmax.f32 %v2584, %v2572
    %v2587 = vmax.f32 %v2585, %v2586
    %2588 = vmax.xlane.f32.xlu0 %v2587
    %v2589 = vpop.xlane.xlu0 %2588
    %v2590 = vmax.f32 %v2573, %v2575
    %v2591 = vmax.f32 %v2574, %v2576
    %v2592 = vmax.f32 %v2590, %v2577
    %v2593 = vmax.f32 %v2591, %v2578
    %v2594 = vmax.f32 %v2592, %v2579
    %v2595 = vmax.f32 %v2593, %v2580
    %v2596 = vmax.f32 %v2594, %v2595
    %2597 = vmax.xlane.f32.xlu0 %v2596
    %v2598 = vpop.xlane.xlu0 %2597
    %vm2599 = vcmp.ge.f32.partialorder %v2565, %v2589
    %vm2600 = vcmp.ge.f32.partialorder %v2566, %v2589
    %vm2601 = vcmp.ge.f32.partialorder %v2567, %v2589
    %vm2602 = vcmp.ge.f32.partialorder %v2568, %v2589
    %vm2603 = vcmp.ge.f32.partialorder %v2569, %v2589
    %vm2604 = vcmp.ge.f32.partialorder %v2570, %v2589
    %vm2605 = vcmp.ge.f32.partialorder %v2571, %v2589
    %vm2606 = vcmp.ge.f32.partialorder %v2572, %v2589
    %vm2607 = vcmp.ge.f32.partialorder %v2573, %v2598
    %vm2608 = vcmp.ge.f32.partialorder %v2574, %v2598
    %vm2609 = vcmp.ge.f32.partialorder %v2575, %v2598
    %vm2610 = vcmp.ge.f32.partialorder %v2576, %v2598
    %vm2611 = vcmp.ge.f32.partialorder %v2577, %v2598
    %vm2612 = vcmp.ge.f32.partialorder %v2578, %v2598
    %vm2613 = vcmp.ge.f32.partialorder %v2579, %v2598
    %vm2614 = vcmp.ge.f32.partialorder %v2580, %v2598
    %v2615 = vsel %vm2599, -inf, %v2565
    %v2616 = vsel %vm2600, -inf, %v2566
    %v2617 = vsel %vm2601, -inf, %v2567
    %v2618 = vsel %vm2602, -inf, %v2568
    %v2619 = vsel %vm2603, -inf, %v2569
    %v2620 = vsel %vm2604, -inf, %v2570
    %v2621 = vsel %vm2605, -inf, %v2571
    %v2622 = vsel %vm2606, -inf, %v2572
    %v2623 = vsel %vm2607, -inf, %v2573
    %v2624 = vsel %vm2608, -inf, %v2574
    %v2625 = vsel %vm2609, -inf, %v2575
    %v2626 = vsel %vm2610, -inf, %v2576
    %v2627 = vsel %vm2611, -inf, %v2577
    %v2628 = vsel %vm2612, -inf, %v2578
    %v2629 = vsel %vm2613, -inf, %v2579
    %v2630 = vsel %vm2614, -inf, %v2580
    %v2631 = vmax.f32 %v2615, %v2617
    %v2632 = vmax.f32 %v2616, %v2618
    %v2633 = vmax.f32 %v2631, %v2619
    %v2634 = vmax.f32 %v2632, %v2620
    %v2635 = vmax.f32 %v2633, %v2621
    %v2636 = vmax.f32 %v2634, %v2622
    %v2637 = vmax.f32 %v2635, %v2636
    %2638 = vmax.xlane.f32.xlu0 %v2637
    %v2639 = vpop.xlane.xlu0 %2638
    %v2640 = vmax.f32 %v2623, %v2625
    %v2641 = vmax.f32 %v2624, %v2626
    %v2642 = vmax.f32 %v2640, %v2627
    %v2643 = vmax.f32 %v2641, %v2628
    %v2644 = vmax.f32 %v2642, %v2629
    %v2645 = vmax.f32 %v2643, %v2630
    %v2646 = vmax.f32 %v2644, %v2645
    %2647 = vmax.xlane.f32.xlu0 %v2646
    %v2648 = vpop.xlane.xlu0 %2647
    %vm2649 = vcmp.ge.f32.partialorder %v2615, %v2639
    %vm2650 = vcmp.ge.f32.partialorder %v2616, %v2639
    %vm2651 = vcmp.ge.f32.partialorder %v2617, %v2639
    %vm2652 = vcmp.ge.f32.partialorder %v2618, %v2639
    %vm2653 = vcmp.ge.f32.partialorder %v2619, %v2639
    %vm2654 = vcmp.ge.f32.partialorder %v2620, %v2639
    %vm2655 = vcmp.ge.f32.partialorder %v2621, %v2639
    %vm2656 = vcmp.ge.f32.partialorder %v2622, %v2639
    %vm2657 = vcmp.ge.f32.partialorder %v2623, %v2648
    %vm2658 = vcmp.ge.f32.partialorder %v2624, %v2648
    %vm2659 = vcmp.ge.f32.partialorder %v2625, %v2648
    %vm2660 = vcmp.ge.f32.partialorder %v2626, %v2648
    %vm2661 = vcmp.ge.f32.partialorder %v2627, %v2648
    %vm2662 = vcmp.ge.f32.partialorder %v2628, %v2648
    %vm2663 = vcmp.ge.f32.partialorder %v2629, %v2648
    %vm2664 = vcmp.ge.f32.partialorder %v2630, %v2648
    %v2665 = vsel %vm2649, -inf, %v2615
    %v2666 = vsel %vm2650, -inf, %v2616
    %v2667 = vsel %vm2651, -inf, %v2617
    %v2668 = vsel %vm2652, -inf, %v2618
    %v2669 = vsel %vm2653, -inf, %v2619
    %v2670 = vsel %vm2654, -inf, %v2620
    %v2671 = vsel %vm2655, -inf, %v2621
    %v2672 = vsel %vm2656, -inf, %v2622
    %v2673 = vsel %vm2657, -inf, %v2623
    %v2674 = vsel %vm2658, -inf, %v2624
    %v2675 = vsel %vm2659, -inf, %v2625
    %v2676 = vsel %vm2660, -inf, %v2626
    %v2677 = vsel %vm2661, -inf, %v2627
    %v2678 = vsel %vm2662, -inf, %v2628
    %v2679 = vsel %vm2663, -inf, %v2629
    %v2680 = vsel %vm2664, -inf, %v2630
    %v2681 = vmax.f32 %v2665, %v2667
    %v2682 = vmax.f32 %v2666, %v2668
    %v2683 = vmax.f32 %v2681, %v2669
    %v2684 = vmax.f32 %v2682, %v2670
    %v2685 = vmax.f32 %v2683, %v2671
    %v2686 = vmax.f32 %v2684, %v2672
    %v2687 = vmax.f32 %v2685, %v2686
    %2688 = vmax.xlane.f32.xlu0 %v2687
    %v2689 = vpop.xlane.xlu0 %2688
    %v2690 = vmax.f32 %v2673, %v2675
    %v2691 = vmax.f32 %v2674, %v2676
    %v2692 = vmax.f32 %v2690, %v2677
    %v2693 = vmax.f32 %v2691, %v2678
    %v2694 = vmax.f32 %v2692, %v2679
    %v2695 = vmax.f32 %v2693, %v2680
    %v2696 = vmax.f32 %v2694, %v2695
    %2697 = vmax.xlane.f32.xlu0 %v2696
    %v2698 = vpop.xlane.xlu0 %2697
    %vm2699 = vcmp.ge.f32.partialorder %v1115, %v2689
    %vm2700 = vcmp.ge.f32.partialorder %v1116, %v2689
    %vm2701 = vcmp.ge.f32.partialorder %v1117, %v2689
    %vm2702 = vcmp.ge.f32.partialorder %v1118, %v2689
    %vm2703 = vcmp.ge.f32.partialorder %v1119, %v2689
    %vm2704 = vcmp.ge.f32.partialorder %v1120, %v2689
    %vm2705 = vcmp.ge.f32.partialorder %v1121, %v2689
    %vm2706 = vcmp.ge.f32.partialorder %v1122, %v2689
    %vm2707 = vcmp.ge.f32.partialorder %v1123, %v2698
    %vm2708 = vcmp.ge.f32.partialorder %v1124, %v2698
    %vm2709 = vcmp.ge.f32.partialorder %v1125, %v2698
    %vm2710 = vcmp.ge.f32.partialorder %v1126, %v2698
    %vm2711 = vcmp.ge.f32.partialorder %v1127, %v2698
    %vm2712 = vcmp.ge.f32.partialorder %v1128, %v2698
    %vm2713 = vcmp.ge.f32.partialorder %v1129, %v2698
    %vm2714 = vcmp.ge.f32.partialorder %v1130, %v2698
    %v2715 = vsel %vm2699, %v1115, 0.0
    %v2716 = vsel %vm2700, %v1116, 0.0
    %v2717 = vsel %vm2701, %v1117, 0.0
    %v2718 = vsel %vm2702, %v1118, 0.0
    %v2719 = vsel %vm2703, %v1119, 0.0
    %v2720 = vsel %vm2704, %v1120, 0.0
    %v2721 = vsel %vm2705, %v1121, 0.0
    %v2722 = vsel %vm2706, %v1122, 0.0
    %v2723 = vsel %vm2707, %v1123, 0.0
    %v2724 = vsel %vm2708, %v1124, 0.0
    %v2725 = vsel %vm2709, %v1125, 0.0
    %v2726 = vsel %vm2710, %v1126, 0.0
    %v2727 = vsel %vm2711, %v1127, 0.0
    %v2728 = vsel %vm2712, %v1128, 0.0
    %v2729 = vsel %vm2713, %v1129, 0.0
    %v2730 = vsel %vm2714, %v1130, 0.0
    %v2731 = vpack.c.bf16 %v2716, %v2715
    %v2732 = vpack.c.bf16 %v2718, %v2717
    %v2733 = vpack.c.bf16 %v2720, %v2719
    %v2734 = vpack.c.bf16 %v2722, %v2721
    %v2735 = vpack.c.bf16 %v2724, %v2723
    %v2736 = vpack.c.bf16 %v2726, %v2725
    %v2737 = vpack.c.bf16 %v2728, %v2727
    %v2738 = vpack.c.bf16 %v2730, %v2729
    %s2739 = smul.addr %s1112, 4
    %s2740 = scalar_lea.vmem [#allocation12], %s2739
    %2741 = vst [vmem:[%s2740] sm:$0xff] %v2731
    %2742 = vst [vmem:[%s2740 + $0x8] sm:$0xff] %v2732
    %2743 = vst [vmem:[%s2740 + $0x10] sm:$0xff] %v2733
    %2744 = vst [vmem:[%s2740 + $0x18] sm:$0xff] %v2734
    %2745 = vst [vmem:[%s2740 + $0x20] sm:$0xff] %v2735
    %2746 = vst [vmem:[%s2740 + $0x28] sm:$0xff] %v2736
    %2747 = vst [vmem:[%s2740 + $0x30] sm:$0xff] %v2737
    %2748 = vst [vmem:[%s2740 + $0x38] sm:$0xff] %v2738
    %2749 = vst [vmem:[#allocation9] sm:$0xff] %v64
    %2750 = vst [vmem:[#allocation9 + $0x8] sm:$0xff] %v65
    %2751 = vst [vmem:[#allocation9 + $0x10] sm:$0xff] %v66
    %2752 = vst [vmem:[#allocation9 + $0x18] sm:$0xff] %v67
    // Predicated region
    $region26: #{tpu_custom_call.1} parent=1 // pred_check
      _
    $region27: #{tpu_custom_call.1} parent=1 // pred_check_branch
      %2754 = sbr.rel (0) target = $region29
    $region28: #{tpu_custom_call.1} parent=1 // pred_region
      %2756 = vsyncadd [#allocation5], 0
      %s2757 = sshll.u32 [#allocation9], 4
      %s2758 = int_to_ptr.vmem [resolvable:$true] %s2757
      %s2759 = sshll.u32 %s3, 4
      %s2760 = int_to_ptr.hbm [resolvable:$true] %s2759
      %2765 = dma.vmem_to_hbm [thread:$0]  %s2758, 512, %s2760, [#allocation5], 256, 256, 16
    $region29: #{tpu_custom_call.1} parent=1 // pred_fallthru
      _
    // Predicated region
    $region30: #{tpu_custom_call.1} parent=1 // pred_check
      _
    $region31: #{tpu_custom_call.1} parent=1 // pred_check_branch
      %2767 = sbr.rel (0) target = $region33
    $region32: #{tpu_custom_call.1} parent=1 // pred_region
      %2769 = vsyncadd [#allocation11], 0
      %s2770 = sshll.u32 [#allocation10], 4
      %s2771 = int_to_ptr.vmem [resolvable:$true] %s2770
      %s2772 = sshll.u32 %s4, 4
      %s2773 = int_to_ptr.hbm [resolvable:$true] %s2772
      %2778 = dma.vmem_to_hbm [thread:$0]  %s2771, 1024, %s2773, [#allocation11], 512, 512, 32
    $region33: #{tpu_custom_call.1} parent=1 // pred_fallthru
      _
    // Predicated region
    $region34: #{tpu_custom_call.1} parent=1 // pred_check
      _
    $region35: #{tpu_custom_call.1} parent=1 // pred_check_branch
      %2780 = sbr.rel (0) target = $region37
    $region36: #{tpu_custom_call.1} parent=1 // pred_region
      %2782 = vsyncadd [#allocation11], 0
      %s2783 = sshll.u32 [#allocation12], 4
      %s2784 = int_to_ptr.vmem [resolvable:$true] %s2783
      %s2785 = sshll.u32 %s5, 4
      %s2786 = int_to_ptr.hbm [resolvable:$true] %s2785
      %2791 = dma.vmem_to_hbm [thread:$0]  %s2784, 1024, %s2786, [#allocation11], 512, 512, 32
    $region37: #{tpu_custom_call.1} parent=1 // pred_fallthru
      _
    // Predicated region
    $region38: #{tpu_custom_call.1} parent=1 // pred_check
      _
    $region39: #{tpu_custom_call.1} parent=1 // pred_check_branch
      %2793 = sbr.rel (0) target = $region41
    $region40: #{tpu_custom_call.1} parent=1 // pred_region
      %2795 = dma.done [#allocation5], 512
    $region41: #{tpu_custom_call.1} parent=1 // pred_fallthru
      _
    // Predicated region
    $region42: #{tpu_custom_call.1} parent=1 // pred_check
      _
    $region43: #{tpu_custom_call.1} parent=1 // pred_check_branch
      %2797 = sbr.rel (0) target = $region45
    $region44: #{tpu_custom_call.1} parent=1 // pred_region
      %2799 = dma.done [#allocation11], 1024
    $region45: #{tpu_custom_call.1} parent=1 // pred_fallthru
      _
    // Predicated region
    $region46: #{tpu_custom_call.1} parent=1 // pred_check
      _
    $region47: #{tpu_custom_call.1} parent=1 // pred_check_branch
      %2801 = sbr.rel (0) target = $region49
    $region48: #{tpu_custom_call.1} parent=1 // pred_region
      %2803 = dma.done [#allocation11], 1024
    $region49: #{tpu_custom_call.1} parent=1 // pred_fallthru
      _
    %2804 = vsyncpa [#allocation4], 1
    %2805 = vsyncpa [#allocation7], 1
    %2806 = vsyncpa [#allocation5], 1
    %2807 = vsyncpa [#allocation11], 1

</llo_original>
